<compile_context>
chip_gen: v6e
topology: v6e:2x2x1
jax: 0.10.0
libtpu: 0.0.40
codegen_flags: <defaults>
</compile_context>

<pallas_src>
import functools

import jax
import jax.numpy as jnp
from jax.experimental import pallas as pl
from jax.experimental.pallas import tpu as pltpu

# Layer sizes from the PyTorch module: 784 -> 676 -> 576 -> 400 -> 324 -> 256 -> 100 -> 10
SIZES = [28 * 28, 26 * 26, 24 * 24, 20 * 20, 18 * 18, 16 * 16, 10 * 10, 10]
N_LAYERS = len(SIZES) - 1


def _round_up(x, m):
    return (x + m - 1) // m * m


# Lane-dense padded sizes (multiples of 128): 896, 768, 640, 512, 384, 256, 128, 128
PAD_SIZES = [_round_up(s, 128) for s in SIZES]


def mlp_kernel(x_ref, *refs):
    """refs = (w1, b1, ..., w7, b7, out_ref). x_ref: (TB, IN_PAD) f32 tile."""
    out_ref = refs[-1]
    param_refs = refs[:-1]
    h = x_ref[...]                                   # f32 activations
    for i in range(N_LAYERS):
        w = param_refs[2 * i][...]                   # (in_pad, out_pad) bf16, VMEM-resident
        b = param_refs[2 * i + 1][...]               # (1, out_pad) f32 -> broadcasts over batch
        # bf16 x bf16 on the MXU with f32 accumulation; bias+ReLU fused epilogue.
        y = jnp.dot(h.astype(w.dtype), w, preferred_element_type=jnp.float32) + b
        h = jnp.maximum(y, 0.0) if i < N_LAYERS - 1 else y
    out_ref[...] = h.astype(out_ref.dtype)


def pad_params(params):
    """One-time preprocessing: zero-pad to lane-dense shapes, cast weights to bf16.

    Zero padding is exact: padded input columns of x are zero, padded weight
    rows/cols and bias entries are zero, so padded hidden units stay exactly 0
    through every ReLU and contribute nothing downstream.
    """
    flat = []
    for li, (w, b) in enumerate(params):
        ip, op = PAD_SIZES[li], PAD_SIZES[li + 1]
        w_pad = jnp.zeros((ip, op), jnp.bfloat16)
        w_pad = w_pad.at[: w.shape[0], : w.shape[1]].set(w.astype(jnp.bfloat16))
        b2 = b.reshape(1, -1).astype(jnp.float32)
        b_pad = jnp.zeros((1, op), jnp.float32).at[:, : b2.shape[1]].set(b2)
        flat += [w_pad, b_pad]
    return flat


@functools.partial(jax.jit, static_argnames=("tile_b",))
def mlp_forward(x_nchw, padded_params, *, tile_b=256):
    B = x_nchw.shape[0]
    x_flat = x_nchw.reshape(B, -1).astype(jnp.float32)      # nn.Flatten()

    IN, IN_PAD = SIZES[0], PAD_SIZES[0]
    OUT, OUT_PAD = SIZES[-1], PAD_SIZES[-1]

    # Batch tile: 256 rows per grid step for large batches; for tiny batches
    # fall back to a single sublane-aligned tile (kernel is DMA-bound there).
    TB = min(tile_b, _round_up(max(B, 1), 8))
    B_pad = _round_up(B, TB)
    x_pad = jnp.zeros((B_pad, IN_PAD), jnp.float32).at[:B, :IN].set(x_flat)

    # x / out tiles indexed by the batch program id; weights & biases use a
    # constant index_map so they are fetched once and stay resident.
    in_specs = [pl.BlockSpec((TB, IN_PAD), lambda i: (i, 0))]
    for li in range(N_LAYERS):
        ip, op = PAD_SIZES[li], PAD_SIZES[li + 1]
        in_specs.append(pl.BlockSpec((ip, op), lambda i: (0, 0)))   # weight
        in_specs.append(pl.BlockSpec((1, op), lambda i: (0, 0)))    # bias
    out_spec = pl.BlockSpec((TB, OUT_PAD), lambda i: (i, 0))

    out_pad = pl.pallas_call(
        mlp_kernel,
        out_shape=jax.ShapeDtypeStruct((B_pad, OUT_PAD), jnp.float32),
        grid=(pl.cdiv(B_pad, TB),),
        in_specs=in_specs,
        out_specs=out_spec,
        compiler_params=pltpu.CompilerParams(
            dimension_semantics=("parallel",),       # shard batch tiles across v7x's 2 TCs
            vmem_limit_bytes=32 << 20,               # ~4 MB weights + tiles; safe on 64 MiB v7x
        ),
    )(x_pad, *padded_params)
    return out_pad[:B, :OUT]


def init_params(key):
    params = []
    for i in range(N_LAYERS):
        fan_in, fan_out = SIZES[i], SIZES[i + 1]
        key, kw, kb = jax.random.split(key, 3)
        bound = 1.0 / jnp.sqrt(fan_in)
        # Stored as (in, out) so the kernel computes x @ W (== PyTorch x @ W.T)
        w = jax.random.uniform(kw, (fan_in, fan_out), jnp.float32, -bound, bound)
        b = jax.random.uniform(kb, (1, fan_out), jnp.float32, -bound, bound)
        params.append((w, b))
    return params


def reference_forward(x_nchw, params):
    """Pure-JAX reference mirroring the kernel numerics (bf16 weights/activations
    into the matmul, f32 accumulation, f32 bias + ReLU)."""
    h = x_nchw.reshape(x_nchw.shape[0], -1).astype(jnp.float32)
    for i, (w, b) in enumerate(params):
        y = jnp.dot(h.astype(jnp.bfloat16), w.astype(jnp.bfloat16),
                    preferred_element_type=jnp.float32) + b.astype(jnp.float32)
        h = jnp.maximum(y, 0.0) if i < N_LAYERS - 1 else y
    return h


if __name__ == "__main__":
    key = jax.random.PRNGKey(0)
    key, kx = jax.random.split(key)
    B = 2
    x = jax.random.normal(kx, (B, 1, 28, 28), jnp.float32)   # NCHW like PyTorch

    params = init_params(key)
    padded_params = pad_params(params)                        # pad/cast once, reuse per call

    out = mlp_forward(x, padded_params)
    out = jax.block_until_ready(out)

    ref = reference_forward(x, params)
    assert out.shape == (B, SIZES[-1])
    assert jnp.allclose(out, ref, atol=2e-2, rtol=2e-2), (
        float(jnp.max(jnp.abs(out - ref))))
    print("KERNEL_OK")
</pallas_src>

<mosaic_0001>
module attributes {stable_mosaic.version = 11 : i64} {
  func.func @mlp_kernel(%arg0: i32, %arg1: memref<8x896xf32, #tpu.memory_space<vmem>>, %arg2: memref<896x768xbf16, #tpu.memory_space<vmem>>, %arg3: memref<1x768xf32, #tpu.memory_space<vmem>>, %arg4: memref<768x640xbf16, #tpu.memory_space<vmem>>, %arg5: memref<1x640xf32, #tpu.memory_space<vmem>>, %arg6: memref<640x512xbf16, #tpu.memory_space<vmem>>, %arg7: memref<1x512xf32, #tpu.memory_space<vmem>>, %arg8: memref<512x384xbf16, #tpu.memory_space<vmem>>, %arg9: memref<1x384xf32, #tpu.memory_space<vmem>>, %arg10: memref<384x256xbf16, #tpu.memory_space<vmem>>, %arg11: memref<1x256xf32, #tpu.memory_space<vmem>>, %arg12: memref<256x128xbf16, #tpu.memory_space<vmem>>, %arg13: memref<1x128xf32, #tpu.memory_space<vmem>>, %arg14: memref<128x128xbf16, #tpu.memory_space<vmem>>, %arg15: memref<1x128xf32, #tpu.memory_space<vmem>>, %arg16: memref<8x128xf32, #tpu.memory_space<vmem>>) attributes {dimension_semantics = [#tpu.dimension_semantics<parallel>], iteration_bounds = array<i64: 1>, scalar_prefetch = 0 : i64, scratch_operands = 0 : i64, tpu.core_type = #tpu.core_type<tc>, window_params = [{transform_indices = @transform_0, window_bounds = array<i64: 8, 896>}, {pipeline_mode = #tpu.pipeline_mode<synchronous>, transform_indices = @transform_1, window_bounds = array<i64: 896, 768>}, {pipeline_mode = #tpu.pipeline_mode<synchronous>, transform_indices = @transform_2, window_bounds = array<i64: 1, 768>}, {pipeline_mode = #tpu.pipeline_mode<synchronous>, transform_indices = @transform_3, window_bounds = array<i64: 768, 640>}, {pipeline_mode = #tpu.pipeline_mode<synchronous>, transform_indices = @transform_4, window_bounds = array<i64: 1, 640>}, {pipeline_mode = #tpu.pipeline_mode<synchronous>, transform_indices = @transform_5, window_bounds = array<i64: 640, 512>}, {pipeline_mode = #tpu.pipeline_mode<synchronous>, transform_indices = @transform_6, window_bounds = array<i64: 1, 512>}, {pipeline_mode = #tpu.pipeline_mode<synchronous>, transform_indices = @transform_7, window_bounds = array<i64: 512, 384>}, {pipeline_mode = #tpu.pipeline_mode<synchronous>, transform_indices = @transform_8, window_bounds = array<i64: 1, 384>}, {pipeline_mode = #tpu.pipeline_mode<synchronous>, transform_indices = @transform_9, window_bounds = array<i64: 384, 256>}, {pipeline_mode = #tpu.pipeline_mode<synchronous>, transform_indices = @transform_10, window_bounds = array<i64: 1, 256>}, {pipeline_mode = #tpu.pipeline_mode<synchronous>, transform_indices = @transform_11, window_bounds = array<i64: 256, 128>}, {pipeline_mode = #tpu.pipeline_mode<synchronous>, transform_indices = @transform_12, window_bounds = array<i64: 1, 128>}, {pipeline_mode = #tpu.pipeline_mode<synchronous>, transform_indices = @transform_13, window_bounds = array<i64: 128, 128>}, {pipeline_mode = #tpu.pipeline_mode<synchronous>, transform_indices = @transform_14, window_bounds = array<i64: 1, 128>}, {transform_indices = @transform_15, window_bounds = array<i64: 8, 128>}]} {
    %c0 = arith.constant 0 : index
    %c0_0 = arith.constant 0 : index
    %0 = vector.load %arg1[%c0, %c0_0] : memref<8x896xf32, #tpu.memory_space<vmem>>, vector<8x896xf32>
    %c0_1 = arith.constant 0 : index
    %c0_2 = arith.constant 0 : index
    %1 = vector.load %arg2[%c0_1, %c0_2] : memref<896x768xbf16, #tpu.memory_space<vmem>>, vector<896x768xbf16>
    %c0_3 = arith.constant 0 : index
    %c0_4 = arith.constant 0 : index
    %2 = vector.load %arg3[%c0_3, %c0_4] : memref<1x768xf32, #tpu.memory_space<vmem>>, vector<1x768xf32>
    %3 = arith.truncf %0 : vector<8x896xf32> to vector<8x896xbf16>
    %cst = arith.constant dense<0.000000e+00> : vector<8x768xf32>
    %4 = tpu.matmul %3, %1, %cst {dimension_numbers = #tpu.dot_dimension_numbers<[1], [0], [0], [1], [0, 0, 1, 1], [], []>} : vector<8x896xbf16>, vector<896x768xbf16>, vector<8x768xf32> -> vector<8x768xf32>
    %5 = vector.broadcast %2 : vector<1x768xf32> to vector<8x768xf32>
    %6 = arith.addf %4, %5 : vector<8x768xf32>
    %cst_5 = arith.constant 0.000000e+00 : f32
    %7 = vector.broadcast %cst_5 : f32 to vector<8x768xf32>
    %8 = arith.maximumf %6, %7 : vector<8x768xf32>
    %c0_6 = arith.constant 0 : index
    %c0_7 = arith.constant 0 : index
    %9 = vector.load %arg4[%c0_6, %c0_7] : memref<768x640xbf16, #tpu.memory_space<vmem>>, vector<768x640xbf16>
    %c0_8 = arith.constant 0 : index
    %c0_9 = arith.constant 0 : index
    %10 = vector.load %arg5[%c0_8, %c0_9] : memref<1x640xf32, #tpu.memory_space<vmem>>, vector<1x640xf32>
    %11 = arith.truncf %8 : vector<8x768xf32> to vector<8x768xbf16>
    %cst_10 = arith.constant dense<0.000000e+00> : vector<8x640xf32>
    %12 = tpu.matmul %11, %9, %cst_10 {dimension_numbers = #tpu.dot_dimension_numbers<[1], [0], [0], [1], [0, 0, 1, 1], [], []>} : vector<8x768xbf16>, vector<768x640xbf16>, vector<8x640xf32> -> vector<8x640xf32>
    %13 = vector.broadcast %10 : vector<1x640xf32> to vector<8x640xf32>
    %14 = arith.addf %12, %13 : vector<8x640xf32>
    %cst_11 = arith.constant 0.000000e+00 : f32
    %15 = vector.broadcast %cst_11 : f32 to vector<8x640xf32>
    %16 = arith.maximumf %14, %15 : vector<8x640xf32>
    %c0_12 = arith.constant 0 : index
    %c0_13 = arith.constant 0 : index
    %17 = vector.load %arg6[%c0_12, %c0_13] : memref<640x512xbf16, #tpu.memory_space<vmem>>, vector<640x512xbf16>
    %c0_14 = arith.constant 0 : index
    %c0_15 = arith.constant 0 : index
    %18 = vector.load %arg7[%c0_14, %c0_15] : memref<1x512xf32, #tpu.memory_space<vmem>>, vector<1x512xf32>
    %19 = arith.truncf %16 : vector<8x640xf32> to vector<8x640xbf16>
    %cst_16 = arith.constant dense<0.000000e+00> : vector<8x512xf32>
    %20 = tpu.matmul %19, %17, %cst_16 {dimension_numbers = #tpu.dot_dimension_numbers<[1], [0], [0], [1], [0, 0, 1, 1], [], []>} : vector<8x640xbf16>, vector<640x512xbf16>, vector<8x512xf32> -> vector<8x512xf32>
    %21 = vector.broadcast %18 : vector<1x512xf32> to vector<8x512xf32>
    %22 = arith.addf %20, %21 : vector<8x512xf32>
    %cst_17 = arith.constant 0.000000e+00 : f32
    %23 = vector.broadcast %cst_17 : f32 to vector<8x512xf32>
    %24 = arith.maximumf %22, %23 : vector<8x512xf32>
    %c0_18 = arith.constant 0 : index
    %c0_19 = arith.constant 0 : index
    %25 = vector.load %arg8[%c0_18, %c0_19] : memref<512x384xbf16, #tpu.memory_space<vmem>>, vector<512x384xbf16>
    %c0_20 = arith.constant 0 : index
    %c0_21 = arith.constant 0 : index
    %26 = vector.load %arg9[%c0_20, %c0_21] : memref<1x384xf32, #tpu.memory_space<vmem>>, vector<1x384xf32>
    %27 = arith.truncf %24 : vector<8x512xf32> to vector<8x512xbf16>
    %cst_22 = arith.constant dense<0.000000e+00> : vector<8x384xf32>
    %28 = tpu.matmul %27, %25, %cst_22 {dimension_numbers = #tpu.dot_dimension_numbers<[1], [0], [0], [1], [0, 0, 1, 1], [], []>} : vector<8x512xbf16>, vector<512x384xbf16>, vector<8x384xf32> -> vector<8x384xf32>
    %29 = vector.broadcast %26 : vector<1x384xf32> to vector<8x384xf32>
    %30 = arith.addf %28, %29 : vector<8x384xf32>
    %cst_23 = arith.constant 0.000000e+00 : f32
    %31 = vector.broadcast %cst_23 : f32 to vector<8x384xf32>
    %32 = arith.maximumf %30, %31 : vector<8x384xf32>
    %c0_24 = arith.constant 0 : index
    %c0_25 = arith.constant 0 : index
    %33 = vector.load %arg10[%c0_24, %c0_25] : memref<384x256xbf16, #tpu.memory_space<vmem>>, vector<384x256xbf16>
    %c0_26 = arith.constant 0 : index
    %c0_27 = arith.constant 0 : index
    %34 = vector.load %arg11[%c0_26, %c0_27] : memref<1x256xf32, #tpu.memory_space<vmem>>, vector<1x256xf32>
    %35 = arith.truncf %32 : vector<8x384xf32> to vector<8x384xbf16>
    %cst_28 = arith.constant dense<0.000000e+00> : vector<8x256xf32>
    %36 = tpu.matmul %35, %33, %cst_28 {dimension_numbers = #tpu.dot_dimension_numbers<[1], [0], [0], [1], [0, 0, 1, 1], [], []>} : vector<8x384xbf16>, vector<384x256xbf16>, vector<8x256xf32> -> vector<8x256xf32>
    %37 = vector.broadcast %34 : vector<1x256xf32> to vector<8x256xf32>
    %38 = arith.addf %36, %37 : vector<8x256xf32>
    %cst_29 = arith.constant 0.000000e+00 : f32
    %39 = vector.broadcast %cst_29 : f32 to vector<8x256xf32>
    %40 = arith.maximumf %38, %39 : vector<8x256xf32>
    %c0_30 = arith.constant 0 : index
    %c0_31 = arith.constant 0 : index
    %41 = vector.load %arg12[%c0_30, %c0_31] : memref<256x128xbf16, #tpu.memory_space<vmem>>, vector<256x128xbf16>
    %c0_32 = arith.constant 0 : index
    %c0_33 = arith.constant 0 : index
    %42 = vector.load %arg13[%c0_32, %c0_33] : memref<1x128xf32, #tpu.memory_space<vmem>>, vector<1x128xf32>
    %43 = arith.truncf %40 : vector<8x256xf32> to vector<8x256xbf16>
    %cst_34 = arith.constant dense<0.000000e+00> : vector<8x128xf32>
    %44 = tpu.matmul %43, %41, %cst_34 {dimension_numbers = #tpu.dot_dimension_numbers<[1], [0], [0], [1], [0, 0, 1, 1], [], []>} : vector<8x256xbf16>, vector<256x128xbf16>, vector<8x128xf32> -> vector<8x128xf32>
    %45 = vector.broadcast %42 : vector<1x128xf32> to vector<8x128xf32>
    %46 = arith.addf %44, %45 : vector<8x128xf32>
    %cst_35 = arith.constant 0.000000e+00 : f32
    %47 = vector.broadcast %cst_35 : f32 to vector<8x128xf32>
    %48 = arith.maximumf %46, %47 : vector<8x128xf32>
    %c0_36 = arith.constant 0 : index
    %c0_37 = arith.constant 0 : index
    %49 = vector.load %arg14[%c0_36, %c0_37] : memref<128x128xbf16, #tpu.memory_space<vmem>>, vector<128x128xbf16>
    %c0_38 = arith.constant 0 : index
    %c0_39 = arith.constant 0 : index
    %50 = vector.load %arg15[%c0_38, %c0_39] : memref<1x128xf32, #tpu.memory_space<vmem>>, vector<1x128xf32>
    %51 = arith.truncf %48 : vector<8x128xf32> to vector<8x128xbf16>
    %cst_40 = arith.constant dense<0.000000e+00> : vector<8x128xf32>
    %52 = tpu.matmul %51, %49, %cst_40 {dimension_numbers = #tpu.dot_dimension_numbers<[1], [0], [0], [1], [0, 0, 1, 1], [], []>} : vector<8x128xbf16>, vector<128x128xbf16>, vector<8x128xf32> -> vector<8x128xf32>
    %53 = vector.broadcast %50 : vector<1x128xf32> to vector<8x128xf32>
    %54 = arith.addf %52, %53 : vector<8x128xf32>
    %c0_41 = arith.constant 0 : index
    %c0_42 = arith.constant 0 : index
    %55 = vector.load %arg16[%c0_41, %c0_42] : memref<8x128xf32, #tpu.memory_space<vmem>>, vector<8x128xf32>
    tpu.vector_store %arg16[%c0_41, %c0_42], %54 {strides = array<i32>} : memref<8x128xf32, #tpu.memory_space<vmem>>, vector<8x128xf32>,
    return
  }
  func.func @transform_0(%arg0: i32) -> (i32, i32) {
    %c0_i32 = arith.constant 0 : i32
    %c0_i32_0 = arith.constant 0 : i32
    return %arg0, %c0_i32 : i32, i32
  }
  func.func @transform_1(%arg0: i32) -> (i32, i32) {
    %c0_i32 = arith.constant 0 : i32
    %c0_i32_0 = arith.constant 0 : i32
    %c0_i32_1 = arith.constant 0 : i32
    return %c0_i32, %c0_i32_0 : i32, i32
  }
  func.func @transform_2(%arg0: i32) -> (i32, i32) {
    %c0_i32 = arith.constant 0 : i32
    %c0_i32_0 = arith.constant 0 : i32
    %c0_i32_1 = arith.constant 0 : i32
    return %c0_i32, %c0_i32_0 : i32, i32
  }
  func.func @transform_3(%arg0: i32) -> (i32, i32) {
    %c0_i32 = arith.constant 0 : i32
    %c0_i32_0 = arith.constant 0 : i32
    %c0_i32_1 = arith.constant 0 : i32
    return %c0_i32, %c0_i32_0 : i32, i32
  }
  func.func @transform_4(%arg0: i32) -> (i32, i32) {
    %c0_i32 = arith.constant 0 : i32
    %c0_i32_0 = arith.constant 0 : i32
    %c0_i32_1 = arith.constant 0 : i32
    return %c0_i32, %c0_i32_0 : i32, i32
  }
  func.func @transform_5(%arg0: i32) -> (i32, i32) {
    %c0_i32 = arith.constant 0 : i32
    %c0_i32_0 = arith.constant 0 : i32
    %c0_i32_1 = arith.constant 0 : i32
    return %c0_i32, %c0_i32_0 : i32, i32
  }
  func.func @transform_6(%arg0: i32) -> (i32, i32) {
    %c0_i32 = arith.constant 0 : i32
    %c0_i32_0 = arith.constant 0 : i32
    %c0_i32_1 = arith.constant 0 : i32
    return %c0_i32, %c0_i32_0 : i32, i32
  }
  func.func @transform_7(%arg0: i32) -> (i32, i32) {
    %c0_i32 = arith.constant 0 : i32
    %c0_i32_0 = arith.constant 0 : i32
    %c0_i32_1 = arith.constant 0 : i32
    return %c0_i32, %c0_i32_0 : i32, i32
  }
  func.func @transform_8(%arg0: i32) -> (i32, i32) {
    %c0_i32 = arith.constant 0 : i32
    %c0_i32_0 = arith.constant 0 : i32
    %c0_i32_1 = arith.constant 0 : i32
    return %c0_i32, %c0_i32_0 : i32, i32
  }
  func.func @transform_9(%arg0: i32) -> (i32, i32) {
    %c0_i32 = arith.constant 0 : i32
    %c0_i32_0 = arith.constant 0 : i32
    %c0_i32_1 = arith.constant 0 : i32
    return %c0_i32, %c0_i32_0 : i32, i32
  }
  func.func @transform_10(%arg0: i32) -> (i32, i32) {
    %c0_i32 = arith.constant 0 : i32
    %c0_i32_0 = arith.constant 0 : i32
    %c0_i32_1 = arith.constant 0 : i32
    return %c0_i32, %c0_i32_0 : i32, i32
  }
  func.func @transform_11(%arg0: i32) -> (i32, i32) {
    %c0_i32 = arith.constant 0 : i32
    %c0_i32_0 = arith.constant 0 : i32
    %c0_i32_1 = arith.constant 0 : i32
    return %c0_i32, %c0_i32_0 : i32, i32
  }
  func.func @transform_12(%arg0: i32) -> (i32, i32) {
    %c0_i32 = arith.constant 0 : i32
    %c0_i32_0 = arith.constant 0 : i32
    %c0_i32_1 = arith.constant 0 : i32
    return %c0_i32, %c0_i32_0 : i32, i32
  }
  func.func @transform_13(%arg0: i32) -> (i32, i32) {
    %c0_i32 = arith.constant 0 : i32
    %c0_i32_0 = arith.constant 0 : i32
    %c0_i32_1 = arith.constant 0 : i32
    return %c0_i32, %c0_i32_0 : i32, i32
  }
  func.func @transform_14(%arg0: i32) -> (i32, i32) {
    %c0_i32 = arith.constant 0 : i32
    %c0_i32_0 = arith.constant 0 : i32
    %c0_i32_1 = arith.constant 0 : i32
    return %c0_i32, %c0_i32_0 : i32, i32
  }
  func.func @transform_15(%arg0: i32) -> (i32, i32) {
    %c0_i32 = arith.constant 0 : i32
    %c0_i32_0 = arith.constant 0 : i32
    return %arg0, %c0_i32 : i32, i32
  }
}

</mosaic_0001>

<llo_original>
// kernel: mlp_forward.1
$region0: #{mlp_forward.1}
  #allocation0 [shape = 'u32[]', space=smem, size = 0x4, offset = 0x4, fixed_abs, tag = 'smem constant byte address 0x4 - core index']
  #allocation1 [shape = 'u32[144,128]{1,0:T(1,128)}', space=vmem, size = 0x12000, scoped, tag = 'internal scratch']
  %s0 = inlined_call_operand.vmem [shape: f32[8,896], index: 0, kind: input, shape index: {}]
  %s1 = inlined_call_operand.hbm [shape: bf16[896,768], index: 1, kind: input, shape index: {}]
  %s2 = inlined_call_operand.hbm [shape: f32[1,768], index: 2, kind: input, shape index: {}]
  %s3 = inlined_call_operand.hbm [shape: bf16[768,640], index: 3, kind: input, shape index: {}]
  %s4 = inlined_call_operand.hbm [shape: f32[1,640], index: 4, kind: input, shape index: {}]
  %s5 = inlined_call_operand.hbm [shape: bf16[640,512], index: 5, kind: input, shape index: {}]
  %s6 = inlined_call_operand.hbm [shape: f32[1,512], index: 6, kind: input, shape index: {}]
  %s7 = inlined_call_operand.hbm [shape: bf16[512,384], index: 7, kind: input, shape index: {}]
  %s8 = inlined_call_operand.hbm [shape: f32[1,384], index: 8, kind: input, shape index: {}]
  %s9 = inlined_call_operand.hbm [shape: bf16[384,256], index: 9, kind: input, shape index: {}]
  %s10 = inlined_call_operand.hbm [shape: f32[1,256], index: 10, kind: input, shape index: {}]
  %s11 = inlined_call_operand.hbm [shape: bf16[256,128], index: 11, kind: input, shape index: {}]
  %s12 = inlined_call_operand.hbm [shape: f32[1,128], index: 12, kind: input, shape index: {}]
  %s13 = inlined_call_operand.hbm [shape: bf16[128,128], index: 13, kind: input, shape index: {}]
  %s14 = inlined_call_operand.hbm [shape: f32[1,128], index: 14, kind: input, shape index: {}]
  %s15 = inlined_call_operand.vmem [shape: f32[8,128], index: 15, kind: output, shape index: {}]
  %s16 = sld [smem:[#allocation0]]
  $region126: #{mlp_forward.1} parent=0
    _
  %s18 = ssub.s32 1, %s16
  %s19 = scalar_select 0, %s18, %s16
  $region1: #{mlp_forward.1} parent=0
    #allocation2 [shape = 'u8[1376256]{0}', space=vmem, size = 0x150000, scoped, tag = 'input window, operand 1, single buffered']
    #allocation3 [shape = 's32[1]{0}', space=sflag, size = 0x4, scoped, tag = 'scoped memory for mlp_forward.1']
    #allocation4 [shape = 'u8[3072]{0}', space=vmem, size = 0xc00, scoped, tag = 'input window, operand 2, single buffered']
    #allocation5 [shape = 's32[1]{0}', space=sflag, size = 0x4, scoped, tag = 'scoped memory for mlp_forward.1']
    #allocation6 [shape = 'u8[983040]{0}', space=vmem, size = 0xf0000, scoped, tag = 'input window, operand 3, single buffered']
    #allocation7 [shape = 'u8[2560]{0}', space=vmem, size = 0xc00, scoped, tag = 'input window, operand 4, single buffered']
    #allocation8 [shape = 's32[1]{0}', space=sflag, size = 0x4, scoped, tag = 'scoped memory for mlp_forward.1']
    #allocation9 [shape = 'u8[655360]{0}', space=vmem, size = 0xa0000, scoped, tag = 'input window, operand 5, single buffered']
    #allocation10 [shape = 'u8[2048]{0}', space=vmem, size = 0x800, scoped, tag = 'input window, operand 6, single buffered']
    #allocation11 [shape = 's32[1]{0}', space=sflag, size = 0x4, scoped, tag = 'scoped memory for mlp_forward.1']
    #allocation12 [shape = 'u8[393216]{0}', space=vmem, size = 0x60000, scoped, tag = 'input window, operand 7, single buffered']
    #allocation13 [shape = 'u8[1536]{0}', space=vmem, size = 0x800, scoped, tag = 'input window, operand 8, single buffered']
    #allocation14 [shape = 's32[1]{0}', space=sflag, size = 0x4, scoped, tag = 'scoped memory for mlp_forward.1']
    #allocation15 [shape = 'u8[196608]{0}', space=vmem, size = 0x30000, scoped, tag = 'input window, operand 9, single buffered']
    #allocation16 [shape = 'u8[1024]{0}', space=vmem, size = 0x400, scoped, tag = 'input window, operand 10, single buffered']
    #allocation17 [shape = 's32[1]{0}', space=sflag, size = 0x4, scoped, tag = 'scoped memory for mlp_forward.1']
    #allocation18 [shape = 'u8[65536]{0}', space=vmem, size = 0x10000, scoped, tag = 'input window, operand 11, single buffered']
    #allocation19 [shape = 'u8[512]{0}', space=vmem, size = 0x400, scoped, tag = 'input window, operand 12, single buffered']
    #allocation20 [shape = 's32[1]{0}', space=sflag, size = 0x4, scoped, tag = 'scoped memory for mlp_forward.1']
    #allocation21 [shape = 'u8[32768]{0}', space=vmem, size = 0x8000, scoped, tag = 'input window, operand 13, single buffered']
    #allocation22 [shape = 'u8[512]{0}', space=vmem, size = 0x400, scoped, tag = 'input window, operand 14, single buffered']
    #allocation23 [shape = 's32[1]{0}', space=sflag, size = 0x4, scoped, tag = 'scoped memory for mlp_forward.1']
    %20 = vsyncpa [#allocation3], 0
    %21 = vsyncpa [#allocation5], 0
    %22 = vsyncpa [#allocation8], 0
    %23 = vsyncpa [#allocation11], 0
    %24 = vsyncpa [#allocation14], 0
    %25 = vsyncpa [#allocation17], 0
    %26 = vsyncpa [#allocation20], 0
    %27 = vsyncpa [#allocation23], 0
    // Predicated region
    $region2: #{mlp_forward.1} parent=1 // pred_check
      _
    $region3: #{mlp_forward.1} parent=1 // pred_check_branch
      %29 = sbr.rel (0) target = $region5
    $region4: #{mlp_forward.1} parent=1 // pred_region
      _
    $region5: #{mlp_forward.1} parent=1 // pred_fallthru
      _
    // Predicated region
    $region6: #{mlp_forward.1} parent=1 // pred_check
      _
    $region7: #{mlp_forward.1} parent=1 // pred_check_branch
      %31 = sbr.rel (0) target = $region9
    $region8: #{mlp_forward.1} parent=1 // pred_region
      %s33 = ssub.s32 43008, 43008
      %34 = vsyncadd [#allocation3], %s33
      %s35 = sshll.u32 [#allocation2], 4
      %s36 = int_to_ptr.vmem [resolvable:$true] %s35
      %41 = dma.hbm_to_vmem [thread:$0]  %s1, 43008, %s36, [#allocation3], 384, 384, 24
    $region9: #{mlp_forward.1} parent=1 // pred_fallthru
      _
    // Predicated region
    $region10: #{mlp_forward.1} parent=1 // pred_check
      _
    $region11: #{mlp_forward.1} parent=1 // pred_check_branch
      %43 = sbr.rel (0) target = $region13
    $region12: #{mlp_forward.1} parent=1 // pred_region
      %s45 = ssub.s32 96, 96
      %46 = vsyncadd [#allocation5], %s45
      %s48 = sshll.u32 [#allocation4], 4
      %s49 = int_to_ptr.vmem [resolvable:$true] %s48
      %51 = dma.hbm_to_vmem [thread:$0]  %s2, 96, %s49, [#allocation5]
    $region13: #{mlp_forward.1} parent=1 // pred_fallthru
      _
    // Predicated region
    $region14: #{mlp_forward.1} parent=1 // pred_check
      _
    $region15: #{mlp_forward.1} parent=1 // pred_check_branch
      %53 = sbr.rel (0) target = $region17
    $region16: #{mlp_forward.1} parent=1 // pred_region
      %s55 = ssub.s32 30720, 30720
      %56 = vsyncadd [#allocation5], %s55
      %s57 = sshll.u32 [#allocation6], 4
      %s58 = int_to_ptr.vmem [resolvable:$true] %s57
      %63 = dma.hbm_to_vmem [thread:$0]  %s3, 30720, %s58, [#allocation5], 320, 320, 20
    $region17: #{mlp_forward.1} parent=1 // pred_fallthru
      _
    // Predicated region
    $region18: #{mlp_forward.1} parent=1 // pred_check
      _
    $region19: #{mlp_forward.1} parent=1 // pred_check_branch
      %65 = sbr.rel (0) target = $region21
    $region20: #{mlp_forward.1} parent=1 // pred_region
      %s67 = ssub.s32 80, 80
      %68 = vsyncadd [#allocation8], %s67
      %s70 = sshll.u32 [#allocation7], 4
      %s71 = int_to_ptr.vmem [resolvable:$true] %s70
      %73 = dma.hbm_to_vmem [thread:$0]  %s4, 80, %s71, [#allocation8]
    $region21: #{mlp_forward.1} parent=1 // pred_fallthru
      _
    // Predicated region
    $region22: #{mlp_forward.1} parent=1 // pred_check
      _
    $region23: #{mlp_forward.1} parent=1 // pred_check_branch
      %75 = sbr.rel (0) target = $region25
    $region24: #{mlp_forward.1} parent=1 // pred_region
      %s77 = ssub.s32 20480, 20480
      %78 = vsyncadd [#allocation8], %s77
      %s79 = sshll.u32 [#allocation9], 4
      %s80 = int_to_ptr.vmem [resolvable:$true] %s79
      %85 = dma.hbm_to_vmem [thread:$0]  %s5, 20480, %s80, [#allocation8], 256, 256, 16
    $region25: #{mlp_forward.1} parent=1 // pred_fallthru
      _
    // Predicated region
    $region26: #{mlp_forward.1} parent=1 // pred_check
      _
    $region27: #{mlp_forward.1} parent=1 // pred_check_branch
      %87 = sbr.rel (0) target = $region29
    $region28: #{mlp_forward.1} parent=1 // pred_region
      %s89 = ssub.s32 64, 64
      %90 = vsyncadd [#allocation11], %s89
      %s92 = sshll.u32 [#allocation10], 4
      %s93 = int_to_ptr.vmem [resolvable:$true] %s92
      %95 = dma.hbm_to_vmem [thread:$0]  %s6, 64, %s93, [#allocation11]
    $region29: #{mlp_forward.1} parent=1 // pred_fallthru
      _
    // Predicated region
    $region30: #{mlp_forward.1} parent=1 // pred_check
      _
    $region31: #{mlp_forward.1} parent=1 // pred_check_branch
      %97 = sbr.rel (0) target = $region33
    $region32: #{mlp_forward.1} parent=1 // pred_region
      %s99 = ssub.s32 12288, 12288
      %100 = vsyncadd [#allocation11], %s99
      %s101 = sshll.u32 [#allocation12], 4
      %s102 = int_to_ptr.vmem [resolvable:$true] %s101
      %107 = dma.hbm_to_vmem [thread:$0]  %s7, 12288, %s102, [#allocation11], 192, 192, 12
    $region33: #{mlp_forward.1} parent=1 // pred_fallthru
      _
    // Predicated region
    $region34: #{mlp_forward.1} parent=1 // pred_check
      _
    $region35: #{mlp_forward.1} parent=1 // pred_check_branch
      %109 = sbr.rel (0) target = $region37
    $region36: #{mlp_forward.1} parent=1 // pred_region
      %s111 = ssub.s32 48, 48
      %112 = vsyncadd [#allocation14], %s111
      %s114 = sshll.u32 [#allocation13], 4
      %s115 = int_to_ptr.vmem [resolvable:$true] %s114
      %117 = dma.hbm_to_vmem [thread:$0]  %s8, 48, %s115, [#allocation14]
    $region37: #{mlp_forward.1} parent=1 // pred_fallthru
      _
    // Predicated region
    $region38: #{mlp_forward.1} parent=1 // pred_check
      _
    $region39: #{mlp_forward.1} parent=1 // pred_check_branch
      %119 = sbr.rel (0) target = $region41
    $region40: #{mlp_forward.1} parent=1 // pred_region
      %s121 = ssub.s32 6144, 6144
      %122 = vsyncadd [#allocation14], %s121
      %s123 = sshll.u32 [#allocation15], 4
      %s124 = int_to_ptr.vmem [resolvable:$true] %s123
      %129 = dma.hbm_to_vmem [thread:$0]  %s9, 6144, %s124, [#allocation14], 128, 128, 8
    $region41: #{mlp_forward.1} parent=1 // pred_fallthru
      _
    // Predicated region
    $region42: #{mlp_forward.1} parent=1 // pred_check
      _
    $region43: #{mlp_forward.1} parent=1 // pred_check_branch
      %131 = sbr.rel (0) target = $region45
    $region44: #{mlp_forward.1} parent=1 // pred_region
      %s133 = ssub.s32 32, 32
      %134 = vsyncadd [#allocation17], %s133
      %s136 = sshll.u32 [#allocation16], 4
      %s137 = int_to_ptr.vmem [resolvable:$true] %s136
      %139 = dma.hbm_to_vmem [thread:$0]  %s10, 32, %s137, [#allocation17]
    $region45: #{mlp_forward.1} parent=1 // pred_fallthru
      _
    // Predicated region
    $region46: #{mlp_forward.1} parent=1 // pred_check
      _
    $region47: #{mlp_forward.1} parent=1 // pred_check_branch
      %141 = sbr.rel (0) target = $region49
    $region48: #{mlp_forward.1} parent=1 // pred_region
      %s143 = ssub.s32 2048, 2048
      %144 = vsyncadd [#allocation17], %s143
      %s145 = sshll.u32 [#allocation18], 4
      %s146 = int_to_ptr.vmem [resolvable:$true] %s145
      %151 = dma.hbm_to_vmem [thread:$0]  %s11, 2048, %s146, [#allocation17], 64, 64, 4
    $region49: #{mlp_forward.1} parent=1 // pred_fallthru
      _
    // Predicated region
    $region50: #{mlp_forward.1} parent=1 // pred_check
      _
    $region51: #{mlp_forward.1} parent=1 // pred_check_branch
      %153 = sbr.rel (0) target = $region53
    $region52: #{mlp_forward.1} parent=1 // pred_region
      %s155 = ssub.s32 16, 16
      %156 = vsyncadd [#allocation20], %s155
      %s158 = sshll.u32 [#allocation19], 4
      %s159 = int_to_ptr.vmem [resolvable:$true] %s158
      %161 = dma.hbm_to_vmem [thread:$0]  %s12, 16, %s159, [#allocation20]
    $region53: #{mlp_forward.1} parent=1 // pred_fallthru
      _
    // Predicated region
    $region54: #{mlp_forward.1} parent=1 // pred_check
      _
    $region55: #{mlp_forward.1} parent=1 // pred_check_branch
      %163 = sbr.rel (0) target = $region57
    $region56: #{mlp_forward.1} parent=1 // pred_region
      %s165 = ssub.s32 1024, 1024
      %166 = vsyncadd [#allocation20], %s165
      %s167 = sshll.u32 [#allocation21], 4
      %s168 = int_to_ptr.vmem [resolvable:$true] %s167
      %173 = dma.hbm_to_vmem [thread:$0]  %s13, 1024, %s168, [#allocation20], 64, 64, 4
    $region57: #{mlp_forward.1} parent=1 // pred_fallthru
      _
    // Predicated region
    $region58: #{mlp_forward.1} parent=1 // pred_check
      _
    $region59: #{mlp_forward.1} parent=1 // pred_check_branch
      %175 = sbr.rel (0) target = $region61
    $region60: #{mlp_forward.1} parent=1 // pred_region
      %s177 = ssub.s32 16, 16
      %178 = vsyncadd [#allocation23], %s177
      %s180 = sshll.u32 [#allocation22], 4
      %s181 = int_to_ptr.vmem [resolvable:$true] %s180
      %183 = dma.hbm_to_vmem [thread:$0]  %s14, 16, %s181, [#allocation23]
    $region61: #{mlp_forward.1} parent=1 // pred_fallthru
      _
    // Predicated region
    $region62: #{mlp_forward.1} parent=1 // pred_check
      _
    $region63: #{mlp_forward.1} parent=1 // pred_check_branch
      %185 = sbr.rel (0) target = $region65
    $region64: #{mlp_forward.1} parent=1 // pred_region
      %186 = dma.done [#allocation3], 43008
    $region65: #{mlp_forward.1} parent=1 // pred_fallthru
      _
    // Predicated region
    $region66: #{mlp_forward.1} parent=1 // pred_check
      _
    $region67: #{mlp_forward.1} parent=1 // pred_check_branch
      %188 = sbr.rel (0) target = $region69
    $region68: #{mlp_forward.1} parent=1 // pred_region
      %189 = dma.done [#allocation5], 96
    $region69: #{mlp_forward.1} parent=1 // pred_fallthru
      _
    // Predicated region
    $region70: #{mlp_forward.1} parent=1 // pred_check
      _
    $region71: #{mlp_forward.1} parent=1 // pred_check_branch
      %191 = sbr.rel (0) target = $region73
    $region72: #{mlp_forward.1} parent=1 // pred_region
      %192 = dma.done [#allocation5], 30720
    $region73: #{mlp_forward.1} parent=1 // pred_fallthru
      _
    // Predicated region
    $region74: #{mlp_forward.1} parent=1 // pred_check
      _
    $region75: #{mlp_forward.1} parent=1 // pred_check_branch
      %194 = sbr.rel (0) target = $region77
    $region76: #{mlp_forward.1} parent=1 // pred_region
      %195 = dma.done [#allocation8], 80
    $region77: #{mlp_forward.1} parent=1 // pred_fallthru
      _
    // Predicated region
    $region78: #{mlp_forward.1} parent=1 // pred_check
      _
    $region79: #{mlp_forward.1} parent=1 // pred_check_branch
      %197 = sbr.rel (0) target = $region81
    $region80: #{mlp_forward.1} parent=1 // pred_region
      %198 = dma.done [#allocation8], 20480
    $region81: #{mlp_forward.1} parent=1 // pred_fallthru
      _
    // Predicated region
    $region82: #{mlp_forward.1} parent=1 // pred_check
      _
    $region83: #{mlp_forward.1} parent=1 // pred_check_branch
      %200 = sbr.rel (0) target = $region85
    $region84: #{mlp_forward.1} parent=1 // pred_region
      %201 = dma.done [#allocation11], 64
    $region85: #{mlp_forward.1} parent=1 // pred_fallthru
      _
    // Predicated region
    $region86: #{mlp_forward.1} parent=1 // pred_check
      _
    $region87: #{mlp_forward.1} parent=1 // pred_check_branch
      %203 = sbr.rel (0) target = $region89
    $region88: #{mlp_forward.1} parent=1 // pred_region
      %204 = dma.done [#allocation11], 12288
    $region89: #{mlp_forward.1} parent=1 // pred_fallthru
      _
    // Predicated region
    $region90: #{mlp_forward.1} parent=1 // pred_check
      _
    $region91: #{mlp_forward.1} parent=1 // pred_check_branch
      %206 = sbr.rel (0) target = $region93
    $region92: #{mlp_forward.1} parent=1 // pred_region
      %207 = dma.done [#allocation14], 48
    $region93: #{mlp_forward.1} parent=1 // pred_fallthru
      _
    // Predicated region
    $region94: #{mlp_forward.1} parent=1 // pred_check
      _
    $region95: #{mlp_forward.1} parent=1 // pred_check_branch
      %209 = sbr.rel (0) target = $region97
    $region96: #{mlp_forward.1} parent=1 // pred_region
      %210 = dma.done [#allocation14], 6144
    $region97: #{mlp_forward.1} parent=1 // pred_fallthru
      _
    // Predicated region
    $region98: #{mlp_forward.1} parent=1 // pred_check
      _
    $region99: #{mlp_forward.1} parent=1 // pred_check_branch
      %212 = sbr.rel (0) target = $region101
    $region100: #{mlp_forward.1} parent=1 // pred_region
      %213 = dma.done [#allocation17], 32
    $region101: #{mlp_forward.1} parent=1 // pred_fallthru
      _
    // Predicated region
    $region102: #{mlp_forward.1} parent=1 // pred_check
      _
    $region103: #{mlp_forward.1} parent=1 // pred_check_branch
      %215 = sbr.rel (0) target = $region105
    $region104: #{mlp_forward.1} parent=1 // pred_region
      %216 = dma.done [#allocation17], 2048
    $region105: #{mlp_forward.1} parent=1 // pred_fallthru
      _
    // Predicated region
    $region106: #{mlp_forward.1} parent=1 // pred_check
      _
    $region107: #{mlp_forward.1} parent=1 // pred_check_branch
      %218 = sbr.rel (0) target = $region109
    $region108: #{mlp_forward.1} parent=1 // pred_region
      %219 = dma.done [#allocation20], 16
    $region109: #{mlp_forward.1} parent=1 // pred_fallthru
      _
    // Predicated region
    $region110: #{mlp_forward.1} parent=1 // pred_check
      _
    $region111: #{mlp_forward.1} parent=1 // pred_check_branch
      %221 = sbr.rel (0) target = $region113
    $region112: #{mlp_forward.1} parent=1 // pred_region
      %222 = dma.done [#allocation20], 1024
    $region113: #{mlp_forward.1} parent=1 // pred_fallthru
      _
    // Predicated region
    $region114: #{mlp_forward.1} parent=1 // pred_check
      _
    $region115: #{mlp_forward.1} parent=1 // pred_check_branch
      %224 = sbr.rel (0) target = $region117
    $region116: #{mlp_forward.1} parent=1 // pred_region
      %225 = dma.done [#allocation23], 16
    $region117: #{mlp_forward.1} parent=1 // pred_fallthru
      _
    %v227 = vld [vmem:[%s0] sm:$0xff]
    %v228 = vld [vmem:[%s0 + $0x8] sm:$0xff]
    %v229 = vld [vmem:[%s0 + $0x10] sm:$0xff]
    %v230 = vld [vmem:[%s0 + $0x18] sm:$0xff]
    %v231 = vld [vmem:[%s0 + $0x20] sm:$0xff]
    %v232 = vld [vmem:[%s0 + $0x28] sm:$0xff]
    %v233 = vld [vmem:[%s0 + $0x30] sm:$0xff]
    %v234 = vld [vmem:[#allocation2] sm:$0xff]
    %v235 = vld [vmem:[#allocation2 + $0x8] sm:$0xff]
    %v236 = vld [vmem:[#allocation2 + $0x10] sm:$0xff]
    %v237 = vld [vmem:[#allocation2 + $0x18] sm:$0xff]
    %v238 = vld [vmem:[#allocation2 + $0x20] sm:$0xff]
    %v239 = vld [vmem:[#allocation2 + $0x28] sm:$0xff]
    %v240 = vld [vmem:[#allocation2 + $0x30] sm:$0xff]
    %v241 = vld [vmem:[#allocation2 + $0x38] sm:$0xff]
    %v242 = vld [vmem:[#allocation2 + $0x40] sm:$0xff]
    %v243 = vld [vmem:[#allocation2 + $0x48] sm:$0xff]
    %v244 = vld [vmem:[#allocation2 + $0x50] sm:$0xff]
    %v245 = vld [vmem:[#allocation2 + $0x58] sm:$0xff]
    %v246 = vld [vmem:[#allocation2 + $0x60] sm:$0xff]
    %v247 = vld [vmem:[#allocation2 + $0x68] sm:$0xff]
    %v248 = vld [vmem:[#allocation2 + $0x70] sm:$0xff]
    %v249 = vld [vmem:[#allocation2 + $0x78] sm:$0xff]
    %v250 = vld [vmem:[#allocation2 + $0x80] sm:$0xff]
    %v251 = vld [vmem:[#allocation2 + $0x88] sm:$0xff]
    %v252 = vld [vmem:[#allocation2 + $0x90] sm:$0xff]
    %v253 = vld [vmem:[#allocation2 + $0x98] sm:$0xff]
    %v254 = vld [vmem:[#allocation2 + $0xa0] sm:$0xff]
    %v255 = vld [vmem:[#allocation2 + $0xa8] sm:$0xff]
    %v256 = vld [vmem:[#allocation2 + $0xb0] sm:$0xff]
    %v257 = vld [vmem:[#allocation2 + $0xb8] sm:$0xff]
    %v258 = vld [vmem:[#allocation2 + $0xc0] sm:$0xff]
    %v259 = vld [vmem:[#allocation2 + $0xc8] sm:$0xff]
    %v260 = vld [vmem:[#allocation2 + $0xd0] sm:$0xff]
    %v261 = vld [vmem:[#allocation2 + $0xd8] sm:$0xff]
    %v262 = vld [vmem:[#allocation2 + $0xe0] sm:$0xff]
    %v263 = vld [vmem:[#allocation2 + $0xe8] sm:$0xff]
    %v264 = vld [vmem:[#allocation2 + $0xf0] sm:$0xff]
    %v265 = vld [vmem:[#allocation2 + $0xf8] sm:$0xff]
    %v266 = vld [vmem:[#allocation2 + $0x100] sm:$0xff]
    %v267 = vld [vmem:[#allocation2 + $0x108] sm:$0xff]
    %v268 = vld [vmem:[#allocation2 + $0x110] sm:$0xff]
    %v269 = vld [vmem:[#allocation2 + $0x118] sm:$0xff]
    %v270 = vld [vmem:[#allocation2 + $0x120] sm:$0xff]
    %v271 = vld [vmem:[#allocation2 + $0x128] sm:$0xff]
    %v272 = vld [vmem:[#allocation2 + $0x130] sm:$0xff]
    %v273 = vld [vmem:[#allocation2 + $0x138] sm:$0xff]
    %v274 = vld [vmem:[#allocation2 + $0x140] sm:$0xff]
    %v275 = vld [vmem:[#allocation2 + $0x148] sm:$0xff]
    %v276 = vld [vmem:[#allocation2 + $0x150] sm:$0xff]
    %v277 = vld [vmem:[#allocation2 + $0x158] sm:$0xff]
    %v278 = vld [vmem:[#allocation2 + $0x160] sm:$0xff]
    %v279 = vld [vmem:[#allocation2 + $0x168] sm:$0xff]
    %v280 = vld [vmem:[#allocation2 + $0x170] sm:$0xff]
    %v281 = vld [vmem:[#allocation2 + $0x178] sm:$0xff]
    %v282 = vld [vmem:[#allocation2 + $0x180] sm:$0xff]
    %v283 = vld [vmem:[#allocation2 + $0x188] sm:$0xff]
    %v284 = vld [vmem:[#allocation2 + $0x190] sm:$0xff]
    %v285 = vld [vmem:[#allocation2 + $0x198] sm:$0xff]
    %v286 = vld [vmem:[#allocation2 + $0x1a0] sm:$0xff]
    %v287 = vld [vmem:[#allocation2 + $0x1a8] sm:$0xff]
    %v288 = vld [vmem:[#allocation2 + $0x1b0] sm:$0xff]
    %v289 = vld [vmem:[#allocation2 + $0x1b8] sm:$0xff]
    %v290 = vld [vmem:[#allocation2 + $0x1c0] sm:$0xff]
    %v291 = vld [vmem:[#allocation2 + $0x1c8] sm:$0xff]
    %v292 = vld [vmem:[#allocation2 + $0x1d0] sm:$0xff]
    %v293 = vld [vmem:[#allocation2 + $0x1d8] sm:$0xff]
    %v294 = vld [vmem:[#allocation2 + $0x1e0] sm:$0xff]
    %v295 = vld [vmem:[#allocation2 + $0x1e8] sm:$0xff]
    %v296 = vld [vmem:[#allocation2 + $0x1f0] sm:$0xff]
    %v297 = vld [vmem:[#allocation2 + $0x1f8] sm:$0xff]
    %v298 = vld [vmem:[#allocation2 + $0x200] sm:$0xff]
    %v299 = vld [vmem:[#allocation2 + $0x208] sm:$0xff]
    %v300 = vld [vmem:[#allocation2 + $0x210] sm:$0xff]
    %v301 = vld [vmem:[#allocation2 + $0x218] sm:$0xff]
    %v302 = vld [vmem:[#allocation2 + $0x220] sm:$0xff]
    %v303 = vld [vmem:[#allocation2 + $0x228] sm:$0xff]
    %v304 = vld [vmem:[#allocation2 + $0x230] sm:$0xff]
    %v305 = vld [vmem:[#allocation2 + $0x238] sm:$0xff]
    %v306 = vld [vmem:[#allocation2 + $0x240] sm:$0xff]
    %v307 = vld [vmem:[#allocation2 + $0x248] sm:$0xff]
    %v308 = vld [vmem:[#allocation2 + $0x250] sm:$0xff]
    %v309 = vld [vmem:[#allocation2 + $0x258] sm:$0xff]
    %v310 = vld [vmem:[#allocation2 + $0x260] sm:$0xff]
    %v311 = vld [vmem:[#allocation2 + $0x268] sm:$0xff]
    %v312 = vld [vmem:[#allocation2 + $0x270] sm:$0xff]
    %v313 = vld [vmem:[#allocation2 + $0x278] sm:$0xff]
    %v314 = vld [vmem:[#allocation2 + $0x280] sm:$0xff]
    %v315 = vld [vmem:[#allocation2 + $0x288] sm:$0xff]
    %v316 = vld [vmem:[#allocation2 + $0x290] sm:$0xff]
    %v317 = vld [vmem:[#allocation2 + $0x298] sm:$0xff]
    %v318 = vld [vmem:[#allocation2 + $0x2a0] sm:$0xff]
    %v319 = vld [vmem:[#allocation2 + $0x2a8] sm:$0xff]
    %v320 = vld [vmem:[#allocation2 + $0x2b0] sm:$0xff]
    %v321 = vld [vmem:[#allocation2 + $0x2b8] sm:$0xff]
    %v322 = vld [vmem:[#allocation2 + $0x2c0] sm:$0xff]
    %v323 = vld [vmem:[#allocation2 + $0x2c8] sm:$0xff]
    %v324 = vld [vmem:[#allocation2 + $0x2d0] sm:$0xff]
    %v325 = vld [vmem:[#allocation2 + $0x2d8] sm:$0xff]
    %v326 = vld [vmem:[#allocation2 + $0x2e0] sm:$0xff]
    %v327 = vld [vmem:[#allocation2 + $0x2e8] sm:$0xff]
    %v328 = vld [vmem:[#allocation2 + $0x2f0] sm:$0xff]
    %v329 = vld [vmem:[#allocation2 + $0x2f8] sm:$0xff]
    %v330 = vld [vmem:[#allocation2 + $0x300] sm:$0xff]
    %v331 = vld [vmem:[#allocation2 + $0x308] sm:$0xff]
    %v332 = vld [vmem:[#allocation2 + $0x310] sm:$0xff]
    %v333 = vld [vmem:[#allocation2 + $0x318] sm:$0xff]
    %v334 = vld [vmem:[#allocation2 + $0x320] sm:$0xff]
    %v335 = vld [vmem:[#allocation2 + $0x328] sm:$0xff]
    %v336 = vld [vmem:[#allocation2 + $0x330] sm:$0xff]
    %v337 = vld [vmem:[#allocation2 + $0x338] sm:$0xff]
    %v338 = vld [vmem:[#allocation2 + $0x340] sm:$0xff]
    %v339 = vld [vmem:[#allocation2 + $0x348] sm:$0xff]
    %v340 = vld [vmem:[#allocation2 + $0x350] sm:$0xff]
    %v341 = vld [vmem:[#allocation2 + $0x358] sm:$0xff]
    %v342 = vld [vmem:[#allocation2 + $0x360] sm:$0xff]
    %v343 = vld [vmem:[#allocation2 + $0x368] sm:$0xff]
    %v344 = vld [vmem:[#allocation2 + $0x370] sm:$0xff]
    %v345 = vld [vmem:[#allocation2 + $0x378] sm:$0xff]
    %v346 = vld [vmem:[#allocation2 + $0x380] sm:$0xff]
    %v347 = vld [vmem:[#allocation2 + $0x388] sm:$0xff]
    %v348 = vld [vmem:[#allocation2 + $0x390] sm:$0xff]
    %v349 = vld [vmem:[#allocation2 + $0x398] sm:$0xff]
    %v350 = vld [vmem:[#allocation2 + $0x3a0] sm:$0xff]
    %v351 = vld [vmem:[#allocation2 + $0x3a8] sm:$0xff]
    %v352 = vld [vmem:[#allocation2 + $0x3b0] sm:$0xff]
    %v353 = vld [vmem:[#allocation2 + $0x3b8] sm:$0xff]
    %v354 = vld [vmem:[#allocation2 + $0x3c0] sm:$0xff]
    %v355 = vld [vmem:[#allocation2 + $0x3c8] sm:$0xff]
    %v356 = vld [vmem:[#allocation2 + $0x3d0] sm:$0xff]
    %v357 = vld [vmem:[#allocation2 + $0x3d8] sm:$0xff]
    %v358 = vld [vmem:[#allocation2 + $0x3e0] sm:$0xff]
    %v359 = vld [vmem:[#allocation2 + $0x3e8] sm:$0xff]
    %v360 = vld [vmem:[#allocation2 + $0x3f0] sm:$0xff]
    %v361 = vld [vmem:[#allocation2 + $0x3f8] sm:$0xff]
    %v362 = vld [vmem:[#allocation2 + $0x400] sm:$0xff]
    %v363 = vld [vmem:[#allocation2 + $0x408] sm:$0xff]
    %v364 = vld [vmem:[#allocation2 + $0x410] sm:$0xff]
    %v365 = vld [vmem:[#allocation2 + $0x418] sm:$0xff]
    %v366 = vld [vmem:[#allocation2 + $0x420] sm:$0xff]
    %v367 = vld [vmem:[#allocation2 + $0x428] sm:$0xff]
    %v368 = vld [vmem:[#allocation2 + $0x430] sm:$0xff]
    %v369 = vld [vmem:[#allocation2 + $0x438] sm:$0xff]
    %v370 = vld [vmem:[#allocation2 + $0x440] sm:$0xff]
    %v371 = vld [vmem:[#allocation2 + $0x448] sm:$0xff]
    %v372 = vld [vmem:[#allocation2 + $0x450] sm:$0xff]
    %v373 = vld [vmem:[#allocation2 + $0x458] sm:$0xff]
    %v374 = vld [vmem:[#allocation2 + $0x460] sm:$0xff]
    %v375 = vld [vmem:[#allocation2 + $0x468] sm:$0xff]
    %v376 = vld [vmem:[#allocation2 + $0x470] sm:$0xff]
    %v377 = vld [vmem:[#allocation2 + $0x478] sm:$0xff]
    %v378 = vld [vmem:[#allocation2 + $0x480] sm:$0xff]
    %v379 = vld [vmem:[#allocation2 + $0x488] sm:$0xff]
    %v380 = vld [vmem:[#allocation2 + $0x490] sm:$0xff]
    %v381 = vld [vmem:[#allocation2 + $0x498] sm:$0xff]
    %v382 = vld [vmem:[#allocation2 + $0x4a0] sm:$0xff]
    %v383 = vld [vmem:[#allocation2 + $0x4a8] sm:$0xff]
    %v384 = vld [vmem:[#allocation2 + $0x4b0] sm:$0xff]
    %v385 = vld [vmem:[#allocation2 + $0x4b8] sm:$0xff]
    %v386 = vld [vmem:[#allocation2 + $0x4c0] sm:$0xff]
    %v387 = vld [vmem:[#allocation2 + $0x4c8] sm:$0xff]
    %v388 = vld [vmem:[#allocation2 + $0x4d0] sm:$0xff]
    %v389 = vld [vmem:[#allocation2 + $0x4d8] sm:$0xff]
    %v390 = vld [vmem:[#allocation2 + $0x4e0] sm:$0xff]
    %v391 = vld [vmem:[#allocation2 + $0x4e8] sm:$0xff]
    %v392 = vld [vmem:[#allocation2 + $0x4f0] sm:$0xff]
    %v393 = vld [vmem:[#allocation2 + $0x4f8] sm:$0xff]
    %v394 = vld [vmem:[#allocation2 + $0x500] sm:$0xff]
    %v395 = vld [vmem:[#allocation2 + $0x508] sm:$0xff]
    %v396 = vld [vmem:[#allocation2 + $0x510] sm:$0xff]
    %v397 = vld [vmem:[#allocation2 + $0x518] sm:$0xff]
    %v398 = vld [vmem:[#allocation2 + $0x520] sm:$0xff]
    %v399 = vld [vmem:[#allocation2 + $0x528] sm:$0xff]
    %v400 = vld [vmem:[#allocation2 + $0x530] sm:$0xff]
    %v401 = vld [vmem:[#allocation2 + $0x538] sm:$0xff]
    %v402 = vld [vmem:[#allocation2 + $0x540] sm:$0xff]
    %v403 = vld [vmem:[#allocation2 + $0x548] sm:$0xff]
    %v404 = vld [vmem:[#allocation2 + $0x550] sm:$0xff]
    %v405 = vld [vmem:[#allocation2 + $0x558] sm:$0xff]
    %v406 = vld [vmem:[#allocation2 + $0x560] sm:$0xff]
    %v407 = vld [vmem:[#allocation2 + $0x568] sm:$0xff]
    %v408 = vld [vmem:[#allocation2 + $0x570] sm:$0xff]
    %v409 = vld [vmem:[#allocation2 + $0x578] sm:$0xff]
    %v410 = vld [vmem:[#allocation2 + $0x580] sm:$0xff]
    %v411 = vld [vmem:[#allocation2 + $0x588] sm:$0xff]
    %v412 = vld [vmem:[#allocation2 + $0x590] sm:$0xff]
    %v413 = vld [vmem:[#allocation2 + $0x598] sm:$0xff]
    %v414 = vld [vmem:[#allocation2 + $0x5a0] sm:$0xff]
    %v415 = vld [vmem:[#allocation2 + $0x5a8] sm:$0xff]
    %v416 = vld [vmem:[#allocation2 + $0x5b0] sm:$0xff]
    %v417 = vld [vmem:[#allocation2 + $0x5b8] sm:$0xff]
    %v418 = vld [vmem:[#allocation2 + $0x5c0] sm:$0xff]
    %v419 = vld [vmem:[#allocation2 + $0x5c8] sm:$0xff]
    %v420 = vld [vmem:[#allocation2 + $0x5d0] sm:$0xff]
    %v421 = vld [vmem:[#allocation2 + $0x5d8] sm:$0xff]
    %v422 = vld [vmem:[#allocation2 + $0x5e0] sm:$0xff]
    %v423 = vld [vmem:[#allocation2 + $0x5e8] sm:$0xff]
    %v424 = vld [vmem:[#allocation2 + $0x5f0] sm:$0xff]
    %v425 = vld [vmem:[#allocation2 + $0x5f8] sm:$0xff]
    %v426 = vld [vmem:[#allocation2 + $0x600] sm:$0xff]
    %v427 = vld [vmem:[#allocation2 + $0x608] sm:$0xff]
    %v428 = vld [vmem:[#allocation2 + $0x610] sm:$0xff]
    %v429 = vld [vmem:[#allocation2 + $0x618] sm:$0xff]
    %v430 = vld [vmem:[#allocation2 + $0x620] sm:$0xff]
    %v431 = vld [vmem:[#allocation2 + $0x628] sm:$0xff]
    %v432 = vld [vmem:[#allocation2 + $0x630] sm:$0xff]
    %v433 = vld [vmem:[#allocation2 + $0x638] sm:$0xff]
    %v434 = vld [vmem:[#allocation2 + $0x640] sm:$0xff]
    %v435 = vld [vmem:[#allocation2 + $0x648] sm:$0xff]
    %v436 = vld [vmem:[#allocation2 + $0x650] sm:$0xff]
    %v437 = vld [vmem:[#allocation2 + $0x658] sm:$0xff]
    %v438 = vld [vmem:[#allocation2 + $0x660] sm:$0xff]
    %v439 = vld [vmem:[#allocation2 + $0x668] sm:$0xff]
    %v440 = vld [vmem:[#allocation2 + $0x670] sm:$0xff]
    %v441 = vld [vmem:[#allocation2 + $0x678] sm:$0xff]
    %v442 = vld [vmem:[#allocation2 + $0x680] sm:$0xff]
    %v443 = vld [vmem:[#allocation2 + $0x688] sm:$0xff]
    %v444 = vld [vmem:[#allocation2 + $0x690] sm:$0xff]
    %v445 = vld [vmem:[#allocation2 + $0x698] sm:$0xff]
    %v446 = vld [vmem:[#allocation2 + $0x6a0] sm:$0xff]
    %v447 = vld [vmem:[#allocation2 + $0x6a8] sm:$0xff]
    %v448 = vld [vmem:[#allocation2 + $0x6b0] sm:$0xff]
    %v449 = vld [vmem:[#allocation2 + $0x6b8] sm:$0xff]
    %v450 = vld [vmem:[#allocation2 + $0x6c0] sm:$0xff]
    %v451 = vld [vmem:[#allocation2 + $0x6c8] sm:$0xff]
    %v452 = vld [vmem:[#allocation2 + $0x6d0] sm:$0xff]
    %v453 = vld [vmem:[#allocation2 + $0x6d8] sm:$0xff]
    %v454 = vld [vmem:[#allocation2 + $0x6e0] sm:$0xff]
    %v455 = vld [vmem:[#allocation2 + $0x6e8] sm:$0xff]
    %v456 = vld [vmem:[#allocation2 + $0x6f0] sm:$0xff]
    %v457 = vld [vmem:[#allocation2 + $0x6f8] sm:$0xff]
    %v458 = vld [vmem:[#allocation2 + $0x700] sm:$0xff]
    %v459 = vld [vmem:[#allocation2 + $0x708] sm:$0xff]
    %v460 = vld [vmem:[#allocation2 + $0x710] sm:$0xff]
    %v461 = vld [vmem:[#allocation2 + $0x718] sm:$0xff]
    %v462 = vld [vmem:[#allocation2 + $0x720] sm:$0xff]
    %v463 = vld [vmem:[#allocation2 + $0x728] sm:$0xff]
    %v464 = vld [vmem:[#allocation2 + $0x730] sm:$0xff]
    %v465 = vld [vmem:[#allocation2 + $0x738] sm:$0xff]
    %v466 = vld [vmem:[#allocation2 + $0x740] sm:$0xff]
    %v467 = vld [vmem:[#allocation2 + $0x748] sm:$0xff]
    %v468 = vld [vmem:[#allocation2 + $0x750] sm:$0xff]
    %v469 = vld [vmem:[#allocation2 + $0x758] sm:$0xff]
    %v470 = vld [vmem:[#allocation2 + $0x760] sm:$0xff]
    %v471 = vld [vmem:[#allocation2 + $0x768] sm:$0xff]
    %v472 = vld [vmem:[#allocation2 + $0x770] sm:$0xff]
    %v473 = vld [vmem:[#allocation2 + $0x778] sm:$0xff]
    %v474 = vld [vmem:[#allocation2 + $0x780] sm:$0xff]
    %v475 = vld [vmem:[#allocation2 + $0x788] sm:$0xff]
    %v476 = vld [vmem:[#allocation2 + $0x790] sm:$0xff]
    %v477 = vld [vmem:[#allocation2 + $0x798] sm:$0xff]
    %v478 = vld [vmem:[#allocation2 + $0x7a0] sm:$0xff]
    %v479 = vld [vmem:[#allocation2 + $0x7a8] sm:$0xff]
    %v480 = vld [vmem:[#allocation2 + $0x7b0] sm:$0xff]
    %v481 = vld [vmem:[#allocation2 + $0x7b8] sm:$0xff]
    %v482 = vld [vmem:[#allocation2 + $0x7c0] sm:$0xff]
    %v483 = vld [vmem:[#allocation2 + $0x7c8] sm:$0xff]
    %v484 = vld [vmem:[#allocation2 + $0x7d0] sm:$0xff]
    %v485 = vld [vmem:[#allocation2 + $0x7d8] sm:$0xff]
    %v486 = vld [vmem:[#allocation2 + $0x7e0] sm:$0xff]
    %v487 = vld [vmem:[#allocation2 + $0x7e8] sm:$0xff]
    %v488 = vld [vmem:[#allocation2 + $0x7f0] sm:$0xff]
    %v489 = vld [vmem:[#allocation2 + $0x7f8] sm:$0xff]
    %v490 = vld [vmem:[#allocation2 + $0x800] sm:$0xff]
    %v491 = vld [vmem:[#allocation2 + $0x808] sm:$0xff]
    %v492 = vld [vmem:[#allocation2 + $0x810] sm:$0xff]
    %v493 = vld [vmem:[#allocation2 + $0x818] sm:$0xff]
    %v494 = vld [vmem:[#allocation2 + $0x820] sm:$0xff]
    %v495 = vld [vmem:[#allocation2 + $0x828] sm:$0xff]
    %v496 = vld [vmem:[#allocation2 + $0x830] sm:$0xff]
    %v497 = vld [vmem:[#allocation2 + $0x838] sm:$0xff]
    %v498 = vld [vmem:[#allocation2 + $0x840] sm:$0xff]
    %v499 = vld [vmem:[#allocation2 + $0x848] sm:$0xff]
    %v500 = vld [vmem:[#allocation2 + $0x850] sm:$0xff]
    %v501 = vld [vmem:[#allocation2 + $0x858] sm:$0xff]
    %v502 = vld [vmem:[#allocation2 + $0x860] sm:$0xff]
    %v503 = vld [vmem:[#allocation2 + $0x868] sm:$0xff]
    %v504 = vld [vmem:[#allocation2 + $0x870] sm:$0xff]
    %v505 = vld [vmem:[#allocation2 + $0x878] sm:$0xff]
    %v506 = vld [vmem:[#allocation2 + $0x880] sm:$0xff]
    %v507 = vld [vmem:[#allocation2 + $0x888] sm:$0xff]
    %v508 = vld [vmem:[#allocation2 + $0x890] sm:$0xff]
    %v509 = vld [vmem:[#allocation2 + $0x898] sm:$0xff]
    %v510 = vld [vmem:[#allocation2 + $0x8a0] sm:$0xff]
    %v511 = vld [vmem:[#allocation2 + $0x8a8] sm:$0xff]
    %v512 = vld [vmem:[#allocation2 + $0x8b0] sm:$0xff]
    %v513 = vld [vmem:[#allocation2 + $0x8b8] sm:$0xff]
    %v514 = vld [vmem:[#allocation2 + $0x8c0] sm:$0xff]
    %v515 = vld [vmem:[#allocation2 + $0x8c8] sm:$0xff]
    %v516 = vld [vmem:[#allocation2 + $0x8d0] sm:$0xff]
    %v517 = vld [vmem:[#allocation2 + $0x8d8] sm:$0xff]
    %v518 = vld [vmem:[#allocation2 + $0x8e0] sm:$0xff]
    %v519 = vld [vmem:[#allocation2 + $0x8e8] sm:$0xff]
    %v520 = vld [vmem:[#allocation2 + $0x8f0] sm:$0xff]
    %v521 = vld [vmem:[#allocation2 + $0x8f8] sm:$0xff]
    %v522 = vld [vmem:[#allocation2 + $0x900] sm:$0xff]
    %v523 = vld [vmem:[#allocation2 + $0x908] sm:$0xff]
    %v524 = vld [vmem:[#allocation2 + $0x910] sm:$0xff]
    %v525 = vld [vmem:[#allocation2 + $0x918] sm:$0xff]
    %v526 = vld [vmem:[#allocation2 + $0x920] sm:$0xff]
    %v527 = vld [vmem:[#allocation2 + $0x928] sm:$0xff]
    %v528 = vld [vmem:[#allocation2 + $0x930] sm:$0xff]
    %v529 = vld [vmem:[#allocation2 + $0x938] sm:$0xff]
    %v530 = vld [vmem:[#allocation2 + $0x940] sm:$0xff]
    %v531 = vld [vmem:[#allocation2 + $0x948] sm:$0xff]
    %v532 = vld [vmem:[#allocation2 + $0x950] sm:$0xff]
    %v533 = vld [vmem:[#allocation2 + $0x958] sm:$0xff]
    %v534 = vld [vmem:[#allocation2 + $0x960] sm:$0xff]
    %v535 = vld [vmem:[#allocation2 + $0x968] sm:$0xff]
    %v536 = vld [vmem:[#allocation2 + $0x970] sm:$0xff]
    %v537 = vld [vmem:[#allocation2 + $0x978] sm:$0xff]
    %v538 = vld [vmem:[#allocation2 + $0x980] sm:$0xff]
    %v539 = vld [vmem:[#allocation2 + $0x988] sm:$0xff]
    %v540 = vld [vmem:[#allocation2 + $0x990] sm:$0xff]
    %v541 = vld [vmem:[#allocation2 + $0x998] sm:$0xff]
    %v542 = vld [vmem:[#allocation2 + $0x9a0] sm:$0xff]
    %v543 = vld [vmem:[#allocation2 + $0x9a8] sm:$0xff]
    %v544 = vld [vmem:[#allocation2 + $0x9b0] sm:$0xff]
    %v545 = vld [vmem:[#allocation2 + $0x9b8] sm:$0xff]
    %v546 = vld [vmem:[#allocation2 + $0x9c0] sm:$0xff]
    %v547 = vld [vmem:[#allocation2 + $0x9c8] sm:$0xff]
    %v548 = vld [vmem:[#allocation2 + $0x9d0] sm:$0xff]
    %v549 = vld [vmem:[#allocation2 + $0x9d8] sm:$0xff]
    %v550 = vld [vmem:[#allocation2 + $0x9e0] sm:$0xff]
    %v551 = vld [vmem:[#allocation2 + $0x9e8] sm:$0xff]
    %v552 = vld [vmem:[#allocation2 + $0x9f0] sm:$0xff]
    %v553 = vld [vmem:[#allocation2 + $0x9f8] sm:$0xff]
    %v554 = vld [vmem:[#allocation2 + $0xa00] sm:$0xff]
    %v555 = vld [vmem:[#allocation2 + $0xa08] sm:$0xff]
    %v556 = vld [vmem:[#allocation2 + $0xa10] sm:$0xff]
    %v557 = vld [vmem:[#allocation2 + $0xa18] sm:$0xff]
    %v558 = vld [vmem:[#allocation2 + $0xa20] sm:$0xff]
    %v559 = vld [vmem:[#allocation2 + $0xa28] sm:$0xff]
    %v560 = vld [vmem:[#allocation2 + $0xa30] sm:$0xff]
    %v561 = vld [vmem:[#allocation2 + $0xa38] sm:$0xff]
    %v562 = vld [vmem:[#allocation2 + $0xa40] sm:$0xff]
    %v563 = vld [vmem:[#allocation2 + $0xa48] sm:$0xff]
    %v564 = vld [vmem:[#allocation2 + $0xa50] sm:$0xff]
    %v565 = vld [vmem:[#allocation2 + $0xa58] sm:$0xff]
    %v566 = vld [vmem:[#allocation2 + $0xa60] sm:$0xff]
    %v567 = vld [vmem:[#allocation2 + $0xa68] sm:$0xff]
    %v568 = vld [vmem:[#allocation2 + $0xa70] sm:$0xff]
    %v569 = vld [vmem:[#allocation2 + $0xa78] sm:$0xff]
    %v570 = vld [vmem:[#allocation4] sm:$0x3f]
    %v571 = vpack.c.bf16 %v227, %v227
    %v572 = vpack.c.bf16 %v228, %v228
    %v573 = vpack.c.bf16 %v229, %v229
    %v574 = vpack.c.bf16 %v230, %v230
    %v575 = vpack.c.bf16 %v231, %v231
    %v576 = vpack.c.bf16 %v232, %v232
    %v577 = vpack.c.bf16 %v233, %v233
    %v579 = vlaneseq
    %v580 = vshrl.u32 %v579, 7
    %v581 = vsub.s32 0, %v580
    %v582 = vrot.slane %v570, %v581
    %v583 = vlaneseq
    %v584 = vshrl.u32 %v583, 7
    %v585 = vsub.s32 1, %v584
    %v586 = vrot.slane %v570, %v585
    %v587 = vlaneseq
    %v588 = vshrl.u32 %v587, 7
    %v589 = vsub.s32 2, %v588
    %v590 = vrot.slane %v570, %v589
    %v591 = vlaneseq
    %v592 = vshrl.u32 %v591, 7
    %v593 = vsub.s32 3, %v592
    %v594 = vrot.slane %v570, %v593
    %v595 = vlaneseq
    %v596 = vshrl.u32 %v595, 7
    %v597 = vsub.s32 4, %v596
    %v598 = vrot.slane %v570, %v597
    %v599 = vlaneseq
    %v600 = vshrl.u32 %v599, 7
    %v601 = vsub.s32 5, %v600
    %v602 = vrot.slane %v570, %v601
    %v945 = vunpack.c.l.b16 %v234
    %v946 = vunpack.c.h.b16 %v234
    %v947 = vunpack.c.l.b16 %v235
    %v948 = vunpack.c.h.b16 %v235
    %v949 = vunpack.c.l.b16 %v236
    %v950 = vunpack.c.h.b16 %v236
    %v951 = vunpack.c.l.b16 %v237
    %v952 = vunpack.c.h.b16 %v237
    %v953 = vunpack.c.l.b16 %v238
    %v954 = vunpack.c.h.b16 %v238
    %v955 = vunpack.c.l.b16 %v239
    %v956 = vunpack.c.h.b16 %v239
    %v957 = vunpack.c.l.b16 %v240
    %v958 = vunpack.c.h.b16 %v240
    %v959 = vunpack.c.l.b16 %v241
    %v960 = vunpack.c.h.b16 %v241
    %v961 = vunpack.c.l.b16 %v242
    %v962 = vunpack.c.h.b16 %v242
    %v963 = vunpack.c.l.b16 %v243
    %v964 = vunpack.c.h.b16 %v243
    %v965 = vunpack.c.l.b16 %v244
    %v966 = vunpack.c.h.b16 %v244
    %v967 = vunpack.c.l.b16 %v245
    %v968 = vunpack.c.h.b16 %v245
    %v969 = vunpack.c.l.b16 %v246
    %v970 = vunpack.c.h.b16 %v246
    %v971 = vunpack.c.l.b16 %v247
    %v972 = vunpack.c.h.b16 %v247
    %v973 = vunpack.c.l.b16 %v248
    %v974 = vunpack.c.h.b16 %v248
    %v975 = vunpack.c.l.b16 %v249
    %v976 = vunpack.c.h.b16 %v249
    %v977 = vunpack.c.l.b16 %v250
    %v978 = vunpack.c.h.b16 %v250
    %v979 = vunpack.c.l.b16 %v251
    %v980 = vunpack.c.h.b16 %v251
    %v981 = vunpack.c.l.b16 %v252
    %v982 = vunpack.c.h.b16 %v252
    %v983 = vunpack.c.l.b16 %v253
    %v984 = vunpack.c.h.b16 %v253
    %v985 = vunpack.c.l.b16 %v254
    %v986 = vunpack.c.h.b16 %v254
    %v987 = vunpack.c.l.b16 %v255
    %v988 = vunpack.c.h.b16 %v255
    %v989 = vunpack.c.l.b16 %v256
    %v990 = vunpack.c.h.b16 %v256
    %v991 = vunpack.c.l.b16 %v257
    %v992 = vunpack.c.h.b16 %v257
    %v993 = vunpack.c.l.b16 %v258
    %v994 = vunpack.c.h.b16 %v258
    %v995 = vunpack.c.l.b16 %v259
    %v996 = vunpack.c.h.b16 %v259
    %v997 = vunpack.c.l.b16 %v260
    %v998 = vunpack.c.h.b16 %v260
    %v999 = vunpack.c.l.b16 %v261
    %v1000 = vunpack.c.h.b16 %v261
    %v1001 = vunpack.c.l.b16 %v262
    %v1002 = vunpack.c.h.b16 %v262
    %v1003 = vunpack.c.l.b16 %v263
    %v1004 = vunpack.c.h.b16 %v263
    %v1005 = vunpack.c.l.b16 %v264
    %v1006 = vunpack.c.h.b16 %v264
    %v1007 = vunpack.c.l.b16 %v265
    %v1008 = vunpack.c.h.b16 %v265
    %v1009 = vunpack.c.l.b16 %v266
    %v1010 = vunpack.c.h.b16 %v266
    %v1011 = vunpack.c.l.b16 %v267
    %v1012 = vunpack.c.h.b16 %v267
    %v1013 = vunpack.c.l.b16 %v268
    %v1014 = vunpack.c.h.b16 %v268
    %v1015 = vunpack.c.l.b16 %v269
    %v1016 = vunpack.c.h.b16 %v269
    %v1017 = vunpack.c.l.b16 %v270
    %v1018 = vunpack.c.h.b16 %v270
    %v1019 = vunpack.c.l.b16 %v271
    %v1020 = vunpack.c.h.b16 %v271
    %v1021 = vunpack.c.l.b16 %v272
    %v1022 = vunpack.c.h.b16 %v272
    %v1023 = vunpack.c.l.b16 %v273
    %v1024 = vunpack.c.h.b16 %v273
    %v1025 = vunpack.c.l.b16 %v274
    %v1026 = vunpack.c.h.b16 %v274
    %v1027 = vunpack.c.l.b16 %v275
    %v1028 = vunpack.c.h.b16 %v275
    %v1029 = vunpack.c.l.b16 %v276
    %v1030 = vunpack.c.h.b16 %v276
    %v1031 = vunpack.c.l.b16 %v277
    %v1032 = vunpack.c.h.b16 %v277
    %v1033 = vunpack.c.l.b16 %v278
    %v1034 = vunpack.c.h.b16 %v278
    %v1035 = vunpack.c.l.b16 %v279
    %v1036 = vunpack.c.h.b16 %v279
    %v1037 = vunpack.c.l.b16 %v280
    %v1038 = vunpack.c.h.b16 %v280
    %v1039 = vunpack.c.l.b16 %v281
    %v1040 = vunpack.c.h.b16 %v281
    %v1041 = vunpack.c.l.b16 %v282
    %v1042 = vunpack.c.h.b16 %v282
    %v1043 = vunpack.c.l.b16 %v283
    %v1044 = vunpack.c.h.b16 %v283
    %v1045 = vunpack.c.l.b16 %v284
    %v1046 = vunpack.c.h.b16 %v284
    %v1047 = vunpack.c.l.b16 %v285
    %v1048 = vunpack.c.h.b16 %v285
    %v1049 = vunpack.c.l.b16 %v286
    %v1050 = vunpack.c.h.b16 %v286
    %v1051 = vunpack.c.l.b16 %v287
    %v1052 = vunpack.c.h.b16 %v287
    %v1053 = vunpack.c.l.b16 %v288
    %v1054 = vunpack.c.h.b16 %v288
    %v1055 = vunpack.c.l.b16 %v289
    %v1056 = vunpack.c.h.b16 %v289
    %v1057 = vunpack.c.l.b16 %v290
    %v1058 = vunpack.c.h.b16 %v290
    %v1059 = vunpack.c.l.b16 %v291
    %v1060 = vunpack.c.h.b16 %v291
    %v1061 = vunpack.c.l.b16 %v292
    %v1062 = vunpack.c.h.b16 %v292
    %v1063 = vunpack.c.l.b16 %v293
    %v1064 = vunpack.c.h.b16 %v293
    %v1065 = vunpack.c.l.b16 %v294
    %v1066 = vunpack.c.h.b16 %v294
    %v1067 = vunpack.c.l.b16 %v295
    %v1068 = vunpack.c.h.b16 %v295
    %v1069 = vunpack.c.l.b16 %v296
    %v1070 = vunpack.c.h.b16 %v296
    %v1071 = vunpack.c.l.b16 %v297
    %v1072 = vunpack.c.h.b16 %v297
    %v1073 = vunpack.c.l.b16 %v298
    %v1074 = vunpack.c.h.b16 %v298
    %v1075 = vunpack.c.l.b16 %v299
    %v1076 = vunpack.c.h.b16 %v299
    %v1077 = vunpack.c.l.b16 %v300
    %v1078 = vunpack.c.h.b16 %v300
    %v1079 = vunpack.c.l.b16 %v301
    %v1080 = vunpack.c.h.b16 %v301
    %v1081 = vunpack.c.l.b16 %v302
    %v1082 = vunpack.c.h.b16 %v302
    %v1083 = vunpack.c.l.b16 %v303
    %v1084 = vunpack.c.h.b16 %v303
    %v1085 = vunpack.c.l.b16 %v304
    %v1086 = vunpack.c.h.b16 %v304
    %v1087 = vunpack.c.l.b16 %v305
    %v1088 = vunpack.c.h.b16 %v305
    %v1089 = vunpack.c.l.b16 %v306
    %v1090 = vunpack.c.h.b16 %v306
    %v1091 = vunpack.c.l.b16 %v307
    %v1092 = vunpack.c.h.b16 %v307
    %v1093 = vunpack.c.l.b16 %v308
    %v1094 = vunpack.c.h.b16 %v308
    %v1095 = vunpack.c.l.b16 %v309
    %v1096 = vunpack.c.h.b16 %v309
    %v1097 = vunpack.c.l.b16 %v310
    %v1098 = vunpack.c.h.b16 %v310
    %v1099 = vunpack.c.l.b16 %v311
    %v1100 = vunpack.c.h.b16 %v311
    %v1101 = vunpack.c.l.b16 %v312
    %v1102 = vunpack.c.h.b16 %v312
    %v1103 = vunpack.c.l.b16 %v313
    %v1104 = vunpack.c.h.b16 %v313
    %v1105 = vunpack.c.l.b16 %v314
    %v1106 = vunpack.c.h.b16 %v314
    %v1107 = vunpack.c.l.b16 %v315
    %v1108 = vunpack.c.h.b16 %v315
    %v1109 = vunpack.c.l.b16 %v316
    %v1110 = vunpack.c.h.b16 %v316
    %v1111 = vunpack.c.l.b16 %v317
    %v1112 = vunpack.c.h.b16 %v317
    %v1113 = vunpack.c.l.b16 %v318
    %v1114 = vunpack.c.h.b16 %v318
    %v1115 = vunpack.c.l.b16 %v319
    %v1116 = vunpack.c.h.b16 %v319
    %v1117 = vunpack.c.l.b16 %v320
    %v1118 = vunpack.c.h.b16 %v320
    %v1119 = vunpack.c.l.b16 %v321
    %v1120 = vunpack.c.h.b16 %v321
    %v1121 = vunpack.c.l.b16 %v322
    %v1122 = vunpack.c.h.b16 %v322
    %v1123 = vunpack.c.l.b16 %v323
    %v1124 = vunpack.c.h.b16 %v323
    %v1125 = vunpack.c.l.b16 %v324
    %v1126 = vunpack.c.h.b16 %v324
    %v1127 = vunpack.c.l.b16 %v325
    %v1128 = vunpack.c.h.b16 %v325
    %v1129 = vunpack.c.l.b16 %v326
    %v1130 = vunpack.c.h.b16 %v326
    %v1131 = vunpack.c.l.b16 %v327
    %v1132 = vunpack.c.h.b16 %v327
    %v1133 = vunpack.c.l.b16 %v328
    %v1134 = vunpack.c.h.b16 %v328
    %v1135 = vunpack.c.l.b16 %v329
    %v1136 = vunpack.c.h.b16 %v329
    %v1137 = vunpack.c.l.b16 %v330
    %v1138 = vunpack.c.h.b16 %v330
    %v1139 = vunpack.c.l.b16 %v331
    %v1140 = vunpack.c.h.b16 %v331
    %v1141 = vunpack.c.l.b16 %v332
    %v1142 = vunpack.c.h.b16 %v332
    %v1143 = vunpack.c.l.b16 %v333
    %v1144 = vunpack.c.h.b16 %v333
    %v1145 = vunpack.c.l.b16 %v334
    %v1146 = vunpack.c.h.b16 %v334
    %v1147 = vunpack.c.l.b16 %v335
    %v1148 = vunpack.c.h.b16 %v335
    %v1149 = vunpack.c.l.b16 %v336
    %v1150 = vunpack.c.h.b16 %v336
    %v1151 = vunpack.c.l.b16 %v337
    %v1152 = vunpack.c.h.b16 %v337
    %v1153 = vunpack.c.l.b16 %v338
    %v1154 = vunpack.c.h.b16 %v338
    %v1155 = vunpack.c.l.b16 %v339
    %v1156 = vunpack.c.h.b16 %v339
    %v1157 = vunpack.c.l.b16 %v340
    %v1158 = vunpack.c.h.b16 %v340
    %v1159 = vunpack.c.l.b16 %v341
    %v1160 = vunpack.c.h.b16 %v341
    %v1161 = vunpack.c.l.b16 %v342
    %v1162 = vunpack.c.h.b16 %v342
    %v1163 = vunpack.c.l.b16 %v343
    %v1164 = vunpack.c.h.b16 %v343
    %v1165 = vunpack.c.l.b16 %v344
    %v1166 = vunpack.c.h.b16 %v344
    %v1167 = vunpack.c.l.b16 %v345
    %v1168 = vunpack.c.h.b16 %v345
    %v1169 = vunpack.c.l.b16 %v346
    %v1170 = vunpack.c.h.b16 %v346
    %v1171 = vunpack.c.l.b16 %v347
    %v1172 = vunpack.c.h.b16 %v347
    %v1173 = vunpack.c.l.b16 %v348
    %v1174 = vunpack.c.h.b16 %v348
    %v1175 = vunpack.c.l.b16 %v349
    %v1176 = vunpack.c.h.b16 %v349
    %v1177 = vunpack.c.l.b16 %v350
    %v1178 = vunpack.c.h.b16 %v350
    %v1179 = vunpack.c.l.b16 %v351
    %v1180 = vunpack.c.h.b16 %v351
    %v1181 = vunpack.c.l.b16 %v352
    %v1182 = vunpack.c.h.b16 %v352
    %v1183 = vunpack.c.l.b16 %v353
    %v1184 = vunpack.c.h.b16 %v353
    %v1185 = vunpack.c.l.b16 %v354
    %v1186 = vunpack.c.h.b16 %v354
    %v1187 = vunpack.c.l.b16 %v355
    %v1188 = vunpack.c.h.b16 %v355
    %v1189 = vunpack.c.l.b16 %v356
    %v1190 = vunpack.c.h.b16 %v356
    %v1191 = vunpack.c.l.b16 %v357
    %v1192 = vunpack.c.h.b16 %v357
    %v1193 = vunpack.c.l.b16 %v358
    %v1194 = vunpack.c.h.b16 %v358
    %v1195 = vunpack.c.l.b16 %v359
    %v1196 = vunpack.c.h.b16 %v359
    %v1197 = vunpack.c.l.b16 %v360
    %v1198 = vunpack.c.h.b16 %v360
    %v1199 = vunpack.c.l.b16 %v361
    %v1200 = vunpack.c.h.b16 %v361
    %v1201 = vunpack.c.l.b16 %v362
    %v1202 = vunpack.c.h.b16 %v362
    %v1203 = vunpack.c.l.b16 %v363
    %v1204 = vunpack.c.h.b16 %v363
    %v1205 = vunpack.c.l.b16 %v364
    %v1206 = vunpack.c.h.b16 %v364
    %v1207 = vunpack.c.l.b16 %v365
    %v1208 = vunpack.c.h.b16 %v365
    %v1209 = vunpack.c.l.b16 %v366
    %v1210 = vunpack.c.h.b16 %v366
    %v1211 = vunpack.c.l.b16 %v367
    %v1212 = vunpack.c.h.b16 %v367
    %v1213 = vunpack.c.l.b16 %v368
    %v1214 = vunpack.c.h.b16 %v368
    %v1215 = vunpack.c.l.b16 %v369
    %v1216 = vunpack.c.h.b16 %v369
    %v1217 = vunpack.c.l.b16 %v370
    %v1218 = vunpack.c.h.b16 %v370
    %v1219 = vunpack.c.l.b16 %v371
    %v1220 = vunpack.c.h.b16 %v371
    %v1221 = vunpack.c.l.b16 %v372
    %v1222 = vunpack.c.h.b16 %v372
    %v1223 = vunpack.c.l.b16 %v373
    %v1224 = vunpack.c.h.b16 %v373
    %v1225 = vunpack.c.l.b16 %v374
    %v1226 = vunpack.c.h.b16 %v374
    %v1227 = vunpack.c.l.b16 %v375
    %v1228 = vunpack.c.h.b16 %v375
    %v1229 = vunpack.c.l.b16 %v376
    %v1230 = vunpack.c.h.b16 %v376
    %v1231 = vunpack.c.l.b16 %v377
    %v1232 = vunpack.c.h.b16 %v377
    %v1233 = vunpack.c.l.b16 %v378
    %v1234 = vunpack.c.h.b16 %v378
    %v1235 = vunpack.c.l.b16 %v379
    %v1236 = vunpack.c.h.b16 %v379
    %v1237 = vunpack.c.l.b16 %v380
    %v1238 = vunpack.c.h.b16 %v380
    %v1239 = vunpack.c.l.b16 %v381
    %v1240 = vunpack.c.h.b16 %v381
    %v1241 = vunpack.c.l.b16 %v382
    %v1242 = vunpack.c.h.b16 %v382
    %v1243 = vunpack.c.l.b16 %v383
    %v1244 = vunpack.c.h.b16 %v383
    %v1245 = vunpack.c.l.b16 %v384
    %v1246 = vunpack.c.h.b16 %v384
    %v1247 = vunpack.c.l.b16 %v385
    %v1248 = vunpack.c.h.b16 %v385
    %v1249 = vunpack.c.l.b16 %v386
    %v1250 = vunpack.c.h.b16 %v386
    %v1251 = vunpack.c.l.b16 %v387
    %v1252 = vunpack.c.h.b16 %v387
    %v1253 = vunpack.c.l.b16 %v388
    %v1254 = vunpack.c.h.b16 %v388
    %v1255 = vunpack.c.l.b16 %v389
    %v1256 = vunpack.c.h.b16 %v389
    %v1257 = vunpack.c.l.b16 %v390
    %v1258 = vunpack.c.h.b16 %v390
    %v1259 = vunpack.c.l.b16 %v391
    %v1260 = vunpack.c.h.b16 %v391
    %v1261 = vunpack.c.l.b16 %v392
    %v1262 = vunpack.c.h.b16 %v392
    %v1263 = vunpack.c.l.b16 %v393
    %v1264 = vunpack.c.h.b16 %v393
    %v1265 = vunpack.c.l.b16 %v394
    %v1266 = vunpack.c.h.b16 %v394
    %v1267 = vunpack.c.l.b16 %v395
    %v1268 = vunpack.c.h.b16 %v395
    %v1269 = vunpack.c.l.b16 %v396
    %v1270 = vunpack.c.h.b16 %v396
    %v1271 = vunpack.c.l.b16 %v397
    %v1272 = vunpack.c.h.b16 %v397
    %v1273 = vunpack.c.l.b16 %v398
    %v1274 = vunpack.c.h.b16 %v398
    %v1275 = vunpack.c.l.b16 %v399
    %v1276 = vunpack.c.h.b16 %v399
    %v1277 = vunpack.c.l.b16 %v400
    %v1278 = vunpack.c.h.b16 %v400
    %v1279 = vunpack.c.l.b16 %v401
    %v1280 = vunpack.c.h.b16 %v401
    %v1281 = vunpack.c.l.b16 %v402
    %v1282 = vunpack.c.h.b16 %v402
    %v1283 = vunpack.c.l.b16 %v403
    %v1284 = vunpack.c.h.b16 %v403
    %v1285 = vunpack.c.l.b16 %v404
    %v1286 = vunpack.c.h.b16 %v404
    %v1287 = vunpack.c.l.b16 %v405
    %v1288 = vunpack.c.h.b16 %v405
    %v1289 = vunpack.c.l.b16 %v406
    %v1290 = vunpack.c.h.b16 %v406
    %v1291 = vunpack.c.l.b16 %v407
    %v1292 = vunpack.c.h.b16 %v407
    %v1293 = vunpack.c.l.b16 %v408
    %v1294 = vunpack.c.h.b16 %v408
    %v1295 = vunpack.c.l.b16 %v409
    %v1296 = vunpack.c.h.b16 %v409
    %v1297 = vunpack.c.l.b16 %v410
    %v1298 = vunpack.c.h.b16 %v410
    %v1299 = vunpack.c.l.b16 %v411
    %v1300 = vunpack.c.h.b16 %v411
    %v1301 = vunpack.c.l.b16 %v412
    %v1302 = vunpack.c.h.b16 %v412
    %v1303 = vunpack.c.l.b16 %v413
    %v1304 = vunpack.c.h.b16 %v413
    %v1305 = vunpack.c.l.b16 %v414
    %v1306 = vunpack.c.h.b16 %v414
    %v1307 = vunpack.c.l.b16 %v415
    %v1308 = vunpack.c.h.b16 %v415
    %v1309 = vunpack.c.l.b16 %v416
    %v1310 = vunpack.c.h.b16 %v416
    %v1311 = vunpack.c.l.b16 %v417
    %v1312 = vunpack.c.h.b16 %v417
    %v1313 = vunpack.c.l.b16 %v418
    %v1314 = vunpack.c.h.b16 %v418
    %v1315 = vunpack.c.l.b16 %v419
    %v1316 = vunpack.c.h.b16 %v419
    %v1317 = vunpack.c.l.b16 %v420
    %v1318 = vunpack.c.h.b16 %v420
    %v1319 = vunpack.c.l.b16 %v421
    %v1320 = vunpack.c.h.b16 %v421
    %v1321 = vunpack.c.l.b16 %v422
    %v1322 = vunpack.c.h.b16 %v422
    %v1323 = vunpack.c.l.b16 %v423
    %v1324 = vunpack.c.h.b16 %v423
    %v1325 = vunpack.c.l.b16 %v424
    %v1326 = vunpack.c.h.b16 %v424
    %v1327 = vunpack.c.l.b16 %v425
    %v1328 = vunpack.c.h.b16 %v425
    %v1329 = vunpack.c.l.b16 %v426
    %v1330 = vunpack.c.h.b16 %v426
    %v1331 = vunpack.c.l.b16 %v427
    %v1332 = vunpack.c.h.b16 %v427
    %v1333 = vunpack.c.l.b16 %v428
    %v1334 = vunpack.c.h.b16 %v428
    %v1335 = vunpack.c.l.b16 %v429
    %v1336 = vunpack.c.h.b16 %v429
    %v1337 = vunpack.c.l.b16 %v430
    %v1338 = vunpack.c.h.b16 %v430
    %v1339 = vunpack.c.l.b16 %v431
    %v1340 = vunpack.c.h.b16 %v431
    %v1341 = vunpack.c.l.b16 %v432
    %v1342 = vunpack.c.h.b16 %v432
    %v1343 = vunpack.c.l.b16 %v433
    %v1344 = vunpack.c.h.b16 %v433
    %v1345 = vunpack.c.l.b16 %v434
    %v1346 = vunpack.c.h.b16 %v434
    %v1347 = vunpack.c.l.b16 %v435
    %v1348 = vunpack.c.h.b16 %v435
    %v1349 = vunpack.c.l.b16 %v436
    %v1350 = vunpack.c.h.b16 %v436
    %v1351 = vunpack.c.l.b16 %v437
    %v1352 = vunpack.c.h.b16 %v437
    %v1353 = vunpack.c.l.b16 %v438
    %v1354 = vunpack.c.h.b16 %v438
    %v1355 = vunpack.c.l.b16 %v439
    %v1356 = vunpack.c.h.b16 %v439
    %v1357 = vunpack.c.l.b16 %v440
    %v1358 = vunpack.c.h.b16 %v440
    %v1359 = vunpack.c.l.b16 %v441
    %v1360 = vunpack.c.h.b16 %v441
    %v1361 = vunpack.c.l.b16 %v442
    %v1362 = vunpack.c.h.b16 %v442
    %v1363 = vunpack.c.l.b16 %v443
    %v1364 = vunpack.c.h.b16 %v443
    %v1365 = vunpack.c.l.b16 %v444
    %v1366 = vunpack.c.h.b16 %v444
    %v1367 = vunpack.c.l.b16 %v445
    %v1368 = vunpack.c.h.b16 %v445
    %v1369 = vunpack.c.l.b16 %v446
    %v1370 = vunpack.c.h.b16 %v446
    %v1371 = vunpack.c.l.b16 %v447
    %v1372 = vunpack.c.h.b16 %v447
    %v1373 = vunpack.c.l.b16 %v448
    %v1374 = vunpack.c.h.b16 %v448
    %v1375 = vunpack.c.l.b16 %v449
    %v1376 = vunpack.c.h.b16 %v449
    %v1377 = vunpack.c.l.b16 %v450
    %v1378 = vunpack.c.h.b16 %v450
    %v1379 = vunpack.c.l.b16 %v451
    %v1380 = vunpack.c.h.b16 %v451
    %v1381 = vunpack.c.l.b16 %v452
    %v1382 = vunpack.c.h.b16 %v452
    %v1383 = vunpack.c.l.b16 %v453
    %v1384 = vunpack.c.h.b16 %v453
    %v1385 = vunpack.c.l.b16 %v454
    %v1386 = vunpack.c.h.b16 %v454
    %v1387 = vunpack.c.l.b16 %v455
    %v1388 = vunpack.c.h.b16 %v455
    %v1389 = vunpack.c.l.b16 %v456
    %v1390 = vunpack.c.h.b16 %v456
    %v1391 = vunpack.c.l.b16 %v457
    %v1392 = vunpack.c.h.b16 %v457
    %v1393 = vunpack.c.l.b16 %v458
    %v1394 = vunpack.c.h.b16 %v458
    %v1395 = vunpack.c.l.b16 %v459
    %v1396 = vunpack.c.h.b16 %v459
    %v1397 = vunpack.c.l.b16 %v460
    %v1398 = vunpack.c.h.b16 %v460
    %v1399 = vunpack.c.l.b16 %v461
    %v1400 = vunpack.c.h.b16 %v461
    %v1401 = vunpack.c.l.b16 %v462
    %v1402 = vunpack.c.h.b16 %v462
    %v1403 = vunpack.c.l.b16 %v463
    %v1404 = vunpack.c.h.b16 %v463
    %v1405 = vunpack.c.l.b16 %v464
    %v1406 = vunpack.c.h.b16 %v464
    %v1407 = vunpack.c.l.b16 %v465
    %v1408 = vunpack.c.h.b16 %v465
    %v1409 = vunpack.c.l.b16 %v466
    %v1410 = vunpack.c.h.b16 %v466
    %v1411 = vunpack.c.l.b16 %v467
    %v1412 = vunpack.c.h.b16 %v467
    %v1413 = vunpack.c.l.b16 %v468
    %v1414 = vunpack.c.h.b16 %v468
    %v1415 = vunpack.c.l.b16 %v469
    %v1416 = vunpack.c.h.b16 %v469
    %v1417 = vunpack.c.l.b16 %v470
    %v1418 = vunpack.c.h.b16 %v470
    %v1419 = vunpack.c.l.b16 %v471
    %v1420 = vunpack.c.h.b16 %v471
    %v1421 = vunpack.c.l.b16 %v472
    %v1422 = vunpack.c.h.b16 %v472
    %v1423 = vunpack.c.l.b16 %v473
    %v1424 = vunpack.c.h.b16 %v473
    %v1425 = vunpack.c.l.b16 %v474
    %v1426 = vunpack.c.h.b16 %v474
    %v1427 = vunpack.c.l.b16 %v475
    %v1428 = vunpack.c.h.b16 %v475
    %v1429 = vunpack.c.l.b16 %v476
    %v1430 = vunpack.c.h.b16 %v476
    %v1431 = vunpack.c.l.b16 %v477
    %v1432 = vunpack.c.h.b16 %v477
    %v1433 = vunpack.c.l.b16 %v478
    %v1434 = vunpack.c.h.b16 %v478
    %v1435 = vunpack.c.l.b16 %v479
    %v1436 = vunpack.c.h.b16 %v479
    %v1437 = vunpack.c.l.b16 %v480
    %v1438 = vunpack.c.h.b16 %v480
    %v1439 = vunpack.c.l.b16 %v481
    %v1440 = vunpack.c.h.b16 %v481
    %v1441 = vunpack.c.l.b16 %v482
    %v1442 = vunpack.c.h.b16 %v482
    %v1443 = vunpack.c.l.b16 %v483
    %v1444 = vunpack.c.h.b16 %v483
    %v1445 = vunpack.c.l.b16 %v484
    %v1446 = vunpack.c.h.b16 %v484
    %v1447 = vunpack.c.l.b16 %v485
    %v1448 = vunpack.c.h.b16 %v485
    %v1449 = vunpack.c.l.b16 %v486
    %v1450 = vunpack.c.h.b16 %v486
    %v1451 = vunpack.c.l.b16 %v487
    %v1452 = vunpack.c.h.b16 %v487
    %v1453 = vunpack.c.l.b16 %v488
    %v1454 = vunpack.c.h.b16 %v488
    %v1455 = vunpack.c.l.b16 %v489
    %v1456 = vunpack.c.h.b16 %v489
    %v1457 = vunpack.c.l.b16 %v490
    %v1458 = vunpack.c.h.b16 %v490
    %v1459 = vunpack.c.l.b16 %v491
    %v1460 = vunpack.c.h.b16 %v491
    %v1461 = vunpack.c.l.b16 %v492
    %v1462 = vunpack.c.h.b16 %v492
    %v1463 = vunpack.c.l.b16 %v493
    %v1464 = vunpack.c.h.b16 %v493
    %v1465 = vunpack.c.l.b16 %v494
    %v1466 = vunpack.c.h.b16 %v494
    %v1467 = vunpack.c.l.b16 %v495
    %v1468 = vunpack.c.h.b16 %v495
    %v1469 = vunpack.c.l.b16 %v496
    %v1470 = vunpack.c.h.b16 %v496
    %v1471 = vunpack.c.l.b16 %v497
    %v1472 = vunpack.c.h.b16 %v497
    %v1473 = vunpack.c.l.b16 %v498
    %v1474 = vunpack.c.h.b16 %v498
    %v1475 = vunpack.c.l.b16 %v499
    %v1476 = vunpack.c.h.b16 %v499
    %v1477 = vunpack.c.l.b16 %v500
    %v1478 = vunpack.c.h.b16 %v500
    %v1479 = vunpack.c.l.b16 %v501
    %v1480 = vunpack.c.h.b16 %v501
    %v1481 = vunpack.c.l.b16 %v502
    %v1482 = vunpack.c.h.b16 %v502
    %v1483 = vunpack.c.l.b16 %v503
    %v1484 = vunpack.c.h.b16 %v503
    %v1485 = vunpack.c.l.b16 %v504
    %v1486 = vunpack.c.h.b16 %v504
    %v1487 = vunpack.c.l.b16 %v505
    %v1488 = vunpack.c.h.b16 %v505
    %v1489 = vunpack.c.l.b16 %v506
    %v1490 = vunpack.c.h.b16 %v506
    %v1491 = vunpack.c.l.b16 %v507
    %v1492 = vunpack.c.h.b16 %v507
    %v1493 = vunpack.c.l.b16 %v508
    %v1494 = vunpack.c.h.b16 %v508
    %v1495 = vunpack.c.l.b16 %v509
    %v1496 = vunpack.c.h.b16 %v509
    %v1497 = vunpack.c.l.b16 %v510
    %v1498 = vunpack.c.h.b16 %v510
    %v1499 = vunpack.c.l.b16 %v511
    %v1500 = vunpack.c.h.b16 %v511
    %v1501 = vunpack.c.l.b16 %v512
    %v1502 = vunpack.c.h.b16 %v512
    %v1503 = vunpack.c.l.b16 %v513
    %v1504 = vunpack.c.h.b16 %v513
    %v1505 = vunpack.c.l.b16 %v514
    %v1506 = vunpack.c.h.b16 %v514
    %v1507 = vunpack.c.l.b16 %v515
    %v1508 = vunpack.c.h.b16 %v515
    %v1509 = vunpack.c.l.b16 %v516
    %v1510 = vunpack.c.h.b16 %v516
    %v1511 = vunpack.c.l.b16 %v517
    %v1512 = vunpack.c.h.b16 %v517
    %v1513 = vunpack.c.l.b16 %v518
    %v1514 = vunpack.c.h.b16 %v518
    %v1515 = vunpack.c.l.b16 %v519
    %v1516 = vunpack.c.h.b16 %v519
    %v1517 = vunpack.c.l.b16 %v520
    %v1518 = vunpack.c.h.b16 %v520
    %v1519 = vunpack.c.l.b16 %v521
    %v1520 = vunpack.c.h.b16 %v521
    %v1521 = vunpack.c.l.b16 %v522
    %v1522 = vunpack.c.h.b16 %v522
    %v1523 = vunpack.c.l.b16 %v523
    %v1524 = vunpack.c.h.b16 %v523
    %v1525 = vunpack.c.l.b16 %v524
    %v1526 = vunpack.c.h.b16 %v524
    %v1527 = vunpack.c.l.b16 %v525
    %v1528 = vunpack.c.h.b16 %v525
    %v1529 = vunpack.c.l.b16 %v526
    %v1530 = vunpack.c.h.b16 %v526
    %v1531 = vunpack.c.l.b16 %v527
    %v1532 = vunpack.c.h.b16 %v527
    %v1533 = vunpack.c.l.b16 %v528
    %v1534 = vunpack.c.h.b16 %v528
    %v1535 = vunpack.c.l.b16 %v529
    %v1536 = vunpack.c.h.b16 %v529
    %v1537 = vunpack.c.l.b16 %v530
    %v1538 = vunpack.c.h.b16 %v530
    %v1539 = vunpack.c.l.b16 %v531
    %v1540 = vunpack.c.h.b16 %v531
    %v1541 = vunpack.c.l.b16 %v532
    %v1542 = vunpack.c.h.b16 %v532
    %v1543 = vunpack.c.l.b16 %v533
    %v1544 = vunpack.c.h.b16 %v533
    %v1545 = vunpack.c.l.b16 %v534
    %v1546 = vunpack.c.h.b16 %v534
    %v1547 = vunpack.c.l.b16 %v535
    %v1548 = vunpack.c.h.b16 %v535
    %v1549 = vunpack.c.l.b16 %v536
    %v1550 = vunpack.c.h.b16 %v536
    %v1551 = vunpack.c.l.b16 %v537
    %v1552 = vunpack.c.h.b16 %v537
    %v1553 = vunpack.c.l.b16 %v538
    %v1554 = vunpack.c.h.b16 %v538
    %v1555 = vunpack.c.l.b16 %v539
    %v1556 = vunpack.c.h.b16 %v539
    %v1557 = vunpack.c.l.b16 %v540
    %v1558 = vunpack.c.h.b16 %v540
    %v1559 = vunpack.c.l.b16 %v541
    %v1560 = vunpack.c.h.b16 %v541
    %v1561 = vunpack.c.l.b16 %v542
    %v1562 = vunpack.c.h.b16 %v542
    %v1563 = vunpack.c.l.b16 %v543
    %v1564 = vunpack.c.h.b16 %v543
    %v1565 = vunpack.c.l.b16 %v544
    %v1566 = vunpack.c.h.b16 %v544
    %v1567 = vunpack.c.l.b16 %v545
    %v1568 = vunpack.c.h.b16 %v545
    %v1569 = vunpack.c.l.b16 %v546
    %v1570 = vunpack.c.h.b16 %v546
    %v1571 = vunpack.c.l.b16 %v547
    %v1572 = vunpack.c.h.b16 %v547
    %v1573 = vunpack.c.l.b16 %v548
    %v1574 = vunpack.c.h.b16 %v548
    %v1575 = vunpack.c.l.b16 %v549
    %v1576 = vunpack.c.h.b16 %v549
    %v1577 = vunpack.c.l.b16 %v550
    %v1578 = vunpack.c.h.b16 %v550
    %v1579 = vunpack.c.l.b16 %v551
    %v1580 = vunpack.c.h.b16 %v551
    %v1581 = vunpack.c.l.b16 %v552
    %v1582 = vunpack.c.h.b16 %v552
    %v1583 = vunpack.c.l.b16 %v553
    %v1584 = vunpack.c.h.b16 %v553
    %v1585 = vunpack.c.l.b16 %v554
    %v1586 = vunpack.c.h.b16 %v554
    %v1587 = vunpack.c.l.b16 %v555
    %v1588 = vunpack.c.h.b16 %v555
    %v1589 = vunpack.c.l.b16 %v556
    %v1590 = vunpack.c.h.b16 %v556
    %v1591 = vunpack.c.l.b16 %v557
    %v1592 = vunpack.c.h.b16 %v557
    %v1593 = vunpack.c.l.b16 %v558
    %v1594 = vunpack.c.h.b16 %v558
    %v1595 = vunpack.c.l.b16 %v559
    %v1596 = vunpack.c.h.b16 %v559
    %v1597 = vunpack.c.l.b16 %v560
    %v1598 = vunpack.c.h.b16 %v560
    %v1599 = vunpack.c.l.b16 %v561
    %v1600 = vunpack.c.h.b16 %v561
    %v1601 = vunpack.c.l.b16 %v562
    %v1602 = vunpack.c.h.b16 %v562
    %v1603 = vunpack.c.l.b16 %v563
    %v1604 = vunpack.c.h.b16 %v563
    %v1605 = vunpack.c.l.b16 %v564
    %v1606 = vunpack.c.h.b16 %v564
    %v1607 = vunpack.c.l.b16 %v565
    %v1608 = vunpack.c.h.b16 %v565
    %v1609 = vunpack.c.l.b16 %v566
    %v1610 = vunpack.c.h.b16 %v566
    %v1611 = vunpack.c.l.b16 %v567
    %v1612 = vunpack.c.h.b16 %v567
    %v1613 = vunpack.c.l.b16 %v568
    %v1614 = vunpack.c.h.b16 %v568
    %v1615 = vunpack.c.l.b16 %v569
    %v1616 = vunpack.c.h.b16 %v569
    %v1617 = vpack.c.b16 %v951, %v945
    %v1618 = vpack.c.b16 %v952, %v946
    %v1619 = vpack.c.b16 %v953, %v947
    %v1620 = vpack.c.b16 %v954, %v948
    %v1621 = vpack.c.b16 %v955, %v949
    %v1622 = vpack.c.b16 %v956, %v950
    %v1623 = vpack.c.b16 %v963, %v957
    %v1624 = vpack.c.b16 %v964, %v958
    %v1625 = vpack.c.b16 %v965, %v959
    %v1626 = vpack.c.b16 %v966, %v960
    %v1627 = vpack.c.b16 %v967, %v961
    %v1628 = vpack.c.b16 %v968, %v962
    %v1629 = vpack.c.b16 %v975, %v969
    %v1630 = vpack.c.b16 %v976, %v970
    %v1631 = vpack.c.b16 %v977, %v971
    %v1632 = vpack.c.b16 %v978, %v972
    %v1633 = vpack.c.b16 %v979, %v973
    %v1634 = vpack.c.b16 %v980, %v974
    %v1635 = vpack.c.b16 %v987, %v981
    %v1636 = vpack.c.b16 %v988, %v982
    %v1637 = vpack.c.b16 %v989, %v983
    %v1638 = vpack.c.b16 %v990, %v984
    %v1639 = vpack.c.b16 %v991, %v985
    %v1640 = vpack.c.b16 %v992, %v986
    %v1641 = vpack.c.b16 %v999, %v993
    %v1642 = vpack.c.b16 %v1000, %v994
    %v1643 = vpack.c.b16 %v1001, %v995
    %v1644 = vpack.c.b16 %v1002, %v996
    %v1645 = vpack.c.b16 %v1003, %v997
    %v1646 = vpack.c.b16 %v1004, %v998
    %v1647 = vpack.c.b16 %v1011, %v1005
    %v1648 = vpack.c.b16 %v1012, %v1006
    %v1649 = vpack.c.b16 %v1013, %v1007
    %v1650 = vpack.c.b16 %v1014, %v1008
    %v1651 = vpack.c.b16 %v1015, %v1009
    %v1652 = vpack.c.b16 %v1016, %v1010
    %v1653 = vpack.c.b16 %v1023, %v1017
    %v1654 = vpack.c.b16 %v1024, %v1018
    %v1655 = vpack.c.b16 %v1025, %v1019
    %v1656 = vpack.c.b16 %v1026, %v1020
    %v1657 = vpack.c.b16 %v1027, %v1021
    %v1658 = vpack.c.b16 %v1028, %v1022
    %v1659 = vpack.c.b16 %v1035, %v1029
    %v1660 = vpack.c.b16 %v1036, %v1030
    %v1661 = vpack.c.b16 %v1037, %v1031
    %v1662 = vpack.c.b16 %v1038, %v1032
    %v1663 = vpack.c.b16 %v1039, %v1033
    %v1664 = vpack.c.b16 %v1040, %v1034
    %v1665 = vpack.c.b16 %v1047, %v1041
    %v1666 = vpack.c.b16 %v1048, %v1042
    %v1667 = vpack.c.b16 %v1049, %v1043
    %v1668 = vpack.c.b16 %v1050, %v1044
    %v1669 = vpack.c.b16 %v1051, %v1045
    %v1670 = vpack.c.b16 %v1052, %v1046
    %v1671 = vpack.c.b16 %v1059, %v1053
    %v1672 = vpack.c.b16 %v1060, %v1054
    %v1673 = vpack.c.b16 %v1061, %v1055
    %v1674 = vpack.c.b16 %v1062, %v1056
    %v1675 = vpack.c.b16 %v1063, %v1057
    %v1676 = vpack.c.b16 %v1064, %v1058
    %v1677 = vpack.c.b16 %v1071, %v1065
    %v1678 = vpack.c.b16 %v1072, %v1066
    %v1679 = vpack.c.b16 %v1073, %v1067
    %v1680 = vpack.c.b16 %v1074, %v1068
    %v1681 = vpack.c.b16 %v1075, %v1069
    %v1682 = vpack.c.b16 %v1076, %v1070
    %v1683 = vpack.c.b16 %v1083, %v1077
    %v1684 = vpack.c.b16 %v1084, %v1078
    %v1685 = vpack.c.b16 %v1085, %v1079
    %v1686 = vpack.c.b16 %v1086, %v1080
    %v1687 = vpack.c.b16 %v1087, %v1081
    %v1688 = vpack.c.b16 %v1088, %v1082
    %v1689 = vpack.c.b16 %v1095, %v1089
    %v1690 = vpack.c.b16 %v1096, %v1090
    %v1691 = vpack.c.b16 %v1097, %v1091
    %v1692 = vpack.c.b16 %v1098, %v1092
    %v1693 = vpack.c.b16 %v1099, %v1093
    %v1694 = vpack.c.b16 %v1100, %v1094
    %v1695 = vpack.c.b16 %v1107, %v1101
    %v1696 = vpack.c.b16 %v1108, %v1102
    %v1697 = vpack.c.b16 %v1109, %v1103
    %v1698 = vpack.c.b16 %v1110, %v1104
    %v1699 = vpack.c.b16 %v1111, %v1105
    %v1700 = vpack.c.b16 %v1112, %v1106
    %v1701 = vpack.c.b16 %v1119, %v1113
    %v1702 = vpack.c.b16 %v1120, %v1114
    %v1703 = vpack.c.b16 %v1121, %v1115
    %v1704 = vpack.c.b16 %v1122, %v1116
    %v1705 = vpack.c.b16 %v1123, %v1117
    %v1706 = vpack.c.b16 %v1124, %v1118
    %v1707 = vpack.c.b16 %v1131, %v1125
    %v1708 = vpack.c.b16 %v1132, %v1126
    %v1709 = vpack.c.b16 %v1133, %v1127
    %v1710 = vpack.c.b16 %v1134, %v1128
    %v1711 = vpack.c.b16 %v1135, %v1129
    %v1712 = vpack.c.b16 %v1136, %v1130
    %v1713 = vpack.c.b16 %v1143, %v1137
    %v1714 = vpack.c.b16 %v1144, %v1138
    %v1715 = vpack.c.b16 %v1145, %v1139
    %v1716 = vpack.c.b16 %v1146, %v1140
    %v1717 = vpack.c.b16 %v1147, %v1141
    %v1718 = vpack.c.b16 %v1148, %v1142
    %v1719 = vpack.c.b16 %v1155, %v1149
    %v1720 = vpack.c.b16 %v1156, %v1150
    %v1721 = vpack.c.b16 %v1157, %v1151
    %v1722 = vpack.c.b16 %v1158, %v1152
    %v1723 = vpack.c.b16 %v1159, %v1153
    %v1724 = vpack.c.b16 %v1160, %v1154
    %v1725 = vpack.c.b16 %v1167, %v1161
    %v1726 = vpack.c.b16 %v1168, %v1162
    %v1727 = vpack.c.b16 %v1169, %v1163
    %v1728 = vpack.c.b16 %v1170, %v1164
    %v1729 = vpack.c.b16 %v1171, %v1165
    %v1730 = vpack.c.b16 %v1172, %v1166
    %v1731 = vpack.c.b16 %v1179, %v1173
    %v1732 = vpack.c.b16 %v1180, %v1174
    %v1733 = vpack.c.b16 %v1181, %v1175
    %v1734 = vpack.c.b16 %v1182, %v1176
    %v1735 = vpack.c.b16 %v1183, %v1177
    %v1736 = vpack.c.b16 %v1184, %v1178
    %v1737 = vpack.c.b16 %v1191, %v1185
    %v1738 = vpack.c.b16 %v1192, %v1186
    %v1739 = vpack.c.b16 %v1193, %v1187
    %v1740 = vpack.c.b16 %v1194, %v1188
    %v1741 = vpack.c.b16 %v1195, %v1189
    %v1742 = vpack.c.b16 %v1196, %v1190
    %v1743 = vpack.c.b16 %v1203, %v1197
    %v1744 = vpack.c.b16 %v1204, %v1198
    %v1745 = vpack.c.b16 %v1205, %v1199
    %v1746 = vpack.c.b16 %v1206, %v1200
    %v1747 = vpack.c.b16 %v1207, %v1201
    %v1748 = vpack.c.b16 %v1208, %v1202
    %v1749 = vpack.c.b16 %v1215, %v1209
    %v1750 = vpack.c.b16 %v1216, %v1210
    %v1751 = vpack.c.b16 %v1217, %v1211
    %v1752 = vpack.c.b16 %v1218, %v1212
    %v1753 = vpack.c.b16 %v1219, %v1213
    %v1754 = vpack.c.b16 %v1220, %v1214
    %v1755 = vpack.c.b16 %v1227, %v1221
    %v1756 = vpack.c.b16 %v1228, %v1222
    %v1757 = vpack.c.b16 %v1229, %v1223
    %v1758 = vpack.c.b16 %v1230, %v1224
    %v1759 = vpack.c.b16 %v1231, %v1225
    %v1760 = vpack.c.b16 %v1232, %v1226
    %v1761 = vpack.c.b16 %v1239, %v1233
    %v1762 = vpack.c.b16 %v1240, %v1234
    %v1763 = vpack.c.b16 %v1241, %v1235
    %v1764 = vpack.c.b16 %v1242, %v1236
    %v1765 = vpack.c.b16 %v1243, %v1237
    %v1766 = vpack.c.b16 %v1244, %v1238
    %v1767 = vpack.c.b16 %v1251, %v1245
    %v1768 = vpack.c.b16 %v1252, %v1246
    %v1769 = vpack.c.b16 %v1253, %v1247
    %v1770 = vpack.c.b16 %v1254, %v1248
    %v1771 = vpack.c.b16 %v1255, %v1249
    %v1772 = vpack.c.b16 %v1256, %v1250
    %v1773 = vpack.c.b16 %v1263, %v1257
    %v1774 = vpack.c.b16 %v1264, %v1258
    %v1775 = vpack.c.b16 %v1265, %v1259
    %v1776 = vpack.c.b16 %v1266, %v1260
    %v1777 = vpack.c.b16 %v1267, %v1261
    %v1778 = vpack.c.b16 %v1268, %v1262
    %v1779 = vpack.c.b16 %v1275, %v1269
    %v1780 = vpack.c.b16 %v1276, %v1270
    %v1781 = vpack.c.b16 %v1277, %v1271
    %v1782 = vpack.c.b16 %v1278, %v1272
    %v1783 = vpack.c.b16 %v1279, %v1273
    %v1784 = vpack.c.b16 %v1280, %v1274
    %v1785 = vpack.c.b16 %v1287, %v1281
    %v1786 = vpack.c.b16 %v1288, %v1282
    %v1787 = vpack.c.b16 %v1289, %v1283
    %v1788 = vpack.c.b16 %v1290, %v1284
    %v1789 = vpack.c.b16 %v1291, %v1285
    %v1790 = vpack.c.b16 %v1292, %v1286
    %v1791 = vpack.c.b16 %v1299, %v1293
    %v1792 = vpack.c.b16 %v1300, %v1294
    %v1793 = vpack.c.b16 %v1301, %v1295
    %v1794 = vpack.c.b16 %v1302, %v1296
    %v1795 = vpack.c.b16 %v1303, %v1297
    %v1796 = vpack.c.b16 %v1304, %v1298
    %v1797 = vpack.c.b16 %v1311, %v1305
    %v1798 = vpack.c.b16 %v1312, %v1306
    %v1799 = vpack.c.b16 %v1313, %v1307
    %v1800 = vpack.c.b16 %v1314, %v1308
    %v1801 = vpack.c.b16 %v1315, %v1309
    %v1802 = vpack.c.b16 %v1316, %v1310
    %v1803 = vpack.c.b16 %v1323, %v1317
    %v1804 = vpack.c.b16 %v1324, %v1318
    %v1805 = vpack.c.b16 %v1325, %v1319
    %v1806 = vpack.c.b16 %v1326, %v1320
    %v1807 = vpack.c.b16 %v1327, %v1321
    %v1808 = vpack.c.b16 %v1328, %v1322
    %v1809 = vpack.c.b16 %v1335, %v1329
    %v1810 = vpack.c.b16 %v1336, %v1330
    %v1811 = vpack.c.b16 %v1337, %v1331
    %v1812 = vpack.c.b16 %v1338, %v1332
    %v1813 = vpack.c.b16 %v1339, %v1333
    %v1814 = vpack.c.b16 %v1340, %v1334
    %v1815 = vpack.c.b16 %v1347, %v1341
    %v1816 = vpack.c.b16 %v1348, %v1342
    %v1817 = vpack.c.b16 %v1349, %v1343
    %v1818 = vpack.c.b16 %v1350, %v1344
    %v1819 = vpack.c.b16 %v1351, %v1345
    %v1820 = vpack.c.b16 %v1352, %v1346
    %v1821 = vpack.c.b16 %v1359, %v1353
    %v1822 = vpack.c.b16 %v1360, %v1354
    %v1823 = vpack.c.b16 %v1361, %v1355
    %v1824 = vpack.c.b16 %v1362, %v1356
    %v1825 = vpack.c.b16 %v1363, %v1357
    %v1826 = vpack.c.b16 %v1364, %v1358
    %v1827 = vpack.c.b16 %v1371, %v1365
    %v1828 = vpack.c.b16 %v1372, %v1366
    %v1829 = vpack.c.b16 %v1373, %v1367
    %v1830 = vpack.c.b16 %v1374, %v1368
    %v1831 = vpack.c.b16 %v1375, %v1369
    %v1832 = vpack.c.b16 %v1376, %v1370
    %v1833 = vpack.c.b16 %v1383, %v1377
    %v1834 = vpack.c.b16 %v1384, %v1378
    %v1835 = vpack.c.b16 %v1385, %v1379
    %v1836 = vpack.c.b16 %v1386, %v1380
    %v1837 = vpack.c.b16 %v1387, %v1381
    %v1838 = vpack.c.b16 %v1388, %v1382
    %v1839 = vpack.c.b16 %v1395, %v1389
    %v1840 = vpack.c.b16 %v1396, %v1390
    %v1841 = vpack.c.b16 %v1397, %v1391
    %v1842 = vpack.c.b16 %v1398, %v1392
    %v1843 = vpack.c.b16 %v1399, %v1393
    %v1844 = vpack.c.b16 %v1400, %v1394
    %v1845 = vpack.c.b16 %v1407, %v1401
    %v1846 = vpack.c.b16 %v1408, %v1402
    %v1847 = vpack.c.b16 %v1409, %v1403
    %v1848 = vpack.c.b16 %v1410, %v1404
    %v1849 = vpack.c.b16 %v1411, %v1405
    %v1850 = vpack.c.b16 %v1412, %v1406
    %v1851 = vpack.c.b16 %v1419, %v1413
    %v1852 = vpack.c.b16 %v1420, %v1414
    %v1853 = vpack.c.b16 %v1421, %v1415
    %v1854 = vpack.c.b16 %v1422, %v1416
    %v1855 = vpack.c.b16 %v1423, %v1417
    %v1856 = vpack.c.b16 %v1424, %v1418
    %v1857 = vpack.c.b16 %v1431, %v1425
    %v1858 = vpack.c.b16 %v1432, %v1426
    %v1859 = vpack.c.b16 %v1433, %v1427
    %v1860 = vpack.c.b16 %v1434, %v1428
    %v1861 = vpack.c.b16 %v1435, %v1429
    %v1862 = vpack.c.b16 %v1436, %v1430
    %v1863 = vpack.c.b16 %v1443, %v1437
    %v1864 = vpack.c.b16 %v1444, %v1438
    %v1865 = vpack.c.b16 %v1445, %v1439
    %v1866 = vpack.c.b16 %v1446, %v1440
    %v1867 = vpack.c.b16 %v1447, %v1441
    %v1868 = vpack.c.b16 %v1448, %v1442
    %v1869 = vpack.c.b16 %v1455, %v1449
    %v1870 = vpack.c.b16 %v1456, %v1450
    %v1871 = vpack.c.b16 %v1457, %v1451
    %v1872 = vpack.c.b16 %v1458, %v1452
    %v1873 = vpack.c.b16 %v1459, %v1453
    %v1874 = vpack.c.b16 %v1460, %v1454
    %v1875 = vpack.c.b16 %v1467, %v1461
    %v1876 = vpack.c.b16 %v1468, %v1462
    %v1877 = vpack.c.b16 %v1469, %v1463
    %v1878 = vpack.c.b16 %v1470, %v1464
    %v1879 = vpack.c.b16 %v1471, %v1465
    %v1880 = vpack.c.b16 %v1472, %v1466
    %v1881 = vpack.c.b16 %v1479, %v1473
    %v1882 = vpack.c.b16 %v1480, %v1474
    %v1883 = vpack.c.b16 %v1481, %v1475
    %v1884 = vpack.c.b16 %v1482, %v1476
    %v1885 = vpack.c.b16 %v1483, %v1477
    %v1886 = vpack.c.b16 %v1484, %v1478
    %v1887 = vpack.c.b16 %v1491, %v1485
    %v1888 = vpack.c.b16 %v1492, %v1486
    %v1889 = vpack.c.b16 %v1493, %v1487
    %v1890 = vpack.c.b16 %v1494, %v1488
    %v1891 = vpack.c.b16 %v1495, %v1489
    %v1892 = vpack.c.b16 %v1496, %v1490
    %v1893 = vpack.c.b16 %v1503, %v1497
    %v1894 = vpack.c.b16 %v1504, %v1498
    %v1895 = vpack.c.b16 %v1505, %v1499
    %v1896 = vpack.c.b16 %v1506, %v1500
    %v1897 = vpack.c.b16 %v1507, %v1501
    %v1898 = vpack.c.b16 %v1508, %v1502
    %v1899 = vpack.c.b16 %v1515, %v1509
    %v1900 = vpack.c.b16 %v1516, %v1510
    %v1901 = vpack.c.b16 %v1517, %v1511
    %v1902 = vpack.c.b16 %v1518, %v1512
    %v1903 = vpack.c.b16 %v1519, %v1513
    %v1904 = vpack.c.b16 %v1520, %v1514
    %v1905 = vpack.c.b16 %v1527, %v1521
    %v1906 = vpack.c.b16 %v1528, %v1522
    %v1907 = vpack.c.b16 %v1529, %v1523
    %v1908 = vpack.c.b16 %v1530, %v1524
    %v1909 = vpack.c.b16 %v1531, %v1525
    %v1910 = vpack.c.b16 %v1532, %v1526
    %v1911 = vpack.c.b16 %v1539, %v1533
    %v1912 = vpack.c.b16 %v1540, %v1534
    %v1913 = vpack.c.b16 %v1541, %v1535
    %v1914 = vpack.c.b16 %v1542, %v1536
    %v1915 = vpack.c.b16 %v1543, %v1537
    %v1916 = vpack.c.b16 %v1544, %v1538
    %v1917 = vpack.c.b16 %v1551, %v1545
    %v1918 = vpack.c.b16 %v1552, %v1546
    %v1919 = vpack.c.b16 %v1553, %v1547
    %v1920 = vpack.c.b16 %v1554, %v1548
    %v1921 = vpack.c.b16 %v1555, %v1549
    %v1922 = vpack.c.b16 %v1556, %v1550
    %v1923 = vpack.c.b16 %v1563, %v1557
    %v1924 = vpack.c.b16 %v1564, %v1558
    %v1925 = vpack.c.b16 %v1565, %v1559
    %v1926 = vpack.c.b16 %v1566, %v1560
    %v1927 = vpack.c.b16 %v1567, %v1561
    %v1928 = vpack.c.b16 %v1568, %v1562
    %v1929 = vpack.c.b16 %v1575, %v1569
    %v1930 = vpack.c.b16 %v1576, %v1570
    %v1931 = vpack.c.b16 %v1577, %v1571
    %v1932 = vpack.c.b16 %v1578, %v1572
    %v1933 = vpack.c.b16 %v1579, %v1573
    %v1934 = vpack.c.b16 %v1580, %v1574
    %v1935 = vpack.c.b16 %v1587, %v1581
    %v1936 = vpack.c.b16 %v1588, %v1582
    %v1937 = vpack.c.b16 %v1589, %v1583
    %v1938 = vpack.c.b16 %v1590, %v1584
    %v1939 = vpack.c.b16 %v1591, %v1585
    %v1940 = vpack.c.b16 %v1592, %v1586
    %v1941 = vpack.c.b16 %v1599, %v1593
    %v1942 = vpack.c.b16 %v1600, %v1594
    %v1943 = vpack.c.b16 %v1601, %v1595
    %v1944 = vpack.c.b16 %v1602, %v1596
    %v1945 = vpack.c.b16 %v1603, %v1597
    %v1946 = vpack.c.b16 %v1604, %v1598
    %v1947 = vpack.c.b16 %v1611, %v1605
    %v1948 = vpack.c.b16 %v1612, %v1606
    %v1949 = vpack.c.b16 %v1613, %v1607
    %v1950 = vpack.c.b16 %v1614, %v1608
    %v1951 = vpack.c.b16 %v1615, %v1609
    %v1952 = vpack.c.b16 %v1616, %v1610
    %2289 = vmatprep.subr.bf16.mxu0 %v1660
    %2290 = vmatpush1.bf16.msra.mxu0 %v1659
    %2291 = vmatprep.subr.bf16.mxu0 %v1654
    %2292 = vmatpush1.bf16.msra.mxu0 %v1653
    %2293 = vmatprep.subr.bf16.mxu0 %v1648
    %2294 = vmatpush1.bf16.msra.mxu0 %v1647
    %2295 = vmatprep.subr.bf16.mxu0 %v1642
    %2296 = vmatpush1.bf16.msra.mxu0 %v1641
    %2297 = vmatprep.subr.bf16.mxu0 %v1636
    %2298 = vmatpush1.bf16.msra.mxu0 %v1635
    %2299 = vmatprep.subr.bf16.mxu0 %v1630
    %2300 = vmatpush1.bf16.msra.mxu0 %v1629
    %2301 = vmatprep.subr.bf16.mxu0 %v1624
    %2302 = vmatpush1.bf16.msra.mxu0 %v1623
    %2303 = vmatprep.subr.bf16.mxu0 %v1618
    %2304 = vmatpush1.bf16.msra.mxu0 %v1617
    %2305 = vmatprep.subr.bf16.mxu0 %v1708
    %2306 = vmatpush2.bf16.msra.mxu0 %v1707
    %2307 = vmatprep.subr.bf16.mxu0 %v1702
    %2308 = vmatpush2.bf16.msra.mxu0 %v1701
    %2309 = vmatprep.subr.bf16.mxu0 %v1696
    %2310 = vmatpush2.bf16.msra.mxu0 %v1695
    %2311 = vmatprep.subr.bf16.mxu0 %v1690
    %2312 = vmatpush2.bf16.msra.mxu0 %v1689
    %2313 = vmatprep.subr.bf16.mxu0 %v1684
    %2314 = vmatpush2.bf16.msra.mxu0 %v1683
    %2315 = vmatprep.subr.bf16.mxu0 %v1678
    %2316 = vmatpush2.bf16.msra.mxu0 %v1677
    %2317 = vmatprep.subr.bf16.mxu0 %v1672
    %2318 = vmatpush2.bf16.msra.mxu0 %v1671
    %2319 = vmatprep.subr.bf16.mxu0 %v1666
    %2320 = vmatpush2.bf16.msra.mxu0 %v1665
    %2321 = vmatprep.mubr.bf16.mxu0 %v572
    %2322 = vmatmul.mubr.bf16.gmra.mxu0 %v571
    %v2323 = vpop.f32.mrf.mxu0
    %v2324 = vadd.f32 %v582, %v2323
    %v2325 = vpop.f32.mrf.mxu0
    %v2326 = vadd.f32 %v586, %v2325
    %v2327 = vpop.f32.mrf.mxu0
    %v2328 = vpop.f32.mrf.mxu0
    %2329 = vdwg.mxu0
    %2330 = vmatprep.subr.bf16.mxu0 %v1756
    %2331 = vmatpush1.bf16.msra.mxu0 %v1755
    %2332 = vmatprep.subr.bf16.mxu0 %v1750
    %2333 = vmatpush1.bf16.msra.mxu0 %v1749
    %2334 = vmatprep.subr.bf16.mxu0 %v1744
    %2335 = vmatpush1.bf16.msra.mxu0 %v1743
    %2336 = vmatprep.subr.bf16.mxu0 %v1738
    %2337 = vmatpush1.bf16.msra.mxu0 %v1737
    %2338 = vmatprep.subr.bf16.mxu0 %v1732
    %2339 = vmatpush1.bf16.msra.mxu0 %v1731
    %2340 = vmatprep.subr.bf16.mxu0 %v1726
    %2341 = vmatpush1.bf16.msra.mxu0 %v1725
    %2342 = vmatprep.subr.bf16.mxu0 %v1720
    %2343 = vmatpush1.bf16.msra.mxu0 %v1719
    %2344 = vmatprep.subr.bf16.mxu0 %v1714
    %2345 = vmatpush1.bf16.msra.mxu0 %v1713
    %2346 = vmatprep.subr.bf16.mxu0 %v1804
    %2347 = vmatpush2.bf16.msra.mxu0 %v1803
    %2348 = vmatprep.subr.bf16.mxu0 %v1798
    %2349 = vmatpush2.bf16.msra.mxu0 %v1797
    %2350 = vmatprep.subr.bf16.mxu0 %v1792
    %2351 = vmatpush2.bf16.msra.mxu0 %v1791
    %2352 = vmatprep.subr.bf16.mxu0 %v1786
    %2353 = vmatpush2.bf16.msra.mxu0 %v1785
    %2354 = vmatprep.subr.bf16.mxu0 %v1780
    %2355 = vmatpush2.bf16.msra.mxu0 %v1779
    %2356 = vmatprep.subr.bf16.mxu0 %v1774
    %2357 = vmatpush2.bf16.msra.mxu0 %v1773
    %2358 = vmatprep.subr.bf16.mxu0 %v1768
    %2359 = vmatpush2.bf16.msra.mxu0 %v1767
    %2360 = vmatprep.subr.bf16.mxu0 %v1762
    %2361 = vmatpush2.bf16.msra.mxu0 %v1761
    %2362 = vmatprep.mubr.bf16.mxu0 %v574
    %2363 = vmatmul.mubr.bf16.gmra.mxu0 %v573
    %v2364 = vpop.f32.mrf.mxu0
    %v2365 = vadd.f32 %v2324, %v2364
    %v2366 = vpop.f32.mrf.mxu0
    %v2367 = vadd.f32 %v2326, %v2366
    %v2368 = vpop.f32.mrf.mxu0
    %v2369 = vpop.f32.mrf.mxu0
    %2370 = vdwg.mxu0
    %2371 = vmatprep.subr.bf16.mxu0 %v1852
    %2372 = vmatpush1.bf16.msra.mxu0 %v1851
    %2373 = vmatprep.subr.bf16.mxu0 %v1846
    %2374 = vmatpush1.bf16.msra.mxu0 %v1845
    %2375 = vmatprep.subr.bf16.mxu0 %v1840
    %2376 = vmatpush1.bf16.msra.mxu0 %v1839
    %2377 = vmatprep.subr.bf16.mxu0 %v1834
    %2378 = vmatpush1.bf16.msra.mxu0 %v1833
    %2379 = vmatprep.subr.bf16.mxu0 %v1828
    %2380 = vmatpush1.bf16.msra.mxu0 %v1827
    %2381 = vmatprep.subr.bf16.mxu0 %v1822
    %2382 = vmatpush1.bf16.msra.mxu0 %v1821
    %2383 = vmatprep.subr.bf16.mxu0 %v1816
    %2384 = vmatpush1.bf16.msra.mxu0 %v1815
    %2385 = vmatprep.subr.bf16.mxu0 %v1810
    %2386 = vmatpush1.bf16.msra.mxu0 %v1809
    %2387 = vmatprep.subr.bf16.mxu0 %v1900
    %2388 = vmatpush2.bf16.msra.mxu0 %v1899
    %2389 = vmatprep.subr.bf16.mxu0 %v1894
    %2390 = vmatpush2.bf16.msra.mxu0 %v1893
    %2391 = vmatprep.subr.bf16.mxu0 %v1888
    %2392 = vmatpush2.bf16.msra.mxu0 %v1887
    %2393 = vmatprep.subr.bf16.mxu0 %v1882
    %2394 = vmatpush2.bf16.msra.mxu0 %v1881
    %2395 = vmatprep.subr.bf16.mxu0 %v1876
    %2396 = vmatpush2.bf16.msra.mxu0 %v1875
    %2397 = vmatprep.subr.bf16.mxu0 %v1870
    %2398 = vmatpush2.bf16.msra.mxu0 %v1869
    %2399 = vmatprep.subr.bf16.mxu0 %v1864
    %2400 = vmatpush2.bf16.msra.mxu0 %v1863
    %2401 = vmatprep.subr.bf16.mxu0 %v1858
    %2402 = vmatpush2.bf16.msra.mxu0 %v1857
    %2403 = vmatprep.mubr.bf16.mxu0 %v576
    %2404 = vmatmul.mubr.bf16.gmra.mxu0 %v575
    %v2405 = vpop.f32.mrf.mxu0
    %v2406 = vadd.f32 %v2365, %v2405
    %v2407 = vpop.f32.mrf.mxu0
    %v2408 = vadd.f32 %v2367, %v2407
    %v2409 = vpop.f32.mrf.mxu0
    %v2410 = vpop.f32.mrf.mxu0
    %2411 = vdwg.mxu0
    %2412 = vmatprep.subr.bf16.mxu0 %v1948
    %2413 = vmatpush1.bf16.msra.mxu0 %v1947
    %2414 = vmatprep.subr.bf16.mxu0 %v1942
    %2415 = vmatpush1.bf16.msra.mxu0 %v1941
    %2416 = vmatprep.subr.bf16.mxu0 %v1936
    %2417 = vmatpush1.bf16.msra.mxu0 %v1935
    %2418 = vmatprep.subr.bf16.mxu0 %v1930
    %2419 = vmatpush1.bf16.msra.mxu0 %v1929
    %2420 = vmatprep.subr.bf16.mxu0 %v1924
    %2421 = vmatpush1.bf16.msra.mxu0 %v1923
    %2422 = vmatprep.subr.bf16.mxu0 %v1918
    %2423 = vmatpush1.bf16.msra.mxu0 %v1917
    %2424 = vmatprep.subr.bf16.mxu0 %v1912
    %2425 = vmatpush1.bf16.msra.mxu0 %v1911
    %2426 = vmatprep.subr.bf16.mxu0 %v1906
    %2427 = vmatpush1.bf16.msra.mxu0 %v1905
    %2428 = vmatprep.subr.bf16.mxu0 0
    %2429 = vmatpush2.bf16.msra.mxu0 0
    %2430 = vmatprep.subr.bf16.mxu0 0
    %2431 = vmatpush2.bf16.msra.mxu0 0
    %2432 = vmatprep.subr.bf16.mxu0 0
    %2433 = vmatpush2.bf16.msra.mxu0 0
    %2434 = vmatprep.subr.bf16.mxu0 0
    %2435 = vmatpush2.bf16.msra.mxu0 0
    %2436 = vmatprep.subr.bf16.mxu0 0
    %2437 = vmatpush2.bf16.msra.mxu0 0
    %2438 = vmatprep.subr.bf16.mxu0 0
    %2439 = vmatpush2.bf16.msra.mxu0 0
    %2440 = vmatprep.subr.bf16.mxu0 0
    %2441 = vmatpush2.bf16.msra.mxu0 0
    %2442 = vmatprep.subr.bf16.mxu0 0
    %2443 = vmatpush2.bf16.msra.mxu0 0
    %2444 = vmatprep.mubr.bf16.mxu0 0
    %2445 = vmatmul.mubr.bf16.gmra.mxu0 %v577
    %v2446 = vpop.f32.mrf.mxu0
    %v2447 = vadd.f32 %v2406, %v2446
    %v2448 = vpop.f32.mrf.mxu0
    %v2449 = vadd.f32 %v2408, %v2448
    %v2450 = vpop.f32.mrf.mxu0
    %v2451 = vpop.f32.mrf.mxu0
    %2452 = vdwg.mxu0
    %2453 = vmatprep.subr.bf16.mxu0 %v1662
    %2454 = vmatpush1.bf16.msra.mxu0 %v1661
    %2455 = vmatprep.subr.bf16.mxu0 %v1656
    %2456 = vmatpush1.bf16.msra.mxu0 %v1655
    %2457 = vmatprep.subr.bf16.mxu0 %v1650
    %2458 = vmatpush1.bf16.msra.mxu0 %v1649
    %2459 = vmatprep.subr.bf16.mxu0 %v1644
    %2460 = vmatpush1.bf16.msra.mxu0 %v1643
    %2461 = vmatprep.subr.bf16.mxu0 %v1638
    %2462 = vmatpush1.bf16.msra.mxu0 %v1637
    %2463 = vmatprep.subr.bf16.mxu0 %v1632
    %2464 = vmatpush1.bf16.msra.mxu0 %v1631
    %2465 = vmatprep.subr.bf16.mxu0 %v1626
    %2466 = vmatpush1.bf16.msra.mxu0 %v1625
    %2467 = vmatprep.subr.bf16.mxu0 %v1620
    %2468 = vmatpush1.bf16.msra.mxu0 %v1619
    %2469 = vmatprep.subr.bf16.mxu0 %v1710
    %2470 = vmatpush2.bf16.msra.mxu0 %v1709
    %2471 = vmatprep.subr.bf16.mxu0 %v1704
    %2472 = vmatpush2.bf16.msra.mxu0 %v1703
    %2473 = vmatprep.subr.bf16.mxu0 %v1698
    %2474 = vmatpush2.bf16.msra.mxu0 %v1697
    %2475 = vmatprep.subr.bf16.mxu0 %v1692
    %2476 = vmatpush2.bf16.msra.mxu0 %v1691
    %2477 = vmatprep.subr.bf16.mxu0 %v1686
    %2478 = vmatpush2.bf16.msra.mxu0 %v1685
    %2479 = vmatprep.subr.bf16.mxu0 %v1680
    %2480 = vmatpush2.bf16.msra.mxu0 %v1679
    %2481 = vmatprep.subr.bf16.mxu0 %v1674
    %2482 = vmatpush2.bf16.msra.mxu0 %v1673
    %2483 = vmatprep.subr.bf16.mxu0 %v1668
    %2484 = vmatpush2.bf16.msra.mxu0 %v1667
    %2485 = vmatprep.mubr.bf16.mxu0 %v572
    %2486 = vmatmul.mubr.bf16.gmra.mxu0 %v571
    %v2487 = vpop.f32.mrf.mxu0
    %v2488 = vadd.f32 %v590, %v2487
    %v2489 = vpop.f32.mrf.mxu0
    %v2490 = vadd.f32 %v594, %v2489
    %v2491 = vpop.f32.mrf.mxu0
    %v2492 = vpop.f32.mrf.mxu0
    %2493 = vdwg.mxu0
    %2494 = vmatprep.subr.bf16.mxu0 %v1758
    %2495 = vmatpush1.bf16.msra.mxu0 %v1757
    %2496 = vmatprep.subr.bf16.mxu0 %v1752
    %2497 = vmatpush1.bf16.msra.mxu0 %v1751
    %2498 = vmatprep.subr.bf16.mxu0 %v1746
    %2499 = vmatpush1.bf16.msra.mxu0 %v1745
    %2500 = vmatprep.subr.bf16.mxu0 %v1740
    %2501 = vmatpush1.bf16.msra.mxu0 %v1739
    %2502 = vmatprep.subr.bf16.mxu0 %v1734
    %2503 = vmatpush1.bf16.msra.mxu0 %v1733
    %2504 = vmatprep.subr.bf16.mxu0 %v1728
    %2505 = vmatpush1.bf16.msra.mxu0 %v1727
    %2506 = vmatprep.subr.bf16.mxu0 %v1722
    %2507 = vmatpush1.bf16.msra.mxu0 %v1721
    %2508 = vmatprep.subr.bf16.mxu0 %v1716
    %2509 = vmatpush1.bf16.msra.mxu0 %v1715
    %2510 = vmatprep.subr.bf16.mxu0 %v1806
    %2511 = vmatpush2.bf16.msra.mxu0 %v1805
    %2512 = vmatprep.subr.bf16.mxu0 %v1800
    %2513 = vmatpush2.bf16.msra.mxu0 %v1799
    %2514 = vmatprep.subr.bf16.mxu0 %v1794
    %2515 = vmatpush2.bf16.msra.mxu0 %v1793
    %2516 = vmatprep.subr.bf16.mxu0 %v1788
    %2517 = vmatpush2.bf16.msra.mxu0 %v1787
    %2518 = vmatprep.subr.bf16.mxu0 %v1782
    %2519 = vmatpush2.bf16.msra.mxu0 %v1781
    %2520 = vmatprep.subr.bf16.mxu0 %v1776
    %2521 = vmatpush2.bf16.msra.mxu0 %v1775
    %2522 = vmatprep.subr.bf16.mxu0 %v1770
    %2523 = vmatpush2.bf16.msra.mxu0 %v1769
    %2524 = vmatprep.subr.bf16.mxu0 %v1764
    %2525 = vmatpush2.bf16.msra.mxu0 %v1763
    %2526 = vmatprep.mubr.bf16.mxu0 %v574
    %2527 = vmatmul.mubr.bf16.gmra.mxu0 %v573
    %v2528 = vpop.f32.mrf.mxu0
    %v2529 = vadd.f32 %v2488, %v2528
    %v2530 = vpop.f32.mrf.mxu0
    %v2531 = vadd.f32 %v2490, %v2530
    %v2532 = vpop.f32.mrf.mxu0
    %v2533 = vpop.f32.mrf.mxu0
    %2534 = vdwg.mxu0
    %2535 = vmatprep.subr.bf16.mxu0 %v1854
    %2536 = vmatpush1.bf16.msra.mxu0 %v1853
    %2537 = vmatprep.subr.bf16.mxu0 %v1848
    %2538 = vmatpush1.bf16.msra.mxu0 %v1847
    %2539 = vmatprep.subr.bf16.mxu0 %v1842
    %2540 = vmatpush1.bf16.msra.mxu0 %v1841
    %2541 = vmatprep.subr.bf16.mxu0 %v1836
    %2542 = vmatpush1.bf16.msra.mxu0 %v1835
    %2543 = vmatprep.subr.bf16.mxu0 %v1830
    %2544 = vmatpush1.bf16.msra.mxu0 %v1829
    %2545 = vmatprep.subr.bf16.mxu0 %v1824
    %2546 = vmatpush1.bf16.msra.mxu0 %v1823
    %2547 = vmatprep.subr.bf16.mxu0 %v1818
    %2548 = vmatpush1.bf16.msra.mxu0 %v1817
    %2549 = vmatprep.subr.bf16.mxu0 %v1812
    %2550 = vmatpush1.bf16.msra.mxu0 %v1811
    %2551 = vmatprep.subr.bf16.mxu0 %v1902
    %2552 = vmatpush2.bf16.msra.mxu0 %v1901
    %2553 = vmatprep.subr.bf16.mxu0 %v1896
    %2554 = vmatpush2.bf16.msra.mxu0 %v1895
    %2555 = vmatprep.subr.bf16.mxu0 %v1890
    %2556 = vmatpush2.bf16.msra.mxu0 %v1889
    %2557 = vmatprep.subr.bf16.mxu0 %v1884
    %2558 = vmatpush2.bf16.msra.mxu0 %v1883
    %2559 = vmatprep.subr.bf16.mxu0 %v1878
    %2560 = vmatpush2.bf16.msra.mxu0 %v1877
    %2561 = vmatprep.subr.bf16.mxu0 %v1872
    %2562 = vmatpush2.bf16.msra.mxu0 %v1871
    %2563 = vmatprep.subr.bf16.mxu0 %v1866
    %2564 = vmatpush2.bf16.msra.mxu0 %v1865
    %2565 = vmatprep.subr.bf16.mxu0 %v1860
    %2566 = vmatpush2.bf16.msra.mxu0 %v1859
    %2567 = vmatprep.mubr.bf16.mxu0 %v576
    %2568 = vmatmul.mubr.bf16.gmra.mxu0 %v575
    %v2569 = vpop.f32.mrf.mxu0
    %v2570 = vadd.f32 %v2529, %v2569
    %v2571 = vpop.f32.mrf.mxu0
    %v2572 = vadd.f32 %v2531, %v2571
    %v2573 = vpop.f32.mrf.mxu0
    %v2574 = vpop.f32.mrf.mxu0
    %2575 = vdwg.mxu0
    %2576 = vmatprep.subr.bf16.mxu0 %v1950
    %2577 = vmatpush1.bf16.msra.mxu0 %v1949
    %2578 = vmatprep.subr.bf16.mxu0 %v1944
    %2579 = vmatpush1.bf16.msra.mxu0 %v1943
    %2580 = vmatprep.subr.bf16.mxu0 %v1938
    %2581 = vmatpush1.bf16.msra.mxu0 %v1937
    %2582 = vmatprep.subr.bf16.mxu0 %v1932
    %2583 = vmatpush1.bf16.msra.mxu0 %v1931
    %2584 = vmatprep.subr.bf16.mxu0 %v1926
    %2585 = vmatpush1.bf16.msra.mxu0 %v1925
    %2586 = vmatprep.subr.bf16.mxu0 %v1920
    %2587 = vmatpush1.bf16.msra.mxu0 %v1919
    %2588 = vmatprep.subr.bf16.mxu0 %v1914
    %2589 = vmatpush1.bf16.msra.mxu0 %v1913
    %2590 = vmatprep.subr.bf16.mxu0 %v1908
    %2591 = vmatpush1.bf16.msra.mxu0 %v1907
    %2592 = vmatprep.subr.bf16.mxu0 0
    %2593 = vmatpush2.bf16.msra.mxu0 0
    %2594 = vmatprep.subr.bf16.mxu0 0
    %2595 = vmatpush2.bf16.msra.mxu0 0
    %2596 = vmatprep.subr.bf16.mxu0 0
    %2597 = vmatpush2.bf16.msra.mxu0 0
    %2598 = vmatprep.subr.bf16.mxu0 0
    %2599 = vmatpush2.bf16.msra.mxu0 0
    %2600 = vmatprep.subr.bf16.mxu0 0
    %2601 = vmatpush2.bf16.msra.mxu0 0
    %2602 = vmatprep.subr.bf16.mxu0 0
    %2603 = vmatpush2.bf16.msra.mxu0 0
    %2604 = vmatprep.subr.bf16.mxu0 0
    %2605 = vmatpush2.bf16.msra.mxu0 0
    %2606 = vmatprep.subr.bf16.mxu0 0
    %2607 = vmatpush2.bf16.msra.mxu0 0
    %2608 = vmatprep.mubr.bf16.mxu0 0
    %2609 = vmatmul.mubr.bf16.gmra.mxu0 %v577
    %v2610 = vpop.f32.mrf.mxu0
    %v2611 = vadd.f32 %v2570, %v2610
    %v2612 = vpop.f32.mrf.mxu0
    %v2613 = vadd.f32 %v2572, %v2612
    %v2614 = vpop.f32.mrf.mxu0
    %v2615 = vpop.f32.mrf.mxu0
    %2616 = vdwg.mxu0
    %2617 = vmatprep.subr.bf16.mxu0 %v1664
    %2618 = vmatpush1.bf16.msra.mxu0 %v1663
    %2619 = vmatprep.subr.bf16.mxu0 %v1658
    %2620 = vmatpush1.bf16.msra.mxu0 %v1657
    %2621 = vmatprep.subr.bf16.mxu0 %v1652
    %2622 = vmatpush1.bf16.msra.mxu0 %v1651
    %2623 = vmatprep.subr.bf16.mxu0 %v1646
    %2624 = vmatpush1.bf16.msra.mxu0 %v1645
    %2625 = vmatprep.subr.bf16.mxu0 %v1640
    %2626 = vmatpush1.bf16.msra.mxu0 %v1639
    %2627 = vmatprep.subr.bf16.mxu0 %v1634
    %2628 = vmatpush1.bf16.msra.mxu0 %v1633
    %2629 = vmatprep.subr.bf16.mxu0 %v1628
    %2630 = vmatpush1.bf16.msra.mxu0 %v1627
    %2631 = vmatprep.subr.bf16.mxu0 %v1622
    %2632 = vmatpush1.bf16.msra.mxu0 %v1621
    %2633 = vmatprep.subr.bf16.mxu0 %v1712
    %2634 = vmatpush2.bf16.msra.mxu0 %v1711
    %2635 = vmatprep.subr.bf16.mxu0 %v1706
    %2636 = vmatpush2.bf16.msra.mxu0 %v1705
    %2637 = vmatprep.subr.bf16.mxu0 %v1700
    %2638 = vmatpush2.bf16.msra.mxu0 %v1699
    %2639 = vmatprep.subr.bf16.mxu0 %v1694
    %2640 = vmatpush2.bf16.msra.mxu0 %v1693
    %2641 = vmatprep.subr.bf16.mxu0 %v1688
    %2642 = vmatpush2.bf16.msra.mxu0 %v1687
    %2643 = vmatprep.subr.bf16.mxu0 %v1682
    %2644 = vmatpush2.bf16.msra.mxu0 %v1681
    %2645 = vmatprep.subr.bf16.mxu0 %v1676
    %2646 = vmatpush2.bf16.msra.mxu0 %v1675
    %2647 = vmatprep.subr.bf16.mxu0 %v1670
    %2648 = vmatpush2.bf16.msra.mxu0 %v1669
    %2649 = vmatprep.mubr.bf16.mxu0 %v572
    %2650 = vmatmul.mubr.bf16.gmra.mxu0 %v571
    %v2651 = vpop.f32.mrf.mxu0
    %v2652 = vadd.f32 %v598, %v2651
    %v2653 = vpop.f32.mrf.mxu0
    %v2654 = vadd.f32 %v602, %v2653
    %v2655 = vpop.f32.mrf.mxu0
    %v2656 = vpop.f32.mrf.mxu0
    %2657 = vdwg.mxu0
    %2658 = vmatprep.subr.bf16.mxu0 %v1760
    %2659 = vmatpush1.bf16.msra.mxu0 %v1759
    %2660 = vmatprep.subr.bf16.mxu0 %v1754
    %2661 = vmatpush1.bf16.msra.mxu0 %v1753
    %2662 = vmatprep.subr.bf16.mxu0 %v1748
    %2663 = vmatpush1.bf16.msra.mxu0 %v1747
    %2664 = vmatprep.subr.bf16.mxu0 %v1742
    %2665 = vmatpush1.bf16.msra.mxu0 %v1741
    %2666 = vmatprep.subr.bf16.mxu0 %v1736
    %2667 = vmatpush1.bf16.msra.mxu0 %v1735
    %2668 = vmatprep.subr.bf16.mxu0 %v1730
    %2669 = vmatpush1.bf16.msra.mxu0 %v1729
    %2670 = vmatprep.subr.bf16.mxu0 %v1724
    %2671 = vmatpush1.bf16.msra.mxu0 %v1723
    %2672 = vmatprep.subr.bf16.mxu0 %v1718
    %2673 = vmatpush1.bf16.msra.mxu0 %v1717
    %2674 = vmatprep.subr.bf16.mxu0 %v1808
    %2675 = vmatpush2.bf16.msra.mxu0 %v1807
    %2676 = vmatprep.subr.bf16.mxu0 %v1802
    %2677 = vmatpush2.bf16.msra.mxu0 %v1801
    %2678 = vmatprep.subr.bf16.mxu0 %v1796
    %2679 = vmatpush2.bf16.msra.mxu0 %v1795
    %2680 = vmatprep.subr.bf16.mxu0 %v1790
    %2681 = vmatpush2.bf16.msra.mxu0 %v1789
    %2682 = vmatprep.subr.bf16.mxu0 %v1784
    %2683 = vmatpush2.bf16.msra.mxu0 %v1783
    %2684 = vmatprep.subr.bf16.mxu0 %v1778
    %2685 = vmatpush2.bf16.msra.mxu0 %v1777
    %2686 = vmatprep.subr.bf16.mxu0 %v1772
    %2687 = vmatpush2.bf16.msra.mxu0 %v1771
    %2688 = vmatprep.subr.bf16.mxu0 %v1766
    %2689 = vmatpush2.bf16.msra.mxu0 %v1765
    %2690 = vmatprep.mubr.bf16.mxu0 %v574
    %2691 = vmatmul.mubr.bf16.gmra.mxu0 %v573
    %v2692 = vpop.f32.mrf.mxu0
    %v2693 = vadd.f32 %v2652, %v2692
    %v2694 = vpop.f32.mrf.mxu0
    %v2695 = vadd.f32 %v2654, %v2694
    %v2696 = vpop.f32.mrf.mxu0
    %v2697 = vpop.f32.mrf.mxu0
    %2698 = vdwg.mxu0
    %2699 = vmatprep.subr.bf16.mxu0 %v1856
    %2700 = vmatpush1.bf16.msra.mxu0 %v1855
    %2701 = vmatprep.subr.bf16.mxu0 %v1850
    %2702 = vmatpush1.bf16.msra.mxu0 %v1849
    %2703 = vmatprep.subr.bf16.mxu0 %v1844
    %2704 = vmatpush1.bf16.msra.mxu0 %v1843
    %2705 = vmatprep.subr.bf16.mxu0 %v1838
    %2706 = vmatpush1.bf16.msra.mxu0 %v1837
    %2707 = vmatprep.subr.bf16.mxu0 %v1832
    %2708 = vmatpush1.bf16.msra.mxu0 %v1831
    %2709 = vmatprep.subr.bf16.mxu0 %v1826
    %2710 = vmatpush1.bf16.msra.mxu0 %v1825
    %2711 = vmatprep.subr.bf16.mxu0 %v1820
    %2712 = vmatpush1.bf16.msra.mxu0 %v1819
    %2713 = vmatprep.subr.bf16.mxu0 %v1814
    %2714 = vmatpush1.bf16.msra.mxu0 %v1813
    %2715 = vmatprep.subr.bf16.mxu0 %v1904
    %2716 = vmatpush2.bf16.msra.mxu0 %v1903
    %2717 = vmatprep.subr.bf16.mxu0 %v1898
    %2718 = vmatpush2.bf16.msra.mxu0 %v1897
    %2719 = vmatprep.subr.bf16.mxu0 %v1892
    %2720 = vmatpush2.bf16.msra.mxu0 %v1891
    %2721 = vmatprep.subr.bf16.mxu0 %v1886
    %2722 = vmatpush2.bf16.msra.mxu0 %v1885
    %2723 = vmatprep.subr.bf16.mxu0 %v1880
    %2724 = vmatpush2.bf16.msra.mxu0 %v1879
    %2725 = vmatprep.subr.bf16.mxu0 %v1874
    %2726 = vmatpush2.bf16.msra.mxu0 %v1873
    %2727 = vmatprep.subr.bf16.mxu0 %v1868
    %2728 = vmatpush2.bf16.msra.mxu0 %v1867
    %2729 = vmatprep.subr.bf16.mxu0 %v1862
    %2730 = vmatpush2.bf16.msra.mxu0 %v1861
    %2731 = vmatprep.mubr.bf16.mxu0 %v576
    %2732 = vmatmul.mubr.bf16.gmra.mxu0 %v575
    %v2733 = vpop.f32.mrf.mxu0
    %v2734 = vadd.f32 %v2693, %v2733
    %v2735 = vpop.f32.mrf.mxu0
    %v2736 = vadd.f32 %v2695, %v2735
    %v2737 = vpop.f32.mrf.mxu0
    %v2738 = vpop.f32.mrf.mxu0
    %2739 = vdwg.mxu0
    %2740 = vmatprep.subr.bf16.mxu0 %v1952
    %2741 = vmatpush1.bf16.msra.mxu0 %v1951
    %2742 = vmatprep.subr.bf16.mxu0 %v1946
    %2743 = vmatpush1.bf16.msra.mxu0 %v1945
    %2744 = vmatprep.subr.bf16.mxu0 %v1940
    %2745 = vmatpush1.bf16.msra.mxu0 %v1939
    %2746 = vmatprep.subr.bf16.mxu0 %v1934
    %2747 = vmatpush1.bf16.msra.mxu0 %v1933
    %2748 = vmatprep.subr.bf16.mxu0 %v1928
    %2749 = vmatpush1.bf16.msra.mxu0 %v1927
    %2750 = vmatprep.subr.bf16.mxu0 %v1922
    %2751 = vmatpush1.bf16.msra.mxu0 %v1921
    %2752 = vmatprep.subr.bf16.mxu0 %v1916
    %2753 = vmatpush1.bf16.msra.mxu0 %v1915
    %2754 = vmatprep.subr.bf16.mxu0 %v1910
    %2755 = vmatpush1.bf16.msra.mxu0 %v1909
    %2756 = vmatprep.subr.bf16.mxu0 0
    %2757 = vmatpush2.bf16.msra.mxu0 0
    %2758 = vmatprep.subr.bf16.mxu0 0
    %2759 = vmatpush2.bf16.msra.mxu0 0
    %2760 = vmatprep.subr.bf16.mxu0 0
    %2761 = vmatpush2.bf16.msra.mxu0 0
    %2762 = vmatprep.subr.bf16.mxu0 0
    %2763 = vmatpush2.bf16.msra.mxu0 0
    %2764 = vmatprep.subr.bf16.mxu0 0
    %2765 = vmatpush2.bf16.msra.mxu0 0
    %2766 = vmatprep.subr.bf16.mxu0 0
    %2767 = vmatpush2.bf16.msra.mxu0 0
    %2768 = vmatprep.subr.bf16.mxu0 0
    %2769 = vmatpush2.bf16.msra.mxu0 0
    %2770 = vmatprep.subr.bf16.mxu0 0
    %2771 = vmatpush2.bf16.msra.mxu0 0
    %2772 = vmatprep.mubr.bf16.mxu0 0
    %2773 = vmatmul.mubr.bf16.gmra.mxu0 %v577
    %v2774 = vpop.f32.mrf.mxu0
    %v2775 = vadd.f32 %v2734, %v2774
    %v2776 = vpop.f32.mrf.mxu0
    %v2777 = vadd.f32 %v2736, %v2776
    %v2778 = vpop.f32.mrf.mxu0
    %v2779 = vpop.f32.mrf.mxu0
    %2780 = vdwg.mxu0
    %v2781 = vmax.f32 %v2447, 0.0
    %v2782 = vmax.f32 %v2449, 0.0
    %v2783 = vmax.f32 %v2611, 0.0
    %v2784 = vmax.f32 %v2613, 0.0
    %v2785 = vmax.f32 %v2775, 0.0
    %v2786 = vmax.f32 %v2777, 0.0
    %v2787 = vld [vmem:[#allocation6] sm:$0xff]
    %v2788 = vld [vmem:[#allocation6 + $0x8] sm:$0xff]
    %v2789 = vld [vmem:[#allocation6 + $0x10] sm:$0xf]
    %v2790 = vld [vmem:[#allocation6 + $0x14] sm:$0xff]
    %v2791 = vld [vmem:[#allocation6 + $0x1c] sm:$0xff]
    %v2792 = vld [vmem:[#allocation6 + $0x24] sm:$0xf]
    %v2793 = vld [vmem:[#allocation6 + $0x28] sm:$0xff]
    %v2794 = vld [vmem:[#allocation6 + $0x30] sm:$0xff]
    %v2795 = vld [vmem:[#allocation6 + $0x38] sm:$0xf]
    %v2796 = vld [vmem:[#allocation6 + $0x3c] sm:$0xff]
    %v2797 = vld [vmem:[#allocation6 + $0x44] sm:$0xff]
    %v2798 = vld [vmem:[#allocation6 + $0x4c] sm:$0xf]
    %v2799 = vld [vmem:[#allocation6 + $0x50] sm:$0xff]
    %v2800 = vld [vmem:[#allocation6 + $0x58] sm:$0xff]
    %v2801 = vld [vmem:[#allocation6 + $0x60] sm:$0xf]
    %v2802 = vld [vmem:[#allocation6 + $0x64] sm:$0xff]
    %v2803 = vld [vmem:[#allocation6 + $0x6c] sm:$0xff]
    %v2804 = vld [vmem:[#allocation6 + $0x74] sm:$0xf]
    %v2805 = vld [vmem:[#allocation6 + $0x78] sm:$0xff]
    %v2806 = vld [vmem:[#allocation6 + $0x80] sm:$0xff]
    %v2807 = vld [vmem:[#allocation6 + $0x88] sm:$0xf]
    %v2808 = vld [vmem:[#allocation6 + $0x8c] sm:$0xff]
    %v2809 = vld [vmem:[#allocation6 + $0x94] sm:$0xff]
    %v2810 = vld [vmem:[#allocation6 + $0x9c] sm:$0xf]
    %v2811 = vld [vmem:[#allocation6 + $0xa0] sm:$0xff]
    %v2812 = vld [vmem:[#allocation6 + $0xa8] sm:$0xff]
    %v2813 = vld [vmem:[#allocation6 + $0xb0] sm:$0xf]
    %v2814 = vld [vmem:[#allocation6 + $0xb4] sm:$0xff]
    %v2815 = vld [vmem:[#allocation6 + $0xbc] sm:$0xff]
    %v2816 = vld [vmem:[#allocation6 + $0xc4] sm:$0xf]
    %v2817 = vld [vmem:[#allocation6 + $0xc8] sm:$0xff]
    %v2818 = vld [vmem:[#allocation6 + $0xd0] sm:$0xff]
    %v2819 = vld [vmem:[#allocation6 + $0xd8] sm:$0xf]
    %v2820 = vld [vmem:[#allocation6 + $0xdc] sm:$0xff]
    %v2821 = vld [vmem:[#allocation6 + $0xe4] sm:$0xff]
    %v2822 = vld [vmem:[#allocation6 + $0xec] sm:$0xf]
    %v2823 = vld [vmem:[#allocation6 + $0xf0] sm:$0xff]
    %v2824 = vld [vmem:[#allocation6 + $0xf8] sm:$0xff]
    %v2825 = vld [vmem:[#allocation6 + $0x100] sm:$0xf]
    %v2826 = vld [vmem:[#allocation6 + $0x104] sm:$0xff]
    %v2827 = vld [vmem:[#allocation6 + $0x10c] sm:$0xff]
    %v2828 = vld [vmem:[#allocation6 + $0x114] sm:$0xf]
    %v2829 = vld [vmem:[#allocation6 + $0x118] sm:$0xff]
    %v2830 = vld [vmem:[#allocation6 + $0x120] sm:$0xff]
    %v2831 = vld [vmem:[#allocation6 + $0x128] sm:$0xf]
    %v2832 = vld [vmem:[#allocation6 + $0x12c] sm:$0xff]
    %v2833 = vld [vmem:[#allocation6 + $0x134] sm:$0xff]
    %v2834 = vld [vmem:[#allocation6 + $0x13c] sm:$0xf]
    %v2835 = vld [vmem:[#allocation6 + $0x140] sm:$0xff]
    %v2836 = vld [vmem:[#allocation6 + $0x148] sm:$0xff]
    %v2837 = vld [vmem:[#allocation6 + $0x150] sm:$0xf]
    %v2838 = vld [vmem:[#allocation6 + $0x154] sm:$0xff]
    %v2839 = vld [vmem:[#allocation6 + $0x15c] sm:$0xff]
    %v2840 = vld [vmem:[#allocation6 + $0x164] sm:$0xf]
    %v2841 = vld [vmem:[#allocation6 + $0x168] sm:$0xff]
    %v2842 = vld [vmem:[#allocation6 + $0x170] sm:$0xff]
    %v2843 = vld [vmem:[#allocation6 + $0x178] sm:$0xf]
    %v2844 = vld [vmem:[#allocation6 + $0x17c] sm:$0xff]
    %v2845 = vld [vmem:[#allocation6 + $0x184] sm:$0xff]
    %v2846 = vld [vmem:[#allocation6 + $0x18c] sm:$0xf]
    %v2847 = vld [vmem:[#allocation6 + $0x190] sm:$0xff]
    %v2848 = vld [vmem:[#allocation6 + $0x198] sm:$0xff]
    %v2849 = vld [vmem:[#allocation6 + $0x1a0] sm:$0xf]
    %v2850 = vld [vmem:[#allocation6 + $0x1a4] sm:$0xff]
    %v2851 = vld [vmem:[#allocation6 + $0x1ac] sm:$0xff]
    %v2852 = vld [vmem:[#allocation6 + $0x1b4] sm:$0xf]
    %v2853 = vld [vmem:[#allocation6 + $0x1b8] sm:$0xff]
    %v2854 = vld [vmem:[#allocation6 + $0x1c0] sm:$0xff]
    %v2855 = vld [vmem:[#allocation6 + $0x1c8] sm:$0xf]
    %v2856 = vld [vmem:[#allocation6 + $0x1cc] sm:$0xff]
    %v2857 = vld [vmem:[#allocation6 + $0x1d4] sm:$0xff]
    %v2858 = vld [vmem:[#allocation6 + $0x1dc] sm:$0xf]
    %v2859 = vld [vmem:[#allocation6 + $0x1e0] sm:$0xff]
    %v2860 = vld [vmem:[#allocation6 + $0x1e8] sm:$0xff]
    %v2861 = vld [vmem:[#allocation6 + $0x1f0] sm:$0xf]
    %v2862 = vld [vmem:[#allocation6 + $0x1f4] sm:$0xff]
    %v2863 = vld [vmem:[#allocation6 + $0x1fc] sm:$0xff]
    %v2864 = vld [vmem:[#allocation6 + $0x204] sm:$0xf]
    %v2865 = vld [vmem:[#allocation6 + $0x208] sm:$0xff]
    %v2866 = vld [vmem:[#allocation6 + $0x210] sm:$0xff]
    %v2867 = vld [vmem:[#allocation6 + $0x218] sm:$0xf]
    %v2868 = vld [vmem:[#allocation6 + $0x21c] sm:$0xff]
    %v2869 = vld [vmem:[#allocation6 + $0x224] sm:$0xff]
    %v2870 = vld [vmem:[#allocation6 + $0x22c] sm:$0xf]
    %v2871 = vld [vmem:[#allocation6 + $0x230] sm:$0xff]
    %v2872 = vld [vmem:[#allocation6 + $0x238] sm:$0xff]
    %v2873 = vld [vmem:[#allocation6 + $0x240] sm:$0xf]
    %v2874 = vld [vmem:[#allocation6 + $0x244] sm:$0xff]
    %v2875 = vld [vmem:[#allocation6 + $0x24c] sm:$0xff]
    %v2876 = vld [vmem:[#allocation6 + $0x254] sm:$0xf]
    %v2877 = vld [vmem:[#allocation6 + $0x258] sm:$0xff]
    %v2878 = vld [vmem:[#allocation6 + $0x260] sm:$0xff]
    %v2879 = vld [vmem:[#allocation6 + $0x268] sm:$0xf]
    %v2880 = vld [vmem:[#allocation6 + $0x26c] sm:$0xff]
    %v2881 = vld [vmem:[#allocation6 + $0x274] sm:$0xff]
    %v2882 = vld [vmem:[#allocation6 + $0x27c] sm:$0xf]
    %v2883 = vld [vmem:[#allocation6 + $0x280] sm:$0xff]
    %v2884 = vld [vmem:[#allocation6 + $0x288] sm:$0xff]
    %v2885 = vld [vmem:[#allocation6 + $0x290] sm:$0xf]
    %v2886 = vld [vmem:[#allocation6 + $0x294] sm:$0xff]
    %v2887 = vld [vmem:[#allocation6 + $0x29c] sm:$0xff]
    %v2888 = vld [vmem:[#allocation6 + $0x2a4] sm:$0xf]
    %v2889 = vld [vmem:[#allocation6 + $0x2a8] sm:$0xff]
    %v2890 = vld [vmem:[#allocation6 + $0x2b0] sm:$0xff]
    %v2891 = vld [vmem:[#allocation6 + $0x2b8] sm:$0xf]
    %v2892 = vld [vmem:[#allocation6 + $0x2bc] sm:$0xff]
    %v2893 = vld [vmem:[#allocation6 + $0x2c4] sm:$0xff]
    %v2894 = vld [vmem:[#allocation6 + $0x2cc] sm:$0xf]
    %v2895 = vld [vmem:[#allocation6 + $0x2d0] sm:$0xff]
    %v2896 = vld [vmem:[#allocation6 + $0x2d8] sm:$0xff]
    %v2897 = vld [vmem:[#allocation6 + $0x2e0] sm:$0xf]
    %v2898 = vld [vmem:[#allocation6 + $0x2e4] sm:$0xff]
    %v2899 = vld [vmem:[#allocation6 + $0x2ec] sm:$0xff]
    %v2900 = vld [vmem:[#allocation6 + $0x2f4] sm:$0xf]
    %v2901 = vld [vmem:[#allocation6 + $0x2f8] sm:$0xff]
    %v2902 = vld [vmem:[#allocation6 + $0x300] sm:$0xff]
    %v2903 = vld [vmem:[#allocation6 + $0x308] sm:$0xf]
    %v2904 = vld [vmem:[#allocation6 + $0x30c] sm:$0xff]
    %v2905 = vld [vmem:[#allocation6 + $0x314] sm:$0xff]
    %v2906 = vld [vmem:[#allocation6 + $0x31c] sm:$0xf]
    %v2907 = vld [vmem:[#allocation6 + $0x320] sm:$0xff]
    %v2908 = vld [vmem:[#allocation6 + $0x328] sm:$0xff]
    %v2909 = vld [vmem:[#allocation6 + $0x330] sm:$0xf]
    %v2910 = vld [vmem:[#allocation6 + $0x334] sm:$0xff]
    %v2911 = vld [vmem:[#allocation6 + $0x33c] sm:$0xff]
    %v2912 = vld [vmem:[#allocation6 + $0x344] sm:$0xf]
    %v2913 = vld [vmem:[#allocation6 + $0x348] sm:$0xff]
    %v2914 = vld [vmem:[#allocation6 + $0x350] sm:$0xff]
    %v2915 = vld [vmem:[#allocation6 + $0x358] sm:$0xf]
    %v2916 = vld [vmem:[#allocation6 + $0x35c] sm:$0xff]
    %v2917 = vld [vmem:[#allocation6 + $0x364] sm:$0xff]
    %v2918 = vld [vmem:[#allocation6 + $0x36c] sm:$0xf]
    %v2919 = vld [vmem:[#allocation6 + $0x370] sm:$0xff]
    %v2920 = vld [vmem:[#allocation6 + $0x378] sm:$0xff]
    %v2921 = vld [vmem:[#allocation6 + $0x380] sm:$0xf]
    %v2922 = vld [vmem:[#allocation6 + $0x384] sm:$0xff]
    %v2923 = vld [vmem:[#allocation6 + $0x38c] sm:$0xff]
    %v2924 = vld [vmem:[#allocation6 + $0x394] sm:$0xf]
    %v2925 = vld [vmem:[#allocation6 + $0x398] sm:$0xff]
    %v2926 = vld [vmem:[#allocation6 + $0x3a0] sm:$0xff]
    %v2927 = vld [vmem:[#allocation6 + $0x3a8] sm:$0xf]
    %v2928 = vld [vmem:[#allocation6 + $0x3ac] sm:$0xff]
    %v2929 = vld [vmem:[#allocation6 + $0x3b4] sm:$0xff]
    %v2930 = vld [vmem:[#allocation6 + $0x3bc] sm:$0xf]
    %v2931 = vld [vmem:[#allocation6 + $0x3c0] sm:$0xff]
    %v2932 = vld [vmem:[#allocation6 + $0x3c8] sm:$0xff]
    %v2933 = vld [vmem:[#allocation6 + $0x3d0] sm:$0xf]
    %v2934 = vld [vmem:[#allocation6 + $0x3d4] sm:$0xff]
    %v2935 = vld [vmem:[#allocation6 + $0x3dc] sm:$0xff]
    %v2936 = vld [vmem:[#allocation6 + $0x3e4] sm:$0xf]
    %v2937 = vld [vmem:[#allocation6 + $0x3e8] sm:$0xff]
    %v2938 = vld [vmem:[#allocation6 + $0x3f0] sm:$0xff]
    %v2939 = vld [vmem:[#allocation6 + $0x3f8] sm:$0xf]
    %v2940 = vld [vmem:[#allocation6 + $0x3fc] sm:$0xff]
    %v2941 = vld [vmem:[#allocation6 + $0x404] sm:$0xff]
    %v2942 = vld [vmem:[#allocation6 + $0x40c] sm:$0xf]
    %v2943 = vld [vmem:[#allocation6 + $0x410] sm:$0xff]
    %v2944 = vld [vmem:[#allocation6 + $0x418] sm:$0xff]
    %v2945 = vld [vmem:[#allocation6 + $0x420] sm:$0xf]
    %v2946 = vld [vmem:[#allocation6 + $0x424] sm:$0xff]
    %v2947 = vld [vmem:[#allocation6 + $0x42c] sm:$0xff]
    %v2948 = vld [vmem:[#allocation6 + $0x434] sm:$0xf]
    %v2949 = vld [vmem:[#allocation6 + $0x438] sm:$0xff]
    %v2950 = vld [vmem:[#allocation6 + $0x440] sm:$0xff]
    %v2951 = vld [vmem:[#allocation6 + $0x448] sm:$0xf]
    %v2952 = vld [vmem:[#allocation6 + $0x44c] sm:$0xff]
    %v2953 = vld [vmem:[#allocation6 + $0x454] sm:$0xff]
    %v2954 = vld [vmem:[#allocation6 + $0x45c] sm:$0xf]
    %v2955 = vld [vmem:[#allocation6 + $0x460] sm:$0xff]
    %v2956 = vld [vmem:[#allocation6 + $0x468] sm:$0xff]
    %v2957 = vld [vmem:[#allocation6 + $0x470] sm:$0xf]
    %v2958 = vld [vmem:[#allocation6 + $0x474] sm:$0xff]
    %v2959 = vld [vmem:[#allocation6 + $0x47c] sm:$0xff]
    %v2960 = vld [vmem:[#allocation6 + $0x484] sm:$0xf]
    %v2961 = vld [vmem:[#allocation6 + $0x488] sm:$0xff]
    %v2962 = vld [vmem:[#allocation6 + $0x490] sm:$0xff]
    %v2963 = vld [vmem:[#allocation6 + $0x498] sm:$0xf]
    %v2964 = vld [vmem:[#allocation6 + $0x49c] sm:$0xff]
    %v2965 = vld [vmem:[#allocation6 + $0x4a4] sm:$0xff]
    %v2966 = vld [vmem:[#allocation6 + $0x4ac] sm:$0xf]
    %v2967 = vld [vmem:[#allocation6 + $0x4b0] sm:$0xff]
    %v2968 = vld [vmem:[#allocation6 + $0x4b8] sm:$0xff]
    %v2969 = vld [vmem:[#allocation6 + $0x4c0] sm:$0xf]
    %v2970 = vld [vmem:[#allocation6 + $0x4c4] sm:$0xff]
    %v2971 = vld [vmem:[#allocation6 + $0x4cc] sm:$0xff]
    %v2972 = vld [vmem:[#allocation6 + $0x4d4] sm:$0xf]
    %v2973 = vld [vmem:[#allocation6 + $0x4d8] sm:$0xff]
    %v2974 = vld [vmem:[#allocation6 + $0x4e0] sm:$0xff]
    %v2975 = vld [vmem:[#allocation6 + $0x4e8] sm:$0xf]
    %v2976 = vld [vmem:[#allocation6 + $0x4ec] sm:$0xff]
    %v2977 = vld [vmem:[#allocation6 + $0x4f4] sm:$0xff]
    %v2978 = vld [vmem:[#allocation6 + $0x4fc] sm:$0xf]
    %v2979 = vld [vmem:[#allocation6 + $0x500] sm:$0xff]
    %v2980 = vld [vmem:[#allocation6 + $0x508] sm:$0xff]
    %v2981 = vld [vmem:[#allocation6 + $0x510] sm:$0xf]
    %v2982 = vld [vmem:[#allocation6 + $0x514] sm:$0xff]
    %v2983 = vld [vmem:[#allocation6 + $0x51c] sm:$0xff]
    %v2984 = vld [vmem:[#allocation6 + $0x524] sm:$0xf]
    %v2985 = vld [vmem:[#allocation6 + $0x528] sm:$0xff]
    %v2986 = vld [vmem:[#allocation6 + $0x530] sm:$0xff]
    %v2987 = vld [vmem:[#allocation6 + $0x538] sm:$0xf]
    %v2988 = vld [vmem:[#allocation6 + $0x53c] sm:$0xff]
    %v2989 = vld [vmem:[#allocation6 + $0x544] sm:$0xff]
    %v2990 = vld [vmem:[#allocation6 + $0x54c] sm:$0xf]
    %v2991 = vld [vmem:[#allocation6 + $0x550] sm:$0xff]
    %v2992 = vld [vmem:[#allocation6 + $0x558] sm:$0xff]
    %v2993 = vld [vmem:[#allocation6 + $0x560] sm:$0xf]
    %v2994 = vld [vmem:[#allocation6 + $0x564] sm:$0xff]
    %v2995 = vld [vmem:[#allocation6 + $0x56c] sm:$0xff]
    %v2996 = vld [vmem:[#allocation6 + $0x574] sm:$0xf]
    %v2997 = vld [vmem:[#allocation6 + $0x578] sm:$0xff]
    %v2998 = vld [vmem:[#allocation6 + $0x580] sm:$0xff]
    %v2999 = vld [vmem:[#allocation6 + $0x588] sm:$0xf]
    %v3000 = vld [vmem:[#allocation6 + $0x58c] sm:$0xff]
    %v3001 = vld [vmem:[#allocation6 + $0x594] sm:$0xff]
    %v3002 = vld [vmem:[#allocation6 + $0x59c] sm:$0xf]
    %v3003 = vld [vmem:[#allocation6 + $0x5a0] sm:$0xff]
    %v3004 = vld [vmem:[#allocation6 + $0x5a8] sm:$0xff]
    %v3005 = vld [vmem:[#allocation6 + $0x5b0] sm:$0xf]
    %v3006 = vld [vmem:[#allocation6 + $0x5b4] sm:$0xff]
    %v3007 = vld [vmem:[#allocation6 + $0x5bc] sm:$0xff]
    %v3008 = vld [vmem:[#allocation6 + $0x5c4] sm:$0xf]
    %v3009 = vld [vmem:[#allocation6 + $0x5c8] sm:$0xff]
    %v3010 = vld [vmem:[#allocation6 + $0x5d0] sm:$0xff]
    %v3011 = vld [vmem:[#allocation6 + $0x5d8] sm:$0xf]
    %v3012 = vld [vmem:[#allocation6 + $0x5dc] sm:$0xff]
    %v3013 = vld [vmem:[#allocation6 + $0x5e4] sm:$0xff]
    %v3014 = vld [vmem:[#allocation6 + $0x5ec] sm:$0xf]
    %v3015 = vld [vmem:[#allocation6 + $0x5f0] sm:$0xff]
    %v3016 = vld [vmem:[#allocation6 + $0x5f8] sm:$0xff]
    %v3017 = vld [vmem:[#allocation6 + $0x600] sm:$0xf]
    %v3018 = vld [vmem:[#allocation6 + $0x604] sm:$0xff]
    %v3019 = vld [vmem:[#allocation6 + $0x60c] sm:$0xff]
    %v3020 = vld [vmem:[#allocation6 + $0x614] sm:$0xf]
    %v3021 = vld [vmem:[#allocation6 + $0x618] sm:$0xff]
    %v3022 = vld [vmem:[#allocation6 + $0x620] sm:$0xff]
    %v3023 = vld [vmem:[#allocation6 + $0x628] sm:$0xf]
    %v3024 = vld [vmem:[#allocation6 + $0x62c] sm:$0xff]
    %v3025 = vld [vmem:[#allocation6 + $0x634] sm:$0xff]
    %v3026 = vld [vmem:[#allocation6 + $0x63c] sm:$0xf]
    %v3027 = vld [vmem:[#allocation6 + $0x640] sm:$0xff]
    %v3028 = vld [vmem:[#allocation6 + $0x648] sm:$0xff]
    %v3029 = vld [vmem:[#allocation6 + $0x650] sm:$0xf]
    %v3030 = vld [vmem:[#allocation6 + $0x654] sm:$0xff]
    %v3031 = vld [vmem:[#allocation6 + $0x65c] sm:$0xff]
    %v3032 = vld [vmem:[#allocation6 + $0x664] sm:$0xf]
    %v3033 = vld [vmem:[#allocation6 + $0x668] sm:$0xff]
    %v3034 = vld [vmem:[#allocation6 + $0x670] sm:$0xff]
    %v3035 = vld [vmem:[#allocation6 + $0x678] sm:$0xf]
    %v3036 = vld [vmem:[#allocation6 + $0x67c] sm:$0xff]
    %v3037 = vld [vmem:[#allocation6 + $0x684] sm:$0xff]
    %v3038 = vld [vmem:[#allocation6 + $0x68c] sm:$0xf]
    %v3039 = vld [vmem:[#allocation6 + $0x690] sm:$0xff]
    %v3040 = vld [vmem:[#allocation6 + $0x698] sm:$0xff]
    %v3041 = vld [vmem:[#allocation6 + $0x6a0] sm:$0xf]
    %v3042 = vld [vmem:[#allocation6 + $0x6a4] sm:$0xff]
    %v3043 = vld [vmem:[#allocation6 + $0x6ac] sm:$0xff]
    %v3044 = vld [vmem:[#allocation6 + $0x6b4] sm:$0xf]
    %v3045 = vld [vmem:[#allocation6 + $0x6b8] sm:$0xff]
    %v3046 = vld [vmem:[#allocation6 + $0x6c0] sm:$0xff]
    %v3047 = vld [vmem:[#allocation6 + $0x6c8] sm:$0xf]
    %v3048 = vld [vmem:[#allocation6 + $0x6cc] sm:$0xff]
    %v3049 = vld [vmem:[#allocation6 + $0x6d4] sm:$0xff]
    %v3050 = vld [vmem:[#allocation6 + $0x6dc] sm:$0xf]
    %v3051 = vld [vmem:[#allocation6 + $0x6e0] sm:$0xff]
    %v3052 = vld [vmem:[#allocation6 + $0x6e8] sm:$0xff]
    %v3053 = vld [vmem:[#allocation6 + $0x6f0] sm:$0xf]
    %v3054 = vld [vmem:[#allocation6 + $0x6f4] sm:$0xff]
    %v3055 = vld [vmem:[#allocation6 + $0x6fc] sm:$0xff]
    %v3056 = vld [vmem:[#allocation6 + $0x704] sm:$0xf]
    %v3057 = vld [vmem:[#allocation6 + $0x708] sm:$0xff]
    %v3058 = vld [vmem:[#allocation6 + $0x710] sm:$0xff]
    %v3059 = vld [vmem:[#allocation6 + $0x718] sm:$0xf]
    %v3060 = vld [vmem:[#allocation6 + $0x71c] sm:$0xff]
    %v3061 = vld [vmem:[#allocation6 + $0x724] sm:$0xff]
    %v3062 = vld [vmem:[#allocation6 + $0x72c] sm:$0xf]
    %v3063 = vld [vmem:[#allocation6 + $0x730] sm:$0xff]
    %v3064 = vld [vmem:[#allocation6 + $0x738] sm:$0xff]
    %v3065 = vld [vmem:[#allocation6 + $0x740] sm:$0xf]
    %v3066 = vld [vmem:[#allocation6 + $0x744] sm:$0xff]
    %v3067 = vld [vmem:[#allocation6 + $0x74c] sm:$0xff]
    %v3068 = vld [vmem:[#allocation6 + $0x754] sm:$0xf]
    %v3069 = vld [vmem:[#allocation6 + $0x758] sm:$0xff]
    %v3070 = vld [vmem:[#allocation6 + $0x760] sm:$0xff]
    %v3071 = vld [vmem:[#allocation6 + $0x768] sm:$0xf]
    %v3072 = vld [vmem:[#allocation6 + $0x76c] sm:$0xff]
    %v3073 = vld [vmem:[#allocation6 + $0x774] sm:$0xff]
    %v3074 = vld [vmem:[#allocation6 + $0x77c] sm:$0xf]
    %v3075 = vld [vmem:[#allocation7] sm:$0x1f]
    %v3076 = vpack.c.bf16 %v2781, %v2781
    %v3077 = vpack.c.bf16 %v2782, %v2782
    %v3078 = vpack.c.bf16 %v2783, %v2783
    %v3079 = vpack.c.bf16 %v2784, %v2784
    %v3080 = vpack.c.bf16 %v2785, %v2785
    %v3081 = vpack.c.bf16 %v2786, %v2786
    %v3083 = vlaneseq
    %v3084 = vshrl.u32 %v3083, 7
    %v3085 = vsub.s32 0, %v3084
    %v3086 = vrot.slane %v3075, %v3085
    %v3087 = vlaneseq
    %v3088 = vshrl.u32 %v3087, 7
    %v3089 = vsub.s32 1, %v3088
    %v3090 = vrot.slane %v3075, %v3089
    %v3091 = vlaneseq
    %v3092 = vshrl.u32 %v3091, 7
    %v3093 = vsub.s32 2, %v3092
    %v3094 = vrot.slane %v3075, %v3093
    %v3095 = vlaneseq
    %v3096 = vshrl.u32 %v3095, 7
    %v3097 = vsub.s32 3, %v3096
    %v3098 = vrot.slane %v3075, %v3097
    %v3099 = vlaneseq
    %v3100 = vshrl.u32 %v3099, 7
    %v3101 = vsub.s32 4, %v3100
    %v3102 = vrot.slane %v3075, %v3101
    %v3396 = vunpack.c.l.b16 %v2787
    %v3397 = vunpack.c.h.b16 %v2787
    %v3398 = vunpack.c.l.b16 %v2788
    %v3399 = vunpack.c.h.b16 %v2788
    %v3400 = vunpack.c.l.b16 %v2789
    %v3401 = vunpack.c.l.b16 %v2790
    %v3402 = vunpack.c.h.b16 %v2790
    %v3403 = vunpack.c.l.b16 %v2791
    %v3404 = vunpack.c.h.b16 %v2791
    %v3405 = vunpack.c.l.b16 %v2792
    %v3406 = vunpack.c.l.b16 %v2793
    %v3407 = vunpack.c.h.b16 %v2793
    %v3408 = vunpack.c.l.b16 %v2794
    %v3409 = vunpack.c.h.b16 %v2794
    %v3410 = vunpack.c.l.b16 %v2795
    %v3411 = vunpack.c.l.b16 %v2796
    %v3412 = vunpack.c.h.b16 %v2796
    %v3413 = vunpack.c.l.b16 %v2797
    %v3414 = vunpack.c.h.b16 %v2797
    %v3415 = vunpack.c.l.b16 %v2798
    %v3416 = vunpack.c.l.b16 %v2799
    %v3417 = vunpack.c.h.b16 %v2799
    %v3418 = vunpack.c.l.b16 %v2800
    %v3419 = vunpack.c.h.b16 %v2800
    %v3420 = vunpack.c.l.b16 %v2801
    %v3421 = vunpack.c.l.b16 %v2802
    %v3422 = vunpack.c.h.b16 %v2802
    %v3423 = vunpack.c.l.b16 %v2803
    %v3424 = vunpack.c.h.b16 %v2803
    %v3425 = vunpack.c.l.b16 %v2804
    %v3426 = vunpack.c.l.b16 %v2805
    %v3427 = vunpack.c.h.b16 %v2805
    %v3428 = vunpack.c.l.b16 %v2806
    %v3429 = vunpack.c.h.b16 %v2806
    %v3430 = vunpack.c.l.b16 %v2807
    %v3431 = vunpack.c.l.b16 %v2808
    %v3432 = vunpack.c.h.b16 %v2808
    %v3433 = vunpack.c.l.b16 %v2809
    %v3434 = vunpack.c.h.b16 %v2809
    %v3435 = vunpack.c.l.b16 %v2810
    %v3436 = vunpack.c.l.b16 %v2811
    %v3437 = vunpack.c.h.b16 %v2811
    %v3438 = vunpack.c.l.b16 %v2812
    %v3439 = vunpack.c.h.b16 %v2812
    %v3440 = vunpack.c.l.b16 %v2813
    %v3441 = vunpack.c.l.b16 %v2814
    %v3442 = vunpack.c.h.b16 %v2814
    %v3443 = vunpack.c.l.b16 %v2815
    %v3444 = vunpack.c.h.b16 %v2815
    %v3445 = vunpack.c.l.b16 %v2816
    %v3446 = vunpack.c.l.b16 %v2817
    %v3447 = vunpack.c.h.b16 %v2817
    %v3448 = vunpack.c.l.b16 %v2818
    %v3449 = vunpack.c.h.b16 %v2818
    %v3450 = vunpack.c.l.b16 %v2819
    %v3451 = vunpack.c.l.b16 %v2820
    %v3452 = vunpack.c.h.b16 %v2820
    %v3453 = vunpack.c.l.b16 %v2821
    %v3454 = vunpack.c.h.b16 %v2821
    %v3455 = vunpack.c.l.b16 %v2822
    %v3456 = vunpack.c.l.b16 %v2823
    %v3457 = vunpack.c.h.b16 %v2823
    %v3458 = vunpack.c.l.b16 %v2824
    %v3459 = vunpack.c.h.b16 %v2824
    %v3460 = vunpack.c.l.b16 %v2825
    %v3461 = vunpack.c.l.b16 %v2826
    %v3462 = vunpack.c.h.b16 %v2826
    %v3463 = vunpack.c.l.b16 %v2827
    %v3464 = vunpack.c.h.b16 %v2827
    %v3465 = vunpack.c.l.b16 %v2828
    %v3466 = vunpack.c.l.b16 %v2829
    %v3467 = vunpack.c.h.b16 %v2829
    %v3468 = vunpack.c.l.b16 %v2830
    %v3469 = vunpack.c.h.b16 %v2830
    %v3470 = vunpack.c.l.b16 %v2831
    %v3471 = vunpack.c.l.b16 %v2832
    %v3472 = vunpack.c.h.b16 %v2832
    %v3473 = vunpack.c.l.b16 %v2833
    %v3474 = vunpack.c.h.b16 %v2833
    %v3475 = vunpack.c.l.b16 %v2834
    %v3476 = vunpack.c.l.b16 %v2835
    %v3477 = vunpack.c.h.b16 %v2835
    %v3478 = vunpack.c.l.b16 %v2836
    %v3479 = vunpack.c.h.b16 %v2836
    %v3480 = vunpack.c.l.b16 %v2837
    %v3481 = vunpack.c.l.b16 %v2838
    %v3482 = vunpack.c.h.b16 %v2838
    %v3483 = vunpack.c.l.b16 %v2839
    %v3484 = vunpack.c.h.b16 %v2839
    %v3485 = vunpack.c.l.b16 %v2840
    %v3486 = vunpack.c.l.b16 %v2841
    %v3487 = vunpack.c.h.b16 %v2841
    %v3488 = vunpack.c.l.b16 %v2842
    %v3489 = vunpack.c.h.b16 %v2842
    %v3490 = vunpack.c.l.b16 %v2843
    %v3491 = vunpack.c.l.b16 %v2844
    %v3492 = vunpack.c.h.b16 %v2844
    %v3493 = vunpack.c.l.b16 %v2845
    %v3494 = vunpack.c.h.b16 %v2845
    %v3495 = vunpack.c.l.b16 %v2846
    %v3496 = vunpack.c.l.b16 %v2847
    %v3497 = vunpack.c.h.b16 %v2847
    %v3498 = vunpack.c.l.b16 %v2848
    %v3499 = vunpack.c.h.b16 %v2848
    %v3500 = vunpack.c.l.b16 %v2849
    %v3501 = vunpack.c.l.b16 %v2850
    %v3502 = vunpack.c.h.b16 %v2850
    %v3503 = vunpack.c.l.b16 %v2851
    %v3504 = vunpack.c.h.b16 %v2851
    %v3505 = vunpack.c.l.b16 %v2852
    %v3506 = vunpack.c.l.b16 %v2853
    %v3507 = vunpack.c.h.b16 %v2853
    %v3508 = vunpack.c.l.b16 %v2854
    %v3509 = vunpack.c.h.b16 %v2854
    %v3510 = vunpack.c.l.b16 %v2855
    %v3511 = vunpack.c.l.b16 %v2856
    %v3512 = vunpack.c.h.b16 %v2856
    %v3513 = vunpack.c.l.b16 %v2857
    %v3514 = vunpack.c.h.b16 %v2857
    %v3515 = vunpack.c.l.b16 %v2858
    %v3516 = vunpack.c.l.b16 %v2859
    %v3517 = vunpack.c.h.b16 %v2859
    %v3518 = vunpack.c.l.b16 %v2860
    %v3519 = vunpack.c.h.b16 %v2860
    %v3520 = vunpack.c.l.b16 %v2861
    %v3521 = vunpack.c.l.b16 %v2862
    %v3522 = vunpack.c.h.b16 %v2862
    %v3523 = vunpack.c.l.b16 %v2863
    %v3524 = vunpack.c.h.b16 %v2863
    %v3525 = vunpack.c.l.b16 %v2864
    %v3526 = vunpack.c.l.b16 %v2865
    %v3527 = vunpack.c.h.b16 %v2865
    %v3528 = vunpack.c.l.b16 %v2866
    %v3529 = vunpack.c.h.b16 %v2866
    %v3530 = vunpack.c.l.b16 %v2867
    %v3531 = vunpack.c.l.b16 %v2868
    %v3532 = vunpack.c.h.b16 %v2868
    %v3533 = vunpack.c.l.b16 %v2869
    %v3534 = vunpack.c.h.b16 %v2869
    %v3535 = vunpack.c.l.b16 %v2870
    %v3536 = vunpack.c.l.b16 %v2871
    %v3537 = vunpack.c.h.b16 %v2871
    %v3538 = vunpack.c.l.b16 %v2872
    %v3539 = vunpack.c.h.b16 %v2872
    %v3540 = vunpack.c.l.b16 %v2873
    %v3541 = vunpack.c.l.b16 %v2874
    %v3542 = vunpack.c.h.b16 %v2874
    %v3543 = vunpack.c.l.b16 %v2875
    %v3544 = vunpack.c.h.b16 %v2875
    %v3545 = vunpack.c.l.b16 %v2876
    %v3546 = vunpack.c.l.b16 %v2877
    %v3547 = vunpack.c.h.b16 %v2877
    %v3548 = vunpack.c.l.b16 %v2878
    %v3549 = vunpack.c.h.b16 %v2878
    %v3550 = vunpack.c.l.b16 %v2879
    %v3551 = vunpack.c.l.b16 %v2880
    %v3552 = vunpack.c.h.b16 %v2880
    %v3553 = vunpack.c.l.b16 %v2881
    %v3554 = vunpack.c.h.b16 %v2881
    %v3555 = vunpack.c.l.b16 %v2882
    %v3556 = vunpack.c.l.b16 %v2883
    %v3557 = vunpack.c.h.b16 %v2883
    %v3558 = vunpack.c.l.b16 %v2884
    %v3559 = vunpack.c.h.b16 %v2884
    %v3560 = vunpack.c.l.b16 %v2885
    %v3561 = vunpack.c.l.b16 %v2886
    %v3562 = vunpack.c.h.b16 %v2886
    %v3563 = vunpack.c.l.b16 %v2887
    %v3564 = vunpack.c.h.b16 %v2887
    %v3565 = vunpack.c.l.b16 %v2888
    %v3566 = vunpack.c.l.b16 %v2889
    %v3567 = vunpack.c.h.b16 %v2889
    %v3568 = vunpack.c.l.b16 %v2890
    %v3569 = vunpack.c.h.b16 %v2890
    %v3570 = vunpack.c.l.b16 %v2891
    %v3571 = vunpack.c.l.b16 %v2892
    %v3572 = vunpack.c.h.b16 %v2892
    %v3573 = vunpack.c.l.b16 %v2893
    %v3574 = vunpack.c.h.b16 %v2893
    %v3575 = vunpack.c.l.b16 %v2894
    %v3576 = vunpack.c.l.b16 %v2895
    %v3577 = vunpack.c.h.b16 %v2895
    %v3578 = vunpack.c.l.b16 %v2896
    %v3579 = vunpack.c.h.b16 %v2896
    %v3580 = vunpack.c.l.b16 %v2897
    %v3581 = vunpack.c.l.b16 %v2898
    %v3582 = vunpack.c.h.b16 %v2898
    %v3583 = vunpack.c.l.b16 %v2899
    %v3584 = vunpack.c.h.b16 %v2899
    %v3585 = vunpack.c.l.b16 %v2900
    %v3586 = vunpack.c.l.b16 %v2901
    %v3587 = vunpack.c.h.b16 %v2901
    %v3588 = vunpack.c.l.b16 %v2902
    %v3589 = vunpack.c.h.b16 %v2902
    %v3590 = vunpack.c.l.b16 %v2903
    %v3591 = vunpack.c.l.b16 %v2904
    %v3592 = vunpack.c.h.b16 %v2904
    %v3593 = vunpack.c.l.b16 %v2905
    %v3594 = vunpack.c.h.b16 %v2905
    %v3595 = vunpack.c.l.b16 %v2906
    %v3596 = vunpack.c.l.b16 %v2907
    %v3597 = vunpack.c.h.b16 %v2907
    %v3598 = vunpack.c.l.b16 %v2908
    %v3599 = vunpack.c.h.b16 %v2908
    %v3600 = vunpack.c.l.b16 %v2909
    %v3601 = vunpack.c.l.b16 %v2910
    %v3602 = vunpack.c.h.b16 %v2910
    %v3603 = vunpack.c.l.b16 %v2911
    %v3604 = vunpack.c.h.b16 %v2911
    %v3605 = vunpack.c.l.b16 %v2912
    %v3606 = vunpack.c.l.b16 %v2913
    %v3607 = vunpack.c.h.b16 %v2913
    %v3608 = vunpack.c.l.b16 %v2914
    %v3609 = vunpack.c.h.b16 %v2914
    %v3610 = vunpack.c.l.b16 %v2915
    %v3611 = vunpack.c.l.b16 %v2916
    %v3612 = vunpack.c.h.b16 %v2916
    %v3613 = vunpack.c.l.b16 %v2917
    %v3614 = vunpack.c.h.b16 %v2917
    %v3615 = vunpack.c.l.b16 %v2918
    %v3616 = vunpack.c.l.b16 %v2919
    %v3617 = vunpack.c.h.b16 %v2919
    %v3618 = vunpack.c.l.b16 %v2920
    %v3619 = vunpack.c.h.b16 %v2920
    %v3620 = vunpack.c.l.b16 %v2921
    %v3621 = vunpack.c.l.b16 %v2922
    %v3622 = vunpack.c.h.b16 %v2922
    %v3623 = vunpack.c.l.b16 %v2923
    %v3624 = vunpack.c.h.b16 %v2923
    %v3625 = vunpack.c.l.b16 %v2924
    %v3626 = vunpack.c.l.b16 %v2925
    %v3627 = vunpack.c.h.b16 %v2925
    %v3628 = vunpack.c.l.b16 %v2926
    %v3629 = vunpack.c.h.b16 %v2926
    %v3630 = vunpack.c.l.b16 %v2927
    %v3631 = vunpack.c.l.b16 %v2928
    %v3632 = vunpack.c.h.b16 %v2928
    %v3633 = vunpack.c.l.b16 %v2929
    %v3634 = vunpack.c.h.b16 %v2929
    %v3635 = vunpack.c.l.b16 %v2930
    %v3636 = vunpack.c.l.b16 %v2931
    %v3637 = vunpack.c.h.b16 %v2931
    %v3638 = vunpack.c.l.b16 %v2932
    %v3639 = vunpack.c.h.b16 %v2932
    %v3640 = vunpack.c.l.b16 %v2933
    %v3641 = vunpack.c.l.b16 %v2934
    %v3642 = vunpack.c.h.b16 %v2934
    %v3643 = vunpack.c.l.b16 %v2935
    %v3644 = vunpack.c.h.b16 %v2935
    %v3645 = vunpack.c.l.b16 %v2936
    %v3646 = vunpack.c.l.b16 %v2937
    %v3647 = vunpack.c.h.b16 %v2937
    %v3648 = vunpack.c.l.b16 %v2938
    %v3649 = vunpack.c.h.b16 %v2938
    %v3650 = vunpack.c.l.b16 %v2939
    %v3651 = vunpack.c.l.b16 %v2940
    %v3652 = vunpack.c.h.b16 %v2940
    %v3653 = vunpack.c.l.b16 %v2941
    %v3654 = vunpack.c.h.b16 %v2941
    %v3655 = vunpack.c.l.b16 %v2942
    %v3656 = vunpack.c.l.b16 %v2943
    %v3657 = vunpack.c.h.b16 %v2943
    %v3658 = vunpack.c.l.b16 %v2944
    %v3659 = vunpack.c.h.b16 %v2944
    %v3660 = vunpack.c.l.b16 %v2945
    %v3661 = vunpack.c.l.b16 %v2946
    %v3662 = vunpack.c.h.b16 %v2946
    %v3663 = vunpack.c.l.b16 %v2947
    %v3664 = vunpack.c.h.b16 %v2947
    %v3665 = vunpack.c.l.b16 %v2948
    %v3666 = vunpack.c.l.b16 %v2949
    %v3667 = vunpack.c.h.b16 %v2949
    %v3668 = vunpack.c.l.b16 %v2950
    %v3669 = vunpack.c.h.b16 %v2950
    %v3670 = vunpack.c.l.b16 %v2951
    %v3671 = vunpack.c.l.b16 %v2952
    %v3672 = vunpack.c.h.b16 %v2952
    %v3673 = vunpack.c.l.b16 %v2953
    %v3674 = vunpack.c.h.b16 %v2953
    %v3675 = vunpack.c.l.b16 %v2954
    %v3676 = vunpack.c.l.b16 %v2955
    %v3677 = vunpack.c.h.b16 %v2955
    %v3678 = vunpack.c.l.b16 %v2956
    %v3679 = vunpack.c.h.b16 %v2956
    %v3680 = vunpack.c.l.b16 %v2957
    %v3681 = vunpack.c.l.b16 %v2958
    %v3682 = vunpack.c.h.b16 %v2958
    %v3683 = vunpack.c.l.b16 %v2959
    %v3684 = vunpack.c.h.b16 %v2959
    %v3685 = vunpack.c.l.b16 %v2960
    %v3686 = vunpack.c.l.b16 %v2961
    %v3687 = vunpack.c.h.b16 %v2961
    %v3688 = vunpack.c.l.b16 %v2962
    %v3689 = vunpack.c.h.b16 %v2962
    %v3690 = vunpack.c.l.b16 %v2963
    %v3691 = vunpack.c.l.b16 %v2964
    %v3692 = vunpack.c.h.b16 %v2964
    %v3693 = vunpack.c.l.b16 %v2965
    %v3694 = vunpack.c.h.b16 %v2965
    %v3695 = vunpack.c.l.b16 %v2966
    %v3696 = vunpack.c.l.b16 %v2967
    %v3697 = vunpack.c.h.b16 %v2967
    %v3698 = vunpack.c.l.b16 %v2968
    %v3699 = vunpack.c.h.b16 %v2968
    %v3700 = vunpack.c.l.b16 %v2969
    %v3701 = vunpack.c.l.b16 %v2970
    %v3702 = vunpack.c.h.b16 %v2970
    %v3703 = vunpack.c.l.b16 %v2971
    %v3704 = vunpack.c.h.b16 %v2971
    %v3705 = vunpack.c.l.b16 %v2972
    %v3706 = vunpack.c.l.b16 %v2973
    %v3707 = vunpack.c.h.b16 %v2973
    %v3708 = vunpack.c.l.b16 %v2974
    %v3709 = vunpack.c.h.b16 %v2974
    %v3710 = vunpack.c.l.b16 %v2975
    %v3711 = vunpack.c.l.b16 %v2976
    %v3712 = vunpack.c.h.b16 %v2976
    %v3713 = vunpack.c.l.b16 %v2977
    %v3714 = vunpack.c.h.b16 %v2977
    %v3715 = vunpack.c.l.b16 %v2978
    %v3716 = vunpack.c.l.b16 %v2979
    %v3717 = vunpack.c.h.b16 %v2979
    %v3718 = vunpack.c.l.b16 %v2980
    %v3719 = vunpack.c.h.b16 %v2980
    %v3720 = vunpack.c.l.b16 %v2981
    %v3721 = vunpack.c.l.b16 %v2982
    %v3722 = vunpack.c.h.b16 %v2982
    %v3723 = vunpack.c.l.b16 %v2983
    %v3724 = vunpack.c.h.b16 %v2983
    %v3725 = vunpack.c.l.b16 %v2984
    %v3726 = vunpack.c.l.b16 %v2985
    %v3727 = vunpack.c.h.b16 %v2985
    %v3728 = vunpack.c.l.b16 %v2986
    %v3729 = vunpack.c.h.b16 %v2986
    %v3730 = vunpack.c.l.b16 %v2987
    %v3731 = vunpack.c.l.b16 %v2988
    %v3732 = vunpack.c.h.b16 %v2988
    %v3733 = vunpack.c.l.b16 %v2989
    %v3734 = vunpack.c.h.b16 %v2989
    %v3735 = vunpack.c.l.b16 %v2990
    %v3736 = vunpack.c.l.b16 %v2991
    %v3737 = vunpack.c.h.b16 %v2991
    %v3738 = vunpack.c.l.b16 %v2992
    %v3739 = vunpack.c.h.b16 %v2992
    %v3740 = vunpack.c.l.b16 %v2993
    %v3741 = vunpack.c.l.b16 %v2994
    %v3742 = vunpack.c.h.b16 %v2994
    %v3743 = vunpack.c.l.b16 %v2995
    %v3744 = vunpack.c.h.b16 %v2995
    %v3745 = vunpack.c.l.b16 %v2996
    %v3746 = vunpack.c.l.b16 %v2997
    %v3747 = vunpack.c.h.b16 %v2997
    %v3748 = vunpack.c.l.b16 %v2998
    %v3749 = vunpack.c.h.b16 %v2998
    %v3750 = vunpack.c.l.b16 %v2999
    %v3751 = vunpack.c.l.b16 %v3000
    %v3752 = vunpack.c.h.b16 %v3000
    %v3753 = vunpack.c.l.b16 %v3001
    %v3754 = vunpack.c.h.b16 %v3001
    %v3755 = vunpack.c.l.b16 %v3002
    %v3756 = vunpack.c.l.b16 %v3003
    %v3757 = vunpack.c.h.b16 %v3003
    %v3758 = vunpack.c.l.b16 %v3004
    %v3759 = vunpack.c.h.b16 %v3004
    %v3760 = vunpack.c.l.b16 %v3005
    %v3761 = vunpack.c.l.b16 %v3006
    %v3762 = vunpack.c.h.b16 %v3006
    %v3763 = vunpack.c.l.b16 %v3007
    %v3764 = vunpack.c.h.b16 %v3007
    %v3765 = vunpack.c.l.b16 %v3008
    %v3766 = vunpack.c.l.b16 %v3009
    %v3767 = vunpack.c.h.b16 %v3009
    %v3768 = vunpack.c.l.b16 %v3010
    %v3769 = vunpack.c.h.b16 %v3010
    %v3770 = vunpack.c.l.b16 %v3011
    %v3771 = vunpack.c.l.b16 %v3012
    %v3772 = vunpack.c.h.b16 %v3012
    %v3773 = vunpack.c.l.b16 %v3013
    %v3774 = vunpack.c.h.b16 %v3013
    %v3775 = vunpack.c.l.b16 %v3014
    %v3776 = vunpack.c.l.b16 %v3015
    %v3777 = vunpack.c.h.b16 %v3015
    %v3778 = vunpack.c.l.b16 %v3016
    %v3779 = vunpack.c.h.b16 %v3016
    %v3780 = vunpack.c.l.b16 %v3017
    %v3781 = vunpack.c.l.b16 %v3018
    %v3782 = vunpack.c.h.b16 %v3018
    %v3783 = vunpack.c.l.b16 %v3019
    %v3784 = vunpack.c.h.b16 %v3019
    %v3785 = vunpack.c.l.b16 %v3020
    %v3786 = vunpack.c.l.b16 %v3021
    %v3787 = vunpack.c.h.b16 %v3021
    %v3788 = vunpack.c.l.b16 %v3022
    %v3789 = vunpack.c.h.b16 %v3022
    %v3790 = vunpack.c.l.b16 %v3023
    %v3791 = vunpack.c.l.b16 %v3024
    %v3792 = vunpack.c.h.b16 %v3024
    %v3793 = vunpack.c.l.b16 %v3025
    %v3794 = vunpack.c.h.b16 %v3025
    %v3795 = vunpack.c.l.b16 %v3026
    %v3796 = vunpack.c.l.b16 %v3027
    %v3797 = vunpack.c.h.b16 %v3027
    %v3798 = vunpack.c.l.b16 %v3028
    %v3799 = vunpack.c.h.b16 %v3028
    %v3800 = vunpack.c.l.b16 %v3029
    %v3801 = vunpack.c.l.b16 %v3030
    %v3802 = vunpack.c.h.b16 %v3030
    %v3803 = vunpack.c.l.b16 %v3031
    %v3804 = vunpack.c.h.b16 %v3031
    %v3805 = vunpack.c.l.b16 %v3032
    %v3806 = vunpack.c.l.b16 %v3033
    %v3807 = vunpack.c.h.b16 %v3033
    %v3808 = vunpack.c.l.b16 %v3034
    %v3809 = vunpack.c.h.b16 %v3034
    %v3810 = vunpack.c.l.b16 %v3035
    %v3811 = vunpack.c.l.b16 %v3036
    %v3812 = vunpack.c.h.b16 %v3036
    %v3813 = vunpack.c.l.b16 %v3037
    %v3814 = vunpack.c.h.b16 %v3037
    %v3815 = vunpack.c.l.b16 %v3038
    %v3816 = vunpack.c.l.b16 %v3039
    %v3817 = vunpack.c.h.b16 %v3039
    %v3818 = vunpack.c.l.b16 %v3040
    %v3819 = vunpack.c.h.b16 %v3040
    %v3820 = vunpack.c.l.b16 %v3041
    %v3821 = vunpack.c.l.b16 %v3042
    %v3822 = vunpack.c.h.b16 %v3042
    %v3823 = vunpack.c.l.b16 %v3043
    %v3824 = vunpack.c.h.b16 %v3043
    %v3825 = vunpack.c.l.b16 %v3044
    %v3826 = vunpack.c.l.b16 %v3045
    %v3827 = vunpack.c.h.b16 %v3045
    %v3828 = vunpack.c.l.b16 %v3046
    %v3829 = vunpack.c.h.b16 %v3046
    %v3830 = vunpack.c.l.b16 %v3047
    %v3831 = vunpack.c.l.b16 %v3048
    %v3832 = vunpack.c.h.b16 %v3048
    %v3833 = vunpack.c.l.b16 %v3049
    %v3834 = vunpack.c.h.b16 %v3049
    %v3835 = vunpack.c.l.b16 %v3050
    %v3836 = vunpack.c.l.b16 %v3051
    %v3837 = vunpack.c.h.b16 %v3051
    %v3838 = vunpack.c.l.b16 %v3052
    %v3839 = vunpack.c.h.b16 %v3052
    %v3840 = vunpack.c.l.b16 %v3053
    %v3841 = vunpack.c.l.b16 %v3054
    %v3842 = vunpack.c.h.b16 %v3054
    %v3843 = vunpack.c.l.b16 %v3055
    %v3844 = vunpack.c.h.b16 %v3055
    %v3845 = vunpack.c.l.b16 %v3056
    %v3846 = vunpack.c.l.b16 %v3057
    %v3847 = vunpack.c.h.b16 %v3057
    %v3848 = vunpack.c.l.b16 %v3058
    %v3849 = vunpack.c.h.b16 %v3058
    %v3850 = vunpack.c.l.b16 %v3059
    %v3851 = vunpack.c.l.b16 %v3060
    %v3852 = vunpack.c.h.b16 %v3060
    %v3853 = vunpack.c.l.b16 %v3061
    %v3854 = vunpack.c.h.b16 %v3061
    %v3855 = vunpack.c.l.b16 %v3062
    %v3856 = vunpack.c.l.b16 %v3063
    %v3857 = vunpack.c.h.b16 %v3063
    %v3858 = vunpack.c.l.b16 %v3064
    %v3859 = vunpack.c.h.b16 %v3064
    %v3860 = vunpack.c.l.b16 %v3065
    %v3861 = vunpack.c.l.b16 %v3066
    %v3862 = vunpack.c.h.b16 %v3066
    %v3863 = vunpack.c.l.b16 %v3067
    %v3864 = vunpack.c.h.b16 %v3067
    %v3865 = vunpack.c.l.b16 %v3068
    %v3866 = vunpack.c.l.b16 %v3069
    %v3867 = vunpack.c.h.b16 %v3069
    %v3868 = vunpack.c.l.b16 %v3070
    %v3869 = vunpack.c.h.b16 %v3070
    %v3870 = vunpack.c.l.b16 %v3071
    %v3871 = vunpack.c.l.b16 %v3072
    %v3872 = vunpack.c.h.b16 %v3072
    %v3873 = vunpack.c.l.b16 %v3073
    %v3874 = vunpack.c.h.b16 %v3073
    %v3875 = vunpack.c.l.b16 %v3074
    %v3876 = vpack.c.b16 %v3401, %v3396
    %v3877 = vpack.c.b16 %v3402, %v3397
    %v3878 = vpack.c.b16 %v3403, %v3398
    %v3879 = vpack.c.b16 %v3404, %v3399
    %v3880 = vpack.c.b16 %v3405, %v3400
    %v3881 = vpack.c.b16 %v3411, %v3406
    %v3882 = vpack.c.b16 %v3412, %v3407
    %v3883 = vpack.c.b16 %v3413, %v3408
    %v3884 = vpack.c.b16 %v3414, %v3409
    %v3885 = vpack.c.b16 %v3415, %v3410
    %v3886 = vpack.c.b16 %v3421, %v3416
    %v3887 = vpack.c.b16 %v3422, %v3417
    %v3888 = vpack.c.b16 %v3423, %v3418
    %v3889 = vpack.c.b16 %v3424, %v3419
    %v3890 = vpack.c.b16 %v3425, %v3420
    %v3891 = vpack.c.b16 %v3431, %v3426
    %v3892 = vpack.c.b16 %v3432, %v3427
    %v3893 = vpack.c.b16 %v3433, %v3428
    %v3894 = vpack.c.b16 %v3434, %v3429
    %v3895 = vpack.c.b16 %v3435, %v3430
    %v3896 = vpack.c.b16 %v3441, %v3436
    %v3897 = vpack.c.b16 %v3442, %v3437
    %v3898 = vpack.c.b16 %v3443, %v3438
    %v3899 = vpack.c.b16 %v3444, %v3439
    %v3900 = vpack.c.b16 %v3445, %v3440
    %v3901 = vpack.c.b16 %v3451, %v3446
    %v3902 = vpack.c.b16 %v3452, %v3447
    %v3903 = vpack.c.b16 %v3453, %v3448
    %v3904 = vpack.c.b16 %v3454, %v3449
    %v3905 = vpack.c.b16 %v3455, %v3450
    %v3906 = vpack.c.b16 %v3461, %v3456
    %v3907 = vpack.c.b16 %v3462, %v3457
    %v3908 = vpack.c.b16 %v3463, %v3458
    %v3909 = vpack.c.b16 %v3464, %v3459
    %v3910 = vpack.c.b16 %v3465, %v3460
    %v3911 = vpack.c.b16 %v3471, %v3466
    %v3912 = vpack.c.b16 %v3472, %v3467
    %v3913 = vpack.c.b16 %v3473, %v3468
    %v3914 = vpack.c.b16 %v3474, %v3469
    %v3915 = vpack.c.b16 %v3475, %v3470
    %v3916 = vpack.c.b16 %v3481, %v3476
    %v3917 = vpack.c.b16 %v3482, %v3477
    %v3918 = vpack.c.b16 %v3483, %v3478
    %v3919 = vpack.c.b16 %v3484, %v3479
    %v3920 = vpack.c.b16 %v3485, %v3480
    %v3921 = vpack.c.b16 %v3491, %v3486
    %v3922 = vpack.c.b16 %v3492, %v3487
    %v3923 = vpack.c.b16 %v3493, %v3488
    %v3924 = vpack.c.b16 %v3494, %v3489
    %v3925 = vpack.c.b16 %v3495, %v3490
    %v3926 = vpack.c.b16 %v3501, %v3496
    %v3927 = vpack.c.b16 %v3502, %v3497
    %v3928 = vpack.c.b16 %v3503, %v3498
    %v3929 = vpack.c.b16 %v3504, %v3499
    %v3930 = vpack.c.b16 %v3505, %v3500
    %v3931 = vpack.c.b16 %v3511, %v3506
    %v3932 = vpack.c.b16 %v3512, %v3507
    %v3933 = vpack.c.b16 %v3513, %v3508
    %v3934 = vpack.c.b16 %v3514, %v3509
    %v3935 = vpack.c.b16 %v3515, %v3510
    %v3936 = vpack.c.b16 %v3521, %v3516
    %v3937 = vpack.c.b16 %v3522, %v3517
    %v3938 = vpack.c.b16 %v3523, %v3518
    %v3939 = vpack.c.b16 %v3524, %v3519
    %v3940 = vpack.c.b16 %v3525, %v3520
    %v3941 = vpack.c.b16 %v3531, %v3526
    %v3942 = vpack.c.b16 %v3532, %v3527
    %v3943 = vpack.c.b16 %v3533, %v3528
    %v3944 = vpack.c.b16 %v3534, %v3529
    %v3945 = vpack.c.b16 %v3535, %v3530
    %v3946 = vpack.c.b16 %v3541, %v3536
    %v3947 = vpack.c.b16 %v3542, %v3537
    %v3948 = vpack.c.b16 %v3543, %v3538
    %v3949 = vpack.c.b16 %v3544, %v3539
    %v3950 = vpack.c.b16 %v3545, %v3540
    %v3951 = vpack.c.b16 %v3551, %v3546
    %v3952 = vpack.c.b16 %v3552, %v3547
    %v3953 = vpack.c.b16 %v3553, %v3548
    %v3954 = vpack.c.b16 %v3554, %v3549
    %v3955 = vpack.c.b16 %v3555, %v3550
    %v3956 = vpack.c.b16 %v3561, %v3556
    %v3957 = vpack.c.b16 %v3562, %v3557
    %v3958 = vpack.c.b16 %v3563, %v3558
    %v3959 = vpack.c.b16 %v3564, %v3559
    %v3960 = vpack.c.b16 %v3565, %v3560
    %v3961 = vpack.c.b16 %v3571, %v3566
    %v3962 = vpack.c.b16 %v3572, %v3567
    %v3963 = vpack.c.b16 %v3573, %v3568
    %v3964 = vpack.c.b16 %v3574, %v3569
    %v3965 = vpack.c.b16 %v3575, %v3570
    %v3966 = vpack.c.b16 %v3581, %v3576
    %v3967 = vpack.c.b16 %v3582, %v3577
    %v3968 = vpack.c.b16 %v3583, %v3578
    %v3969 = vpack.c.b16 %v3584, %v3579
    %v3970 = vpack.c.b16 %v3585, %v3580
    %v3971 = vpack.c.b16 %v3591, %v3586
    %v3972 = vpack.c.b16 %v3592, %v3587
    %v3973 = vpack.c.b16 %v3593, %v3588
    %v3974 = vpack.c.b16 %v3594, %v3589
    %v3975 = vpack.c.b16 %v3595, %v3590
    %v3976 = vpack.c.b16 %v3601, %v3596
    %v3977 = vpack.c.b16 %v3602, %v3597
    %v3978 = vpack.c.b16 %v3603, %v3598
    %v3979 = vpack.c.b16 %v3604, %v3599
    %v3980 = vpack.c.b16 %v3605, %v3600
    %v3981 = vpack.c.b16 %v3611, %v3606
    %v3982 = vpack.c.b16 %v3612, %v3607
    %v3983 = vpack.c.b16 %v3613, %v3608
    %v3984 = vpack.c.b16 %v3614, %v3609
    %v3985 = vpack.c.b16 %v3615, %v3610
    %v3986 = vpack.c.b16 %v3621, %v3616
    %v3987 = vpack.c.b16 %v3622, %v3617
    %v3988 = vpack.c.b16 %v3623, %v3618
    %v3989 = vpack.c.b16 %v3624, %v3619
    %v3990 = vpack.c.b16 %v3625, %v3620
    %v3991 = vpack.c.b16 %v3631, %v3626
    %v3992 = vpack.c.b16 %v3632, %v3627
    %v3993 = vpack.c.b16 %v3633, %v3628
    %v3994 = vpack.c.b16 %v3634, %v3629
    %v3995 = vpack.c.b16 %v3635, %v3630
    %v3996 = vpack.c.b16 %v3641, %v3636
    %v3997 = vpack.c.b16 %v3642, %v3637
    %v3998 = vpack.c.b16 %v3643, %v3638
    %v3999 = vpack.c.b16 %v3644, %v3639
    %v4000 = vpack.c.b16 %v3645, %v3640
    %v4001 = vpack.c.b16 %v3651, %v3646
    %v4002 = vpack.c.b16 %v3652, %v3647
    %v4003 = vpack.c.b16 %v3653, %v3648
    %v4004 = vpack.c.b16 %v3654, %v3649
    %v4005 = vpack.c.b16 %v3655, %v3650
    %v4006 = vpack.c.b16 %v3661, %v3656
    %v4007 = vpack.c.b16 %v3662, %v3657
    %v4008 = vpack.c.b16 %v3663, %v3658
    %v4009 = vpack.c.b16 %v3664, %v3659
    %v4010 = vpack.c.b16 %v3665, %v3660
    %v4011 = vpack.c.b16 %v3671, %v3666
    %v4012 = vpack.c.b16 %v3672, %v3667
    %v4013 = vpack.c.b16 %v3673, %v3668
    %v4014 = vpack.c.b16 %v3674, %v3669
    %v4015 = vpack.c.b16 %v3675, %v3670
    %v4016 = vpack.c.b16 %v3681, %v3676
    %v4017 = vpack.c.b16 %v3682, %v3677
    %v4018 = vpack.c.b16 %v3683, %v3678
    %v4019 = vpack.c.b16 %v3684, %v3679
    %v4020 = vpack.c.b16 %v3685, %v3680
    %v4021 = vpack.c.b16 %v3691, %v3686
    %v4022 = vpack.c.b16 %v3692, %v3687
    %v4023 = vpack.c.b16 %v3693, %v3688
    %v4024 = vpack.c.b16 %v3694, %v3689
    %v4025 = vpack.c.b16 %v3695, %v3690
    %v4026 = vpack.c.b16 %v3701, %v3696
    %v4027 = vpack.c.b16 %v3702, %v3697
    %v4028 = vpack.c.b16 %v3703, %v3698
    %v4029 = vpack.c.b16 %v3704, %v3699
    %v4030 = vpack.c.b16 %v3705, %v3700
    %v4031 = vpack.c.b16 %v3711, %v3706
    %v4032 = vpack.c.b16 %v3712, %v3707
    %v4033 = vpack.c.b16 %v3713, %v3708
    %v4034 = vpack.c.b16 %v3714, %v3709
    %v4035 = vpack.c.b16 %v3715, %v3710
    %v4036 = vpack.c.b16 %v3721, %v3716
    %v4037 = vpack.c.b16 %v3722, %v3717
    %v4038 = vpack.c.b16 %v3723, %v3718
    %v4039 = vpack.c.b16 %v3724, %v3719
    %v4040 = vpack.c.b16 %v3725, %v3720
    %v4041 = vpack.c.b16 %v3731, %v3726
    %v4042 = vpack.c.b16 %v3732, %v3727
    %v4043 = vpack.c.b16 %v3733, %v3728
    %v4044 = vpack.c.b16 %v3734, %v3729
    %v4045 = vpack.c.b16 %v3735, %v3730
    %v4046 = vpack.c.b16 %v3741, %v3736
    %v4047 = vpack.c.b16 %v3742, %v3737
    %v4048 = vpack.c.b16 %v3743, %v3738
    %v4049 = vpack.c.b16 %v3744, %v3739
    %v4050 = vpack.c.b16 %v3745, %v3740
    %v4051 = vpack.c.b16 %v3751, %v3746
    %v4052 = vpack.c.b16 %v3752, %v3747
    %v4053 = vpack.c.b16 %v3753, %v3748
    %v4054 = vpack.c.b16 %v3754, %v3749
    %v4055 = vpack.c.b16 %v3755, %v3750
    %v4056 = vpack.c.b16 %v3761, %v3756
    %v4057 = vpack.c.b16 %v3762, %v3757
    %v4058 = vpack.c.b16 %v3763, %v3758
    %v4059 = vpack.c.b16 %v3764, %v3759
    %v4060 = vpack.c.b16 %v3765, %v3760
    %v4061 = vpack.c.b16 %v3771, %v3766
    %v4062 = vpack.c.b16 %v3772, %v3767
    %v4063 = vpack.c.b16 %v3773, %v3768
    %v4064 = vpack.c.b16 %v3774, %v3769
    %v4065 = vpack.c.b16 %v3775, %v3770
    %v4066 = vpack.c.b16 %v3781, %v3776
    %v4067 = vpack.c.b16 %v3782, %v3777
    %v4068 = vpack.c.b16 %v3783, %v3778
    %v4069 = vpack.c.b16 %v3784, %v3779
    %v4070 = vpack.c.b16 %v3785, %v3780
    %v4071 = vpack.c.b16 %v3791, %v3786
    %v4072 = vpack.c.b16 %v3792, %v3787
    %v4073 = vpack.c.b16 %v3793, %v3788
    %v4074 = vpack.c.b16 %v3794, %v3789
    %v4075 = vpack.c.b16 %v3795, %v3790
    %v4076 = vpack.c.b16 %v3801, %v3796
    %v4077 = vpack.c.b16 %v3802, %v3797
    %v4078 = vpack.c.b16 %v3803, %v3798
    %v4079 = vpack.c.b16 %v3804, %v3799
    %v4080 = vpack.c.b16 %v3805, %v3800
    %v4081 = vpack.c.b16 %v3811, %v3806
    %v4082 = vpack.c.b16 %v3812, %v3807
    %v4083 = vpack.c.b16 %v3813, %v3808
    %v4084 = vpack.c.b16 %v3814, %v3809
    %v4085 = vpack.c.b16 %v3815, %v3810
    %v4086 = vpack.c.b16 %v3821, %v3816
    %v4087 = vpack.c.b16 %v3822, %v3817
    %v4088 = vpack.c.b16 %v3823, %v3818
    %v4089 = vpack.c.b16 %v3824, %v3819
    %v4090 = vpack.c.b16 %v3825, %v3820
    %v4091 = vpack.c.b16 %v3831, %v3826
    %v4092 = vpack.c.b16 %v3832, %v3827
    %v4093 = vpack.c.b16 %v3833, %v3828
    %v4094 = vpack.c.b16 %v3834, %v3829
    %v4095 = vpack.c.b16 %v3835, %v3830
    %v4096 = vpack.c.b16 %v3841, %v3836
    %v4097 = vpack.c.b16 %v3842, %v3837
    %v4098 = vpack.c.b16 %v3843, %v3838
    %v4099 = vpack.c.b16 %v3844, %v3839
    %v4100 = vpack.c.b16 %v3845, %v3840
    %v4101 = vpack.c.b16 %v3851, %v3846
    %v4102 = vpack.c.b16 %v3852, %v3847
    %v4103 = vpack.c.b16 %v3853, %v3848
    %v4104 = vpack.c.b16 %v3854, %v3849
    %v4105 = vpack.c.b16 %v3855, %v3850
    %v4106 = vpack.c.b16 %v3861, %v3856
    %v4107 = vpack.c.b16 %v3862, %v3857
    %v4108 = vpack.c.b16 %v3863, %v3858
    %v4109 = vpack.c.b16 %v3864, %v3859
    %v4110 = vpack.c.b16 %v3865, %v3860
    %v4111 = vpack.c.b16 %v3871, %v3866
    %v4112 = vpack.c.b16 %v3872, %v3867
    %v4113 = vpack.c.b16 %v3873, %v3868
    %v4114 = vpack.c.b16 %v3874, %v3869
    %v4115 = vpack.c.b16 %v3875, %v3870
    %4356 = vmatprep.subr.bf16.mxu0 %v3912
    %4357 = vmatpush1.bf16.msra.mxu0 %v3911
    %4358 = vmatprep.subr.bf16.mxu0 %v3907
    %4359 = vmatpush1.bf16.msra.mxu0 %v3906
    %4360 = vmatprep.subr.bf16.mxu0 %v3902
    %4361 = vmatpush1.bf16.msra.mxu0 %v3901
    %4362 = vmatprep.subr.bf16.mxu0 %v3897
    %4363 = vmatpush1.bf16.msra.mxu0 %v3896
    %4364 = vmatprep.subr.bf16.mxu0 %v3892
    %4365 = vmatpush1.bf16.msra.mxu0 %v3891
    %4366 = vmatprep.subr.bf16.mxu0 %v3887
    %4367 = vmatpush1.bf16.msra.mxu0 %v3886
    %4368 = vmatprep.subr.bf16.mxu0 %v3882
    %4369 = vmatpush1.bf16.msra.mxu0 %v3881
    %4370 = vmatprep.subr.bf16.mxu0 %v3877
    %4371 = vmatpush1.bf16.msra.mxu0 %v3876
    %4372 = vmatprep.subr.bf16.mxu0 %v3952
    %4373 = vmatpush2.bf16.msra.mxu0 %v3951
    %4374 = vmatprep.subr.bf16.mxu0 %v3947
    %4375 = vmatpush2.bf16.msra.mxu0 %v3946
    %4376 = vmatprep.subr.bf16.mxu0 %v3942
    %4377 = vmatpush2.bf16.msra.mxu0 %v3941
    %4378 = vmatprep.subr.bf16.mxu0 %v3937
    %4379 = vmatpush2.bf16.msra.mxu0 %v3936
    %4380 = vmatprep.subr.bf16.mxu0 %v3932
    %4381 = vmatpush2.bf16.msra.mxu0 %v3931
    %4382 = vmatprep.subr.bf16.mxu0 %v3927
    %4383 = vmatpush2.bf16.msra.mxu0 %v3926
    %4384 = vmatprep.subr.bf16.mxu0 %v3922
    %4385 = vmatpush2.bf16.msra.mxu0 %v3921
    %4386 = vmatprep.subr.bf16.mxu0 %v3917
    %4387 = vmatpush2.bf16.msra.mxu0 %v3916
    %4388 = vmatprep.mubr.bf16.mxu0 %v3077
    %4389 = vmatmul.mubr.bf16.gmra.mxu0 %v3076
    %v4390 = vpop.f32.mrf.mxu0
    %v4391 = vadd.f32 %v3086, %v4390
    %v4392 = vpop.f32.mrf.mxu0
    %v4393 = vadd.f32 %v3090, %v4392
    %v4394 = vpop.f32.mrf.mxu0
    %v4395 = vpop.f32.mrf.mxu0
    %4396 = vdwg.mxu0
    %4397 = vmatprep.subr.bf16.mxu0 %v3992
    %4398 = vmatpush1.bf16.msra.mxu0 %v3991
    %4399 = vmatprep.subr.bf16.mxu0 %v3987
    %4400 = vmatpush1.bf16.msra.mxu0 %v3986
    %4401 = vmatprep.subr.bf16.mxu0 %v3982
    %4402 = vmatpush1.bf16.msra.mxu0 %v3981
    %4403 = vmatprep.subr.bf16.mxu0 %v3977
    %4404 = vmatpush1.bf16.msra.mxu0 %v3976
    %4405 = vmatprep.subr.bf16.mxu0 %v3972
    %4406 = vmatpush1.bf16.msra.mxu0 %v3971
    %4407 = vmatprep.subr.bf16.mxu0 %v3967
    %4408 = vmatpush1.bf16.msra.mxu0 %v3966
    %4409 = vmatprep.subr.bf16.mxu0 %v3962
    %4410 = vmatpush1.bf16.msra.mxu0 %v3961
    %4411 = vmatprep.subr.bf16.mxu0 %v3957
    %4412 = vmatpush1.bf16.msra.mxu0 %v3956
    %4413 = vmatprep.subr.bf16.mxu0 %v4032
    %4414 = vmatpush2.bf16.msra.mxu0 %v4031
    %4415 = vmatprep.subr.bf16.mxu0 %v4027
    %4416 = vmatpush2.bf16.msra.mxu0 %v4026
    %4417 = vmatprep.subr.bf16.mxu0 %v4022
    %4418 = vmatpush2.bf16.msra.mxu0 %v4021
    %4419 = vmatprep.subr.bf16.mxu0 %v4017
    %4420 = vmatpush2.bf16.msra.mxu0 %v4016
    %4421 = vmatprep.subr.bf16.mxu0 %v4012
    %4422 = vmatpush2.bf16.msra.mxu0 %v4011
    %4423 = vmatprep.subr.bf16.mxu0 %v4007
    %4424 = vmatpush2.bf16.msra.mxu0 %v4006
    %4425 = vmatprep.subr.bf16.mxu0 %v4002
    %4426 = vmatpush2.bf16.msra.mxu0 %v4001
    %4427 = vmatprep.subr.bf16.mxu0 %v3997
    %4428 = vmatpush2.bf16.msra.mxu0 %v3996
    %4429 = vmatprep.mubr.bf16.mxu0 %v3079
    %4430 = vmatmul.mubr.bf16.gmra.mxu0 %v3078
    %v4431 = vpop.f32.mrf.mxu0
    %v4432 = vadd.f32 %v4391, %v4431
    %v4433 = vpop.f32.mrf.mxu0
    %v4434 = vadd.f32 %v4393, %v4433
    %v4435 = vpop.f32.mrf.mxu0
    %v4436 = vpop.f32.mrf.mxu0
    %4437 = vdwg.mxu0
    %4438 = vmatprep.subr.bf16.mxu0 %v4072
    %4439 = vmatpush1.bf16.msra.mxu0 %v4071
    %4440 = vmatprep.subr.bf16.mxu0 %v4067
    %4441 = vmatpush1.bf16.msra.mxu0 %v4066
    %4442 = vmatprep.subr.bf16.mxu0 %v4062
    %4443 = vmatpush1.bf16.msra.mxu0 %v4061
    %4444 = vmatprep.subr.bf16.mxu0 %v4057
    %4445 = vmatpush1.bf16.msra.mxu0 %v4056
    %4446 = vmatprep.subr.bf16.mxu0 %v4052
    %4447 = vmatpush1.bf16.msra.mxu0 %v4051
    %4448 = vmatprep.subr.bf16.mxu0 %v4047
    %4449 = vmatpush1.bf16.msra.mxu0 %v4046
    %4450 = vmatprep.subr.bf16.mxu0 %v4042
    %4451 = vmatpush1.bf16.msra.mxu0 %v4041
    %4452 = vmatprep.subr.bf16.mxu0 %v4037
    %4453 = vmatpush1.bf16.msra.mxu0 %v4036
    %4454 = vmatprep.subr.bf16.mxu0 %v4112
    %4455 = vmatpush2.bf16.msra.mxu0 %v4111
    %4456 = vmatprep.subr.bf16.mxu0 %v4107
    %4457 = vmatpush2.bf16.msra.mxu0 %v4106
    %4458 = vmatprep.subr.bf16.mxu0 %v4102
    %4459 = vmatpush2.bf16.msra.mxu0 %v4101
    %4460 = vmatprep.subr.bf16.mxu0 %v4097
    %4461 = vmatpush2.bf16.msra.mxu0 %v4096
    %4462 = vmatprep.subr.bf16.mxu0 %v4092
    %4463 = vmatpush2.bf16.msra.mxu0 %v4091
    %4464 = vmatprep.subr.bf16.mxu0 %v4087
    %4465 = vmatpush2.bf16.msra.mxu0 %v4086
    %4466 = vmatprep.subr.bf16.mxu0 %v4082
    %4467 = vmatpush2.bf16.msra.mxu0 %v4081
    %4468 = vmatprep.subr.bf16.mxu0 %v4077
    %4469 = vmatpush2.bf16.msra.mxu0 %v4076
    %4470 = vmatprep.mubr.bf16.mxu0 %v3081
    %4471 = vmatmul.mubr.bf16.gmra.mxu0 %v3080
    %v4472 = vpop.f32.mrf.mxu0
    %v4473 = vadd.f32 %v4432, %v4472
    %v4474 = vpop.f32.mrf.mxu0
    %v4475 = vadd.f32 %v4434, %v4474
    %v4476 = vpop.f32.mrf.mxu0
    %v4477 = vpop.f32.mrf.mxu0
    %4478 = vdwg.mxu0
    %4479 = vmatprep.subr.bf16.mxu0 %v3914
    %4480 = vmatpush1.bf16.msra.mxu0 %v3913
    %4481 = vmatprep.subr.bf16.mxu0 %v3909
    %4482 = vmatpush1.bf16.msra.mxu0 %v3908
    %4483 = vmatprep.subr.bf16.mxu0 %v3904
    %4484 = vmatpush1.bf16.msra.mxu0 %v3903
    %4485 = vmatprep.subr.bf16.mxu0 %v3899
    %4486 = vmatpush1.bf16.msra.mxu0 %v3898
    %4487 = vmatprep.subr.bf16.mxu0 %v3894
    %4488 = vmatpush1.bf16.msra.mxu0 %v3893
    %4489 = vmatprep.subr.bf16.mxu0 %v3889
    %4490 = vmatpush1.bf16.msra.mxu0 %v3888
    %4491 = vmatprep.subr.bf16.mxu0 %v3884
    %4492 = vmatpush1.bf16.msra.mxu0 %v3883
    %4493 = vmatprep.subr.bf16.mxu0 %v3879
    %4494 = vmatpush1.bf16.msra.mxu0 %v3878
    %4495 = vmatprep.subr.bf16.mxu0 %v3954
    %4496 = vmatpush2.bf16.msra.mxu0 %v3953
    %4497 = vmatprep.subr.bf16.mxu0 %v3949
    %4498 = vmatpush2.bf16.msra.mxu0 %v3948
    %4499 = vmatprep.subr.bf16.mxu0 %v3944
    %4500 = vmatpush2.bf16.msra.mxu0 %v3943
    %4501 = vmatprep.subr.bf16.mxu0 %v3939
    %4502 = vmatpush2.bf16.msra.mxu0 %v3938
    %4503 = vmatprep.subr.bf16.mxu0 %v3934
    %4504 = vmatpush2.bf16.msra.mxu0 %v3933
    %4505 = vmatprep.subr.bf16.mxu0 %v3929
    %4506 = vmatpush2.bf16.msra.mxu0 %v3928
    %4507 = vmatprep.subr.bf16.mxu0 %v3924
    %4508 = vmatpush2.bf16.msra.mxu0 %v3923
    %4509 = vmatprep.subr.bf16.mxu0 %v3919
    %4510 = vmatpush2.bf16.msra.mxu0 %v3918
    %4511 = vmatprep.mubr.bf16.mxu0 %v3077
    %4512 = vmatmul.mubr.bf16.gmra.mxu0 %v3076
    %v4513 = vpop.f32.mrf.mxu0
    %v4514 = vadd.f32 %v3094, %v4513
    %v4515 = vpop.f32.mrf.mxu0
    %v4516 = vadd.f32 %v3098, %v4515
    %v4517 = vpop.f32.mrf.mxu0
    %v4518 = vpop.f32.mrf.mxu0
    %4519 = vdwg.mxu0
    %4520 = vmatprep.subr.bf16.mxu0 %v3994
    %4521 = vmatpush1.bf16.msra.mxu0 %v3993
    %4522 = vmatprep.subr.bf16.mxu0 %v3989
    %4523 = vmatpush1.bf16.msra.mxu0 %v3988
    %4524 = vmatprep.subr.bf16.mxu0 %v3984
    %4525 = vmatpush1.bf16.msra.mxu0 %v3983
    %4526 = vmatprep.subr.bf16.mxu0 %v3979
    %4527 = vmatpush1.bf16.msra.mxu0 %v3978
    %4528 = vmatprep.subr.bf16.mxu0 %v3974
    %4529 = vmatpush1.bf16.msra.mxu0 %v3973
    %4530 = vmatprep.subr.bf16.mxu0 %v3969
    %4531 = vmatpush1.bf16.msra.mxu0 %v3968
    %4532 = vmatprep.subr.bf16.mxu0 %v3964
    %4533 = vmatpush1.bf16.msra.mxu0 %v3963
    %4534 = vmatprep.subr.bf16.mxu0 %v3959
    %4535 = vmatpush1.bf16.msra.mxu0 %v3958
    %4536 = vmatprep.subr.bf16.mxu0 %v4034
    %4537 = vmatpush2.bf16.msra.mxu0 %v4033
    %4538 = vmatprep.subr.bf16.mxu0 %v4029
    %4539 = vmatpush2.bf16.msra.mxu0 %v4028
    %4540 = vmatprep.subr.bf16.mxu0 %v4024
    %4541 = vmatpush2.bf16.msra.mxu0 %v4023
    %4542 = vmatprep.subr.bf16.mxu0 %v4019
    %4543 = vmatpush2.bf16.msra.mxu0 %v4018
    %4544 = vmatprep.subr.bf16.mxu0 %v4014
    %4545 = vmatpush2.bf16.msra.mxu0 %v4013
    %4546 = vmatprep.subr.bf16.mxu0 %v4009
    %4547 = vmatpush2.bf16.msra.mxu0 %v4008
    %4548 = vmatprep.subr.bf16.mxu0 %v4004
    %4549 = vmatpush2.bf16.msra.mxu0 %v4003
    %4550 = vmatprep.subr.bf16.mxu0 %v3999
    %4551 = vmatpush2.bf16.msra.mxu0 %v3998
    %4552 = vmatprep.mubr.bf16.mxu0 %v3079
    %4553 = vmatmul.mubr.bf16.gmra.mxu0 %v3078
    %v4554 = vpop.f32.mrf.mxu0
    %v4555 = vadd.f32 %v4514, %v4554
    %v4556 = vpop.f32.mrf.mxu0
    %v4557 = vadd.f32 %v4516, %v4556
    %v4558 = vpop.f32.mrf.mxu0
    %v4559 = vpop.f32.mrf.mxu0
    %4560 = vdwg.mxu0
    %4561 = vmatprep.subr.bf16.mxu0 %v4074
    %4562 = vmatpush1.bf16.msra.mxu0 %v4073
    %4563 = vmatprep.subr.bf16.mxu0 %v4069
    %4564 = vmatpush1.bf16.msra.mxu0 %v4068
    %4565 = vmatprep.subr.bf16.mxu0 %v4064
    %4566 = vmatpush1.bf16.msra.mxu0 %v4063
    %4567 = vmatprep.subr.bf16.mxu0 %v4059
    %4568 = vmatpush1.bf16.msra.mxu0 %v4058
    %4569 = vmatprep.subr.bf16.mxu0 %v4054
    %4570 = vmatpush1.bf16.msra.mxu0 %v4053
    %4571 = vmatprep.subr.bf16.mxu0 %v4049
    %4572 = vmatpush1.bf16.msra.mxu0 %v4048
    %4573 = vmatprep.subr.bf16.mxu0 %v4044
    %4574 = vmatpush1.bf16.msra.mxu0 %v4043
    %4575 = vmatprep.subr.bf16.mxu0 %v4039
    %4576 = vmatpush1.bf16.msra.mxu0 %v4038
    %4577 = vmatprep.subr.bf16.mxu0 %v4114
    %4578 = vmatpush2.bf16.msra.mxu0 %v4113
    %4579 = vmatprep.subr.bf16.mxu0 %v4109
    %4580 = vmatpush2.bf16.msra.mxu0 %v4108
    %4581 = vmatprep.subr.bf16.mxu0 %v4104
    %4582 = vmatpush2.bf16.msra.mxu0 %v4103
    %4583 = vmatprep.subr.bf16.mxu0 %v4099
    %4584 = vmatpush2.bf16.msra.mxu0 %v4098
    %4585 = vmatprep.subr.bf16.mxu0 %v4094
    %4586 = vmatpush2.bf16.msra.mxu0 %v4093
    %4587 = vmatprep.subr.bf16.mxu0 %v4089
    %4588 = vmatpush2.bf16.msra.mxu0 %v4088
    %4589 = vmatprep.subr.bf16.mxu0 %v4084
    %4590 = vmatpush2.bf16.msra.mxu0 %v4083
    %4591 = vmatprep.subr.bf16.mxu0 %v4079
    %4592 = vmatpush2.bf16.msra.mxu0 %v4078
    %4593 = vmatprep.mubr.bf16.mxu0 %v3081
    %4594 = vmatmul.mubr.bf16.gmra.mxu0 %v3080
    %v4595 = vpop.f32.mrf.mxu0
    %v4596 = vadd.f32 %v4555, %v4595
    %v4597 = vpop.f32.mrf.mxu0
    %v4598 = vadd.f32 %v4557, %v4597
    %v4599 = vpop.f32.mrf.mxu0
    %v4600 = vpop.f32.mrf.mxu0
    %4601 = vdwg.mxu0
    %4602 = vmatprep.subr.bf16.mxu0 0
    %4603 = vmatpush1.bf16.msra.mxu0 %v3915
    %4604 = vmatprep.subr.bf16.mxu0 0
    %4605 = vmatpush1.bf16.msra.mxu0 %v3910
    %4606 = vmatprep.subr.bf16.mxu0 0
    %4607 = vmatpush1.bf16.msra.mxu0 %v3905
    %4608 = vmatprep.subr.bf16.mxu0 0
    %4609 = vmatpush1.bf16.msra.mxu0 %v3900
    %4610 = vmatprep.subr.bf16.mxu0 0
    %4611 = vmatpush1.bf16.msra.mxu0 %v3895
    %4612 = vmatprep.subr.bf16.mxu0 0
    %4613 = vmatpush1.bf16.msra.mxu0 %v3890
    %4614 = vmatprep.subr.bf16.mxu0 0
    %4615 = vmatpush1.bf16.msra.mxu0 %v3885
    %4616 = vmatprep.subr.bf16.mxu0 0
    %4617 = vmatpush1.bf16.msra.mxu0 %v3880
    %4618 = vmatprep.subr.bf16.mxu0 0
    %4619 = vmatpush2.bf16.msra.mxu0 %v3955
    %4620 = vmatprep.subr.bf16.mxu0 0
    %4621 = vmatpush2.bf16.msra.mxu0 %v3950
    %4622 = vmatprep.subr.bf16.mxu0 0
    %4623 = vmatpush2.bf16.msra.mxu0 %v3945
    %4624 = vmatprep.subr.bf16.mxu0 0
    %4625 = vmatpush2.bf16.msra.mxu0 %v3940
    %4626 = vmatprep.subr.bf16.mxu0 0
    %4627 = vmatpush2.bf16.msra.mxu0 %v3935
    %4628 = vmatprep.subr.bf16.mxu0 0
    %4629 = vmatpush2.bf16.msra.mxu0 %v3930
    %4630 = vmatprep.subr.bf16.mxu0 0
    %4631 = vmatpush2.bf16.msra.mxu0 %v3925
    %4632 = vmatprep.subr.bf16.mxu0 0
    %4633 = vmatpush2.bf16.msra.mxu0 %v3920
    %4634 = vmatprep.mubr.bf16.mxu0 %v3077
    %4635 = vmatmul.mubr.bf16.gmra.mxu0 %v3076
    %v4636 = vpop.f32.mrf.mxu0
    %v4637 = vadd.f32 %v3102, %v4636
    %v4638 = vpop.f32.mrf.mxu0
    %v4639 = vpop.f32.mrf.mxu0
    %v4640 = vpop.f32.mrf.mxu0
    %4641 = vdwg.mxu0
    %4642 = vmatprep.subr.bf16.mxu0 0
    %4643 = vmatpush1.bf16.msra.mxu0 %v3995
    %4644 = vmatprep.subr.bf16.mxu0 0
    %4645 = vmatpush1.bf16.msra.mxu0 %v3990
    %4646 = vmatprep.subr.bf16.mxu0 0
    %4647 = vmatpush1.bf16.msra.mxu0 %v3985
    %4648 = vmatprep.subr.bf16.mxu0 0
    %4649 = vmatpush1.bf16.msra.mxu0 %v3980
    %4650 = vmatprep.subr.bf16.mxu0 0
    %4651 = vmatpush1.bf16.msra.mxu0 %v3975
    %4652 = vmatprep.subr.bf16.mxu0 0
    %4653 = vmatpush1.bf16.msra.mxu0 %v3970
    %4654 = vmatprep.subr.bf16.mxu0 0
    %4655 = vmatpush1.bf16.msra.mxu0 %v3965
    %4656 = vmatprep.subr.bf16.mxu0 0
    %4657 = vmatpush1.bf16.msra.mxu0 %v3960
    %4658 = vmatprep.subr.bf16.mxu0 0
    %4659 = vmatpush2.bf16.msra.mxu0 %v4035
    %4660 = vmatprep.subr.bf16.mxu0 0
    %4661 = vmatpush2.bf16.msra.mxu0 %v4030
    %4662 = vmatprep.subr.bf16.mxu0 0
    %4663 = vmatpush2.bf16.msra.mxu0 %v4025
    %4664 = vmatprep.subr.bf16.mxu0 0
    %4665 = vmatpush2.bf16.msra.mxu0 %v4020
    %4666 = vmatprep.subr.bf16.mxu0 0
    %4667 = vmatpush2.bf16.msra.mxu0 %v4015
    %4668 = vmatprep.subr.bf16.mxu0 0
    %4669 = vmatpush2.bf16.msra.mxu0 %v4010
    %4670 = vmatprep.subr.bf16.mxu0 0
    %4671 = vmatpush2.bf16.msra.mxu0 %v4005
    %4672 = vmatprep.subr.bf16.mxu0 0
    %4673 = vmatpush2.bf16.msra.mxu0 %v4000
    %4674 = vmatprep.mubr.bf16.mxu0 %v3079
    %4675 = vmatmul.mubr.bf16.gmra.mxu0 %v3078
    %v4676 = vpop.f32.mrf.mxu0
    %v4677 = vadd.f32 %v4637, %v4676
    %v4678 = vpop.f32.mrf.mxu0
    %v4679 = vpop.f32.mrf.mxu0
    %v4680 = vpop.f32.mrf.mxu0
    %4681 = vdwg.mxu0
    %4682 = vmatprep.subr.bf16.mxu0 0
    %4683 = vmatpush1.bf16.msra.mxu0 %v4075
    %4684 = vmatprep.subr.bf16.mxu0 0
    %4685 = vmatpush1.bf16.msra.mxu0 %v4070
    %4686 = vmatprep.subr.bf16.mxu0 0
    %4687 = vmatpush1.bf16.msra.mxu0 %v4065
    %4688 = vmatprep.subr.bf16.mxu0 0
    %4689 = vmatpush1.bf16.msra.mxu0 %v4060
    %4690 = vmatprep.subr.bf16.mxu0 0
    %4691 = vmatpush1.bf16.msra.mxu0 %v4055
    %4692 = vmatprep.subr.bf16.mxu0 0
    %4693 = vmatpush1.bf16.msra.mxu0 %v4050
    %4694 = vmatprep.subr.bf16.mxu0 0
    %4695 = vmatpush1.bf16.msra.mxu0 %v4045
    %4696 = vmatprep.subr.bf16.mxu0 0
    %4697 = vmatpush1.bf16.msra.mxu0 %v4040
    %4698 = vmatprep.subr.bf16.mxu0 0
    %4699 = vmatpush2.bf16.msra.mxu0 %v4115
    %4700 = vmatprep.subr.bf16.mxu0 0
    %4701 = vmatpush2.bf16.msra.mxu0 %v4110
    %4702 = vmatprep.subr.bf16.mxu0 0
    %4703 = vmatpush2.bf16.msra.mxu0 %v4105
    %4704 = vmatprep.subr.bf16.mxu0 0
    %4705 = vmatpush2.bf16.msra.mxu0 %v4100
    %4706 = vmatprep.subr.bf16.mxu0 0
    %4707 = vmatpush2.bf16.msra.mxu0 %v4095
    %4708 = vmatprep.subr.bf16.mxu0 0
    %4709 = vmatpush2.bf16.msra.mxu0 %v4090
    %4710 = vmatprep.subr.bf16.mxu0 0
    %4711 = vmatpush2.bf16.msra.mxu0 %v4085
    %4712 = vmatprep.subr.bf16.mxu0 0
    %4713 = vmatpush2.bf16.msra.mxu0 %v4080
    %4714 = vmatprep.mubr.bf16.mxu0 %v3081
    %4715 = vmatmul.mubr.bf16.gmra.mxu0 %v3080
    %v4716 = vpop.f32.mrf.mxu0
    %v4717 = vadd.f32 %v4677, %v4716
    %v4718 = vpop.f32.mrf.mxu0
    %v4719 = vpop.f32.mrf.mxu0
    %v4720 = vpop.f32.mrf.mxu0
    %4721 = vdwg.mxu0
    %v4722 = vmax.f32 %v4473, 0.0
    %v4723 = vmax.f32 %v4475, 0.0
    %v4724 = vmax.f32 %v4596, 0.0
    %v4725 = vmax.f32 %v4598, 0.0
    %v4726 = vmax.f32 %v4717, 0.0
    %v4727 = vld [vmem:[#allocation9] sm:$0xff]
    %v4728 = vld [vmem:[#allocation9 + $0x8] sm:$0xff]
    %v4729 = vld [vmem:[#allocation9 + $0x10] sm:$0xff]
    %v4730 = vld [vmem:[#allocation9 + $0x18] sm:$0xff]
    %v4731 = vld [vmem:[#allocation9 + $0x20] sm:$0xff]
    %v4732 = vld [vmem:[#allocation9 + $0x28] sm:$0xff]
    %v4733 = vld [vmem:[#allocation9 + $0x30] sm:$0xff]
    %v4734 = vld [vmem:[#allocation9 + $0x38] sm:$0xff]
    %v4735 = vld [vmem:[#allocation9 + $0x40] sm:$0xff]
    %v4736 = vld [vmem:[#allocation9 + $0x48] sm:$0xff]
    %v4737 = vld [vmem:[#allocation9 + $0x50] sm:$0xff]
    %v4738 = vld [vmem:[#allocation9 + $0x58] sm:$0xff]
    %v4739 = vld [vmem:[#allocation9 + $0x60] sm:$0xff]
    %v4740 = vld [vmem:[#allocation9 + $0x68] sm:$0xff]
    %v4741 = vld [vmem:[#allocation9 + $0x70] sm:$0xff]
    %v4742 = vld [vmem:[#allocation9 + $0x78] sm:$0xff]
    %v4743 = vld [vmem:[#allocation9 + $0x80] sm:$0xff]
    %v4744 = vld [vmem:[#allocation9 + $0x88] sm:$0xff]
    %v4745 = vld [vmem:[#allocation9 + $0x90] sm:$0xff]
    %v4746 = vld [vmem:[#allocation9 + $0x98] sm:$0xff]
    %v4747 = vld [vmem:[#allocation9 + $0xa0] sm:$0xff]
    %v4748 = vld [vmem:[#allocation9 + $0xa8] sm:$0xff]
    %v4749 = vld [vmem:[#allocation9 + $0xb0] sm:$0xff]
    %v4750 = vld [vmem:[#allocation9 + $0xb8] sm:$0xff]
    %v4751 = vld [vmem:[#allocation9 + $0xc0] sm:$0xff]
    %v4752 = vld [vmem:[#allocation9 + $0xc8] sm:$0xff]
    %v4753 = vld [vmem:[#allocation9 + $0xd0] sm:$0xff]
    %v4754 = vld [vmem:[#allocation9 + $0xd8] sm:$0xff]
    %v4755 = vld [vmem:[#allocation9 + $0xe0] sm:$0xff]
    %v4756 = vld [vmem:[#allocation9 + $0xe8] sm:$0xff]
    %v4757 = vld [vmem:[#allocation9 + $0xf0] sm:$0xff]
    %v4758 = vld [vmem:[#allocation9 + $0xf8] sm:$0xff]
    %v4759 = vld [vmem:[#allocation9 + $0x100] sm:$0xff]
    %v4760 = vld [vmem:[#allocation9 + $0x108] sm:$0xff]
    %v4761 = vld [vmem:[#allocation9 + $0x110] sm:$0xff]
    %v4762 = vld [vmem:[#allocation9 + $0x118] sm:$0xff]
    %v4763 = vld [vmem:[#allocation9 + $0x120] sm:$0xff]
    %v4764 = vld [vmem:[#allocation9 + $0x128] sm:$0xff]
    %v4765 = vld [vmem:[#allocation9 + $0x130] sm:$0xff]
    %v4766 = vld [vmem:[#allocation9 + $0x138] sm:$0xff]
    %v4767 = vld [vmem:[#allocation9 + $0x140] sm:$0xff]
    %v4768 = vld [vmem:[#allocation9 + $0x148] sm:$0xff]
    %v4769 = vld [vmem:[#allocation9 + $0x150] sm:$0xff]
    %v4770 = vld [vmem:[#allocation9 + $0x158] sm:$0xff]
    %v4771 = vld [vmem:[#allocation9 + $0x160] sm:$0xff]
    %v4772 = vld [vmem:[#allocation9 + $0x168] sm:$0xff]
    %v4773 = vld [vmem:[#allocation9 + $0x170] sm:$0xff]
    %v4774 = vld [vmem:[#allocation9 + $0x178] sm:$0xff]
    %v4775 = vld [vmem:[#allocation9 + $0x180] sm:$0xff]
    %v4776 = vld [vmem:[#allocation9 + $0x188] sm:$0xff]
    %v4777 = vld [vmem:[#allocation9 + $0x190] sm:$0xff]
    %v4778 = vld [vmem:[#allocation9 + $0x198] sm:$0xff]
    %v4779 = vld [vmem:[#allocation9 + $0x1a0] sm:$0xff]
    %v4780 = vld [vmem:[#allocation9 + $0x1a8] sm:$0xff]
    %v4781 = vld [vmem:[#allocation9 + $0x1b0] sm:$0xff]
    %v4782 = vld [vmem:[#allocation9 + $0x1b8] sm:$0xff]
    %v4783 = vld [vmem:[#allocation9 + $0x1c0] sm:$0xff]
    %v4784 = vld [vmem:[#allocation9 + $0x1c8] sm:$0xff]
    %v4785 = vld [vmem:[#allocation9 + $0x1d0] sm:$0xff]
    %v4786 = vld [vmem:[#allocation9 + $0x1d8] sm:$0xff]
    %v4787 = vld [vmem:[#allocation9 + $0x1e0] sm:$0xff]
    %v4788 = vld [vmem:[#allocation9 + $0x1e8] sm:$0xff]
    %v4789 = vld [vmem:[#allocation9 + $0x1f0] sm:$0xff]
    %v4790 = vld [vmem:[#allocation9 + $0x1f8] sm:$0xff]
    %v4791 = vld [vmem:[#allocation9 + $0x200] sm:$0xff]
    %v4792 = vld [vmem:[#allocation9 + $0x208] sm:$0xff]
    %v4793 = vld [vmem:[#allocation9 + $0x210] sm:$0xff]
    %v4794 = vld [vmem:[#allocation9 + $0x218] sm:$0xff]
    %v4795 = vld [vmem:[#allocation9 + $0x220] sm:$0xff]
    %v4796 = vld [vmem:[#allocation9 + $0x228] sm:$0xff]
    %v4797 = vld [vmem:[#allocation9 + $0x230] sm:$0xff]
    %v4798 = vld [vmem:[#allocation9 + $0x238] sm:$0xff]
    %v4799 = vld [vmem:[#allocation9 + $0x240] sm:$0xff]
    %v4800 = vld [vmem:[#allocation9 + $0x248] sm:$0xff]
    %v4801 = vld [vmem:[#allocation9 + $0x250] sm:$0xff]
    %v4802 = vld [vmem:[#allocation9 + $0x258] sm:$0xff]
    %v4803 = vld [vmem:[#allocation9 + $0x260] sm:$0xff]
    %v4804 = vld [vmem:[#allocation9 + $0x268] sm:$0xff]
    %v4805 = vld [vmem:[#allocation9 + $0x270] sm:$0xff]
    %v4806 = vld [vmem:[#allocation9 + $0x278] sm:$0xff]
    %v4807 = vld [vmem:[#allocation9 + $0x280] sm:$0xff]
    %v4808 = vld [vmem:[#allocation9 + $0x288] sm:$0xff]
    %v4809 = vld [vmem:[#allocation9 + $0x290] sm:$0xff]
    %v4810 = vld [vmem:[#allocation9 + $0x298] sm:$0xff]
    %v4811 = vld [vmem:[#allocation9 + $0x2a0] sm:$0xff]
    %v4812 = vld [vmem:[#allocation9 + $0x2a8] sm:$0xff]
    %v4813 = vld [vmem:[#allocation9 + $0x2b0] sm:$0xff]
    %v4814 = vld [vmem:[#allocation9 + $0x2b8] sm:$0xff]
    %v4815 = vld [vmem:[#allocation9 + $0x2c0] sm:$0xff]
    %v4816 = vld [vmem:[#allocation9 + $0x2c8] sm:$0xff]
    %v4817 = vld [vmem:[#allocation9 + $0x2d0] sm:$0xff]
    %v4818 = vld [vmem:[#allocation9 + $0x2d8] sm:$0xff]
    %v4819 = vld [vmem:[#allocation9 + $0x2e0] sm:$0xff]
    %v4820 = vld [vmem:[#allocation9 + $0x2e8] sm:$0xff]
    %v4821 = vld [vmem:[#allocation9 + $0x2f0] sm:$0xff]
    %v4822 = vld [vmem:[#allocation9 + $0x2f8] sm:$0xff]
    %v4823 = vld [vmem:[#allocation9 + $0x300] sm:$0xff]
    %v4824 = vld [vmem:[#allocation9 + $0x308] sm:$0xff]
    %v4825 = vld [vmem:[#allocation9 + $0x310] sm:$0xff]
    %v4826 = vld [vmem:[#allocation9 + $0x318] sm:$0xff]
    %v4827 = vld [vmem:[#allocation9 + $0x320] sm:$0xff]
    %v4828 = vld [vmem:[#allocation9 + $0x328] sm:$0xff]
    %v4829 = vld [vmem:[#allocation9 + $0x330] sm:$0xff]
    %v4830 = vld [vmem:[#allocation9 + $0x338] sm:$0xff]
    %v4831 = vld [vmem:[#allocation9 + $0x340] sm:$0xff]
    %v4832 = vld [vmem:[#allocation9 + $0x348] sm:$0xff]
    %v4833 = vld [vmem:[#allocation9 + $0x350] sm:$0xff]
    %v4834 = vld [vmem:[#allocation9 + $0x358] sm:$0xff]
    %v4835 = vld [vmem:[#allocation9 + $0x360] sm:$0xff]
    %v4836 = vld [vmem:[#allocation9 + $0x368] sm:$0xff]
    %v4837 = vld [vmem:[#allocation9 + $0x370] sm:$0xff]
    %v4838 = vld [vmem:[#allocation9 + $0x378] sm:$0xff]
    %v4839 = vld [vmem:[#allocation9 + $0x380] sm:$0xff]
    %v4840 = vld [vmem:[#allocation9 + $0x388] sm:$0xff]
    %v4841 = vld [vmem:[#allocation9 + $0x390] sm:$0xff]
    %v4842 = vld [vmem:[#allocation9 + $0x398] sm:$0xff]
    %v4843 = vld [vmem:[#allocation9 + $0x3a0] sm:$0xff]
    %v4844 = vld [vmem:[#allocation9 + $0x3a8] sm:$0xff]
    %v4845 = vld [vmem:[#allocation9 + $0x3b0] sm:$0xff]
    %v4846 = vld [vmem:[#allocation9 + $0x3b8] sm:$0xff]
    %v4847 = vld [vmem:[#allocation9 + $0x3c0] sm:$0xff]
    %v4848 = vld [vmem:[#allocation9 + $0x3c8] sm:$0xff]
    %v4849 = vld [vmem:[#allocation9 + $0x3d0] sm:$0xff]
    %v4850 = vld [vmem:[#allocation9 + $0x3d8] sm:$0xff]
    %v4851 = vld [vmem:[#allocation9 + $0x3e0] sm:$0xff]
    %v4852 = vld [vmem:[#allocation9 + $0x3e8] sm:$0xff]
    %v4853 = vld [vmem:[#allocation9 + $0x3f0] sm:$0xff]
    %v4854 = vld [vmem:[#allocation9 + $0x3f8] sm:$0xff]
    %v4855 = vld [vmem:[#allocation9 + $0x400] sm:$0xff]
    %v4856 = vld [vmem:[#allocation9 + $0x408] sm:$0xff]
    %v4857 = vld [vmem:[#allocation9 + $0x410] sm:$0xff]
    %v4858 = vld [vmem:[#allocation9 + $0x418] sm:$0xff]
    %v4859 = vld [vmem:[#allocation9 + $0x420] sm:$0xff]
    %v4860 = vld [vmem:[#allocation9 + $0x428] sm:$0xff]
    %v4861 = vld [vmem:[#allocation9 + $0x430] sm:$0xff]
    %v4862 = vld [vmem:[#allocation9 + $0x438] sm:$0xff]
    %v4863 = vld [vmem:[#allocation9 + $0x440] sm:$0xff]
    %v4864 = vld [vmem:[#allocation9 + $0x448] sm:$0xff]
    %v4865 = vld [vmem:[#allocation9 + $0x450] sm:$0xff]
    %v4866 = vld [vmem:[#allocation9 + $0x458] sm:$0xff]
    %v4867 = vld [vmem:[#allocation9 + $0x460] sm:$0xff]
    %v4868 = vld [vmem:[#allocation9 + $0x468] sm:$0xff]
    %v4869 = vld [vmem:[#allocation9 + $0x470] sm:$0xff]
    %v4870 = vld [vmem:[#allocation9 + $0x478] sm:$0xff]
    %v4871 = vld [vmem:[#allocation9 + $0x480] sm:$0xff]
    %v4872 = vld [vmem:[#allocation9 + $0x488] sm:$0xff]
    %v4873 = vld [vmem:[#allocation9 + $0x490] sm:$0xff]
    %v4874 = vld [vmem:[#allocation9 + $0x498] sm:$0xff]
    %v4875 = vld [vmem:[#allocation9 + $0x4a0] sm:$0xff]
    %v4876 = vld [vmem:[#allocation9 + $0x4a8] sm:$0xff]
    %v4877 = vld [vmem:[#allocation9 + $0x4b0] sm:$0xff]
    %v4878 = vld [vmem:[#allocation9 + $0x4b8] sm:$0xff]
    %v4879 = vld [vmem:[#allocation9 + $0x4c0] sm:$0xff]
    %v4880 = vld [vmem:[#allocation9 + $0x4c8] sm:$0xff]
    %v4881 = vld [vmem:[#allocation9 + $0x4d0] sm:$0xff]
    %v4882 = vld [vmem:[#allocation9 + $0x4d8] sm:$0xff]
    %v4883 = vld [vmem:[#allocation9 + $0x4e0] sm:$0xff]
    %v4884 = vld [vmem:[#allocation9 + $0x4e8] sm:$0xff]
    %v4885 = vld [vmem:[#allocation9 + $0x4f0] sm:$0xff]
    %v4886 = vld [vmem:[#allocation9 + $0x4f8] sm:$0xff]
    %v4887 = vld [vmem:[#allocation10] sm:$0xf]
    %v4888 = vpack.c.bf16 %v4722, %v4722
    %v4889 = vpack.c.bf16 %v4723, %v4723
    %v4890 = vpack.c.bf16 %v4724, %v4724
    %v4891 = vpack.c.bf16 %v4725, %v4725
    %v4892 = vpack.c.bf16 %v4726, %v4726
    %v4894 = vlaneseq
    %v4895 = vshrl.u32 %v4894, 7
    %v4896 = vsub.s32 0, %v4895
    %v4897 = vrot.slane %v4887, %v4896
    %v4898 = vlaneseq
    %v4899 = vshrl.u32 %v4898, 7
    %v4900 = vsub.s32 1, %v4899
    %v4901 = vrot.slane %v4887, %v4900
    %v4902 = vlaneseq
    %v4903 = vshrl.u32 %v4902, 7
    %v4904 = vsub.s32 2, %v4903
    %v4905 = vrot.slane %v4887, %v4904
    %v4906 = vlaneseq
    %v4907 = vshrl.u32 %v4906, 7
    %v4908 = vsub.s32 3, %v4907
    %v4909 = vrot.slane %v4887, %v4908
    %v5074 = vunpack.c.l.b16 %v4727
    %v5075 = vunpack.c.h.b16 %v4727
    %v5076 = vunpack.c.l.b16 %v4728
    %v5077 = vunpack.c.h.b16 %v4728
    %v5078 = vunpack.c.l.b16 %v4729
    %v5079 = vunpack.c.h.b16 %v4729
    %v5080 = vunpack.c.l.b16 %v4730
    %v5081 = vunpack.c.h.b16 %v4730
    %v5082 = vunpack.c.l.b16 %v4731
    %v5083 = vunpack.c.h.b16 %v4731
    %v5084 = vunpack.c.l.b16 %v4732
    %v5085 = vunpack.c.h.b16 %v4732
    %v5086 = vunpack.c.l.b16 %v4733
    %v5087 = vunpack.c.h.b16 %v4733
    %v5088 = vunpack.c.l.b16 %v4734
    %v5089 = vunpack.c.h.b16 %v4734
    %v5090 = vunpack.c.l.b16 %v4735
    %v5091 = vunpack.c.h.b16 %v4735
    %v5092 = vunpack.c.l.b16 %v4736
    %v5093 = vunpack.c.h.b16 %v4736
    %v5094 = vunpack.c.l.b16 %v4737
    %v5095 = vunpack.c.h.b16 %v4737
    %v5096 = vunpack.c.l.b16 %v4738
    %v5097 = vunpack.c.h.b16 %v4738
    %v5098 = vunpack.c.l.b16 %v4739
    %v5099 = vunpack.c.h.b16 %v4739
    %v5100 = vunpack.c.l.b16 %v4740
    %v5101 = vunpack.c.h.b16 %v4740
    %v5102 = vunpack.c.l.b16 %v4741
    %v5103 = vunpack.c.h.b16 %v4741
    %v5104 = vunpack.c.l.b16 %v4742
    %v5105 = vunpack.c.h.b16 %v4742
    %v5106 = vunpack.c.l.b16 %v4743
    %v5107 = vunpack.c.h.b16 %v4743
    %v5108 = vunpack.c.l.b16 %v4744
    %v5109 = vunpack.c.h.b16 %v4744
    %v5110 = vunpack.c.l.b16 %v4745
    %v5111 = vunpack.c.h.b16 %v4745
    %v5112 = vunpack.c.l.b16 %v4746
    %v5113 = vunpack.c.h.b16 %v4746
    %v5114 = vunpack.c.l.b16 %v4747
    %v5115 = vunpack.c.h.b16 %v4747
    %v5116 = vunpack.c.l.b16 %v4748
    %v5117 = vunpack.c.h.b16 %v4748
    %v5118 = vunpack.c.l.b16 %v4749
    %v5119 = vunpack.c.h.b16 %v4749
    %v5120 = vunpack.c.l.b16 %v4750
    %v5121 = vunpack.c.h.b16 %v4750
    %v5122 = vunpack.c.l.b16 %v4751
    %v5123 = vunpack.c.h.b16 %v4751
    %v5124 = vunpack.c.l.b16 %v4752
    %v5125 = vunpack.c.h.b16 %v4752
    %v5126 = vunpack.c.l.b16 %v4753
    %v5127 = vunpack.c.h.b16 %v4753
    %v5128 = vunpack.c.l.b16 %v4754
    %v5129 = vunpack.c.h.b16 %v4754
    %v5130 = vunpack.c.l.b16 %v4755
    %v5131 = vunpack.c.h.b16 %v4755
    %v5132 = vunpack.c.l.b16 %v4756
    %v5133 = vunpack.c.h.b16 %v4756
    %v5134 = vunpack.c.l.b16 %v4757
    %v5135 = vunpack.c.h.b16 %v4757
    %v5136 = vunpack.c.l.b16 %v4758
    %v5137 = vunpack.c.h.b16 %v4758
    %v5138 = vunpack.c.l.b16 %v4759
    %v5139 = vunpack.c.h.b16 %v4759
    %v5140 = vunpack.c.l.b16 %v4760
    %v5141 = vunpack.c.h.b16 %v4760
    %v5142 = vunpack.c.l.b16 %v4761
    %v5143 = vunpack.c.h.b16 %v4761
    %v5144 = vunpack.c.l.b16 %v4762
    %v5145 = vunpack.c.h.b16 %v4762
    %v5146 = vunpack.c.l.b16 %v4763
    %v5147 = vunpack.c.h.b16 %v4763
    %v5148 = vunpack.c.l.b16 %v4764
    %v5149 = vunpack.c.h.b16 %v4764
    %v5150 = vunpack.c.l.b16 %v4765
    %v5151 = vunpack.c.h.b16 %v4765
    %v5152 = vunpack.c.l.b16 %v4766
    %v5153 = vunpack.c.h.b16 %v4766
    %v5154 = vunpack.c.l.b16 %v4767
    %v5155 = vunpack.c.h.b16 %v4767
    %v5156 = vunpack.c.l.b16 %v4768
    %v5157 = vunpack.c.h.b16 %v4768
    %v5158 = vunpack.c.l.b16 %v4769
    %v5159 = vunpack.c.h.b16 %v4769
    %v5160 = vunpack.c.l.b16 %v4770
    %v5161 = vunpack.c.h.b16 %v4770
    %v5162 = vunpack.c.l.b16 %v4771
    %v5163 = vunpack.c.h.b16 %v4771
    %v5164 = vunpack.c.l.b16 %v4772
    %v5165 = vunpack.c.h.b16 %v4772
    %v5166 = vunpack.c.l.b16 %v4773
    %v5167 = vunpack.c.h.b16 %v4773
    %v5168 = vunpack.c.l.b16 %v4774
    %v5169 = vunpack.c.h.b16 %v4774
    %v5170 = vunpack.c.l.b16 %v4775
    %v5171 = vunpack.c.h.b16 %v4775
    %v5172 = vunpack.c.l.b16 %v4776
    %v5173 = vunpack.c.h.b16 %v4776
    %v5174 = vunpack.c.l.b16 %v4777
    %v5175 = vunpack.c.h.b16 %v4777
    %v5176 = vunpack.c.l.b16 %v4778
    %v5177 = vunpack.c.h.b16 %v4778
    %v5178 = vunpack.c.l.b16 %v4779
    %v5179 = vunpack.c.h.b16 %v4779
    %v5180 = vunpack.c.l.b16 %v4780
    %v5181 = vunpack.c.h.b16 %v4780
    %v5182 = vunpack.c.l.b16 %v4781
    %v5183 = vunpack.c.h.b16 %v4781
    %v5184 = vunpack.c.l.b16 %v4782
    %v5185 = vunpack.c.h.b16 %v4782
    %v5186 = vunpack.c.l.b16 %v4783
    %v5187 = vunpack.c.h.b16 %v4783
    %v5188 = vunpack.c.l.b16 %v4784
    %v5189 = vunpack.c.h.b16 %v4784
    %v5190 = vunpack.c.l.b16 %v4785
    %v5191 = vunpack.c.h.b16 %v4785
    %v5192 = vunpack.c.l.b16 %v4786
    %v5193 = vunpack.c.h.b16 %v4786
    %v5194 = vunpack.c.l.b16 %v4787
    %v5195 = vunpack.c.h.b16 %v4787
    %v5196 = vunpack.c.l.b16 %v4788
    %v5197 = vunpack.c.h.b16 %v4788
    %v5198 = vunpack.c.l.b16 %v4789
    %v5199 = vunpack.c.h.b16 %v4789
    %v5200 = vunpack.c.l.b16 %v4790
    %v5201 = vunpack.c.h.b16 %v4790
    %v5202 = vunpack.c.l.b16 %v4791
    %v5203 = vunpack.c.h.b16 %v4791
    %v5204 = vunpack.c.l.b16 %v4792
    %v5205 = vunpack.c.h.b16 %v4792
    %v5206 = vunpack.c.l.b16 %v4793
    %v5207 = vunpack.c.h.b16 %v4793
    %v5208 = vunpack.c.l.b16 %v4794
    %v5209 = vunpack.c.h.b16 %v4794
    %v5210 = vunpack.c.l.b16 %v4795
    %v5211 = vunpack.c.h.b16 %v4795
    %v5212 = vunpack.c.l.b16 %v4796
    %v5213 = vunpack.c.h.b16 %v4796
    %v5214 = vunpack.c.l.b16 %v4797
    %v5215 = vunpack.c.h.b16 %v4797
    %v5216 = vunpack.c.l.b16 %v4798
    %v5217 = vunpack.c.h.b16 %v4798
    %v5218 = vunpack.c.l.b16 %v4799
    %v5219 = vunpack.c.h.b16 %v4799
    %v5220 = vunpack.c.l.b16 %v4800
    %v5221 = vunpack.c.h.b16 %v4800
    %v5222 = vunpack.c.l.b16 %v4801
    %v5223 = vunpack.c.h.b16 %v4801
    %v5224 = vunpack.c.l.b16 %v4802
    %v5225 = vunpack.c.h.b16 %v4802
    %v5226 = vunpack.c.l.b16 %v4803
    %v5227 = vunpack.c.h.b16 %v4803
    %v5228 = vunpack.c.l.b16 %v4804
    %v5229 = vunpack.c.h.b16 %v4804
    %v5230 = vunpack.c.l.b16 %v4805
    %v5231 = vunpack.c.h.b16 %v4805
    %v5232 = vunpack.c.l.b16 %v4806
    %v5233 = vunpack.c.h.b16 %v4806
    %v5234 = vunpack.c.l.b16 %v4807
    %v5235 = vunpack.c.h.b16 %v4807
    %v5236 = vunpack.c.l.b16 %v4808
    %v5237 = vunpack.c.h.b16 %v4808
    %v5238 = vunpack.c.l.b16 %v4809
    %v5239 = vunpack.c.h.b16 %v4809
    %v5240 = vunpack.c.l.b16 %v4810
    %v5241 = vunpack.c.h.b16 %v4810
    %v5242 = vunpack.c.l.b16 %v4811
    %v5243 = vunpack.c.h.b16 %v4811
    %v5244 = vunpack.c.l.b16 %v4812
    %v5245 = vunpack.c.h.b16 %v4812
    %v5246 = vunpack.c.l.b16 %v4813
    %v5247 = vunpack.c.h.b16 %v4813
    %v5248 = vunpack.c.l.b16 %v4814
    %v5249 = vunpack.c.h.b16 %v4814
    %v5250 = vunpack.c.l.b16 %v4815
    %v5251 = vunpack.c.h.b16 %v4815
    %v5252 = vunpack.c.l.b16 %v4816
    %v5253 = vunpack.c.h.b16 %v4816
    %v5254 = vunpack.c.l.b16 %v4817
    %v5255 = vunpack.c.h.b16 %v4817
    %v5256 = vunpack.c.l.b16 %v4818
    %v5257 = vunpack.c.h.b16 %v4818
    %v5258 = vunpack.c.l.b16 %v4819
    %v5259 = vunpack.c.h.b16 %v4819
    %v5260 = vunpack.c.l.b16 %v4820
    %v5261 = vunpack.c.h.b16 %v4820
    %v5262 = vunpack.c.l.b16 %v4821
    %v5263 = vunpack.c.h.b16 %v4821
    %v5264 = vunpack.c.l.b16 %v4822
    %v5265 = vunpack.c.h.b16 %v4822
    %v5266 = vunpack.c.l.b16 %v4823
    %v5267 = vunpack.c.h.b16 %v4823
    %v5268 = vunpack.c.l.b16 %v4824
    %v5269 = vunpack.c.h.b16 %v4824
    %v5270 = vunpack.c.l.b16 %v4825
    %v5271 = vunpack.c.h.b16 %v4825
    %v5272 = vunpack.c.l.b16 %v4826
    %v5273 = vunpack.c.h.b16 %v4826
    %v5274 = vunpack.c.l.b16 %v4827
    %v5275 = vunpack.c.h.b16 %v4827
    %v5276 = vunpack.c.l.b16 %v4828
    %v5277 = vunpack.c.h.b16 %v4828
    %v5278 = vunpack.c.l.b16 %v4829
    %v5279 = vunpack.c.h.b16 %v4829
    %v5280 = vunpack.c.l.b16 %v4830
    %v5281 = vunpack.c.h.b16 %v4830
    %v5282 = vunpack.c.l.b16 %v4831
    %v5283 = vunpack.c.h.b16 %v4831
    %v5284 = vunpack.c.l.b16 %v4832
    %v5285 = vunpack.c.h.b16 %v4832
    %v5286 = vunpack.c.l.b16 %v4833
    %v5287 = vunpack.c.h.b16 %v4833
    %v5288 = vunpack.c.l.b16 %v4834
    %v5289 = vunpack.c.h.b16 %v4834
    %v5290 = vunpack.c.l.b16 %v4835
    %v5291 = vunpack.c.h.b16 %v4835
    %v5292 = vunpack.c.l.b16 %v4836
    %v5293 = vunpack.c.h.b16 %v4836
    %v5294 = vunpack.c.l.b16 %v4837
    %v5295 = vunpack.c.h.b16 %v4837
    %v5296 = vunpack.c.l.b16 %v4838
    %v5297 = vunpack.c.h.b16 %v4838
    %v5298 = vunpack.c.l.b16 %v4839
    %v5299 = vunpack.c.h.b16 %v4839
    %v5300 = vunpack.c.l.b16 %v4840
    %v5301 = vunpack.c.h.b16 %v4840
    %v5302 = vunpack.c.l.b16 %v4841
    %v5303 = vunpack.c.h.b16 %v4841
    %v5304 = vunpack.c.l.b16 %v4842
    %v5305 = vunpack.c.h.b16 %v4842
    %v5306 = vunpack.c.l.b16 %v4843
    %v5307 = vunpack.c.h.b16 %v4843
    %v5308 = vunpack.c.l.b16 %v4844
    %v5309 = vunpack.c.h.b16 %v4844
    %v5310 = vunpack.c.l.b16 %v4845
    %v5311 = vunpack.c.h.b16 %v4845
    %v5312 = vunpack.c.l.b16 %v4846
    %v5313 = vunpack.c.h.b16 %v4846
    %v5314 = vunpack.c.l.b16 %v4847
    %v5315 = vunpack.c.h.b16 %v4847
    %v5316 = vunpack.c.l.b16 %v4848
    %v5317 = vunpack.c.h.b16 %v4848
    %v5318 = vunpack.c.l.b16 %v4849
    %v5319 = vunpack.c.h.b16 %v4849
    %v5320 = vunpack.c.l.b16 %v4850
    %v5321 = vunpack.c.h.b16 %v4850
    %v5322 = vunpack.c.l.b16 %v4851
    %v5323 = vunpack.c.h.b16 %v4851
    %v5324 = vunpack.c.l.b16 %v4852
    %v5325 = vunpack.c.h.b16 %v4852
    %v5326 = vunpack.c.l.b16 %v4853
    %v5327 = vunpack.c.h.b16 %v4853
    %v5328 = vunpack.c.l.b16 %v4854
    %v5329 = vunpack.c.h.b16 %v4854
    %v5330 = vunpack.c.l.b16 %v4855
    %v5331 = vunpack.c.h.b16 %v4855
    %v5332 = vunpack.c.l.b16 %v4856
    %v5333 = vunpack.c.h.b16 %v4856
    %v5334 = vunpack.c.l.b16 %v4857
    %v5335 = vunpack.c.h.b16 %v4857
    %v5336 = vunpack.c.l.b16 %v4858
    %v5337 = vunpack.c.h.b16 %v4858
    %v5338 = vunpack.c.l.b16 %v4859
    %v5339 = vunpack.c.h.b16 %v4859
    %v5340 = vunpack.c.l.b16 %v4860
    %v5341 = vunpack.c.h.b16 %v4860
    %v5342 = vunpack.c.l.b16 %v4861
    %v5343 = vunpack.c.h.b16 %v4861
    %v5344 = vunpack.c.l.b16 %v4862
    %v5345 = vunpack.c.h.b16 %v4862
    %v5346 = vunpack.c.l.b16 %v4863
    %v5347 = vunpack.c.h.b16 %v4863
    %v5348 = vunpack.c.l.b16 %v4864
    %v5349 = vunpack.c.h.b16 %v4864
    %v5350 = vunpack.c.l.b16 %v4865
    %v5351 = vunpack.c.h.b16 %v4865
    %v5352 = vunpack.c.l.b16 %v4866
    %v5353 = vunpack.c.h.b16 %v4866
    %v5354 = vunpack.c.l.b16 %v4867
    %v5355 = vunpack.c.h.b16 %v4867
    %v5356 = vunpack.c.l.b16 %v4868
    %v5357 = vunpack.c.h.b16 %v4868
    %v5358 = vunpack.c.l.b16 %v4869
    %v5359 = vunpack.c.h.b16 %v4869
    %v5360 = vunpack.c.l.b16 %v4870
    %v5361 = vunpack.c.h.b16 %v4870
    %v5362 = vunpack.c.l.b16 %v4871
    %v5363 = vunpack.c.h.b16 %v4871
    %v5364 = vunpack.c.l.b16 %v4872
    %v5365 = vunpack.c.h.b16 %v4872
    %v5366 = vunpack.c.l.b16 %v4873
    %v5367 = vunpack.c.h.b16 %v4873
    %v5368 = vunpack.c.l.b16 %v4874
    %v5369 = vunpack.c.h.b16 %v4874
    %v5370 = vunpack.c.l.b16 %v4875
    %v5371 = vunpack.c.h.b16 %v4875
    %v5372 = vunpack.c.l.b16 %v4876
    %v5373 = vunpack.c.h.b16 %v4876
    %v5374 = vunpack.c.l.b16 %v4877
    %v5375 = vunpack.c.h.b16 %v4877
    %v5376 = vunpack.c.l.b16 %v4878
    %v5377 = vunpack.c.h.b16 %v4878
    %v5378 = vunpack.c.l.b16 %v4879
    %v5379 = vunpack.c.h.b16 %v4879
    %v5380 = vunpack.c.l.b16 %v4880
    %v5381 = vunpack.c.h.b16 %v4880
    %v5382 = vunpack.c.l.b16 %v4881
    %v5383 = vunpack.c.h.b16 %v4881
    %v5384 = vunpack.c.l.b16 %v4882
    %v5385 = vunpack.c.h.b16 %v4882
    %v5386 = vunpack.c.l.b16 %v4883
    %v5387 = vunpack.c.h.b16 %v4883
    %v5388 = vunpack.c.l.b16 %v4884
    %v5389 = vunpack.c.h.b16 %v4884
    %v5390 = vunpack.c.l.b16 %v4885
    %v5391 = vunpack.c.h.b16 %v4885
    %v5392 = vunpack.c.l.b16 %v4886
    %v5393 = vunpack.c.h.b16 %v4886
    %v5394 = vpack.c.b16 %v5078, %v5074
    %v5395 = vpack.c.b16 %v5079, %v5075
    %v5396 = vpack.c.b16 %v5080, %v5076
    %v5397 = vpack.c.b16 %v5081, %v5077
    %v5398 = vpack.c.b16 %v5086, %v5082
    %v5399 = vpack.c.b16 %v5087, %v5083
    %v5400 = vpack.c.b16 %v5088, %v5084
    %v5401 = vpack.c.b16 %v5089, %v5085
    %v5402 = vpack.c.b16 %v5094, %v5090
    %v5403 = vpack.c.b16 %v5095, %v5091
    %v5404 = vpack.c.b16 %v5096, %v5092
    %v5405 = vpack.c.b16 %v5097, %v5093
    %v5406 = vpack.c.b16 %v5102, %v5098
    %v5407 = vpack.c.b16 %v5103, %v5099
    %v5408 = vpack.c.b16 %v5104, %v5100
    %v5409 = vpack.c.b16 %v5105, %v5101
    %v5410 = vpack.c.b16 %v5110, %v5106
    %v5411 = vpack.c.b16 %v5111, %v5107
    %v5412 = vpack.c.b16 %v5112, %v5108
    %v5413 = vpack.c.b16 %v5113, %v5109
    %v5414 = vpack.c.b16 %v5118, %v5114
    %v5415 = vpack.c.b16 %v5119, %v5115
    %v5416 = vpack.c.b16 %v5120, %v5116
    %v5417 = vpack.c.b16 %v5121, %v5117
    %v5418 = vpack.c.b16 %v5126, %v5122
    %v5419 = vpack.c.b16 %v5127, %v5123
    %v5420 = vpack.c.b16 %v5128, %v5124
    %v5421 = vpack.c.b16 %v5129, %v5125
    %v5422 = vpack.c.b16 %v5134, %v5130
    %v5423 = vpack.c.b16 %v5135, %v5131
    %v5424 = vpack.c.b16 %v5136, %v5132
    %v5425 = vpack.c.b16 %v5137, %v5133
    %v5426 = vpack.c.b16 %v5142, %v5138
    %v5427 = vpack.c.b16 %v5143, %v5139
    %v5428 = vpack.c.b16 %v5144, %v5140
    %v5429 = vpack.c.b16 %v5145, %v5141
    %v5430 = vpack.c.b16 %v5150, %v5146
    %v5431 = vpack.c.b16 %v5151, %v5147
    %v5432 = vpack.c.b16 %v5152, %v5148
    %v5433 = vpack.c.b16 %v5153, %v5149
    %v5434 = vpack.c.b16 %v5158, %v5154
    %v5435 = vpack.c.b16 %v5159, %v5155
    %v5436 = vpack.c.b16 %v5160, %v5156
    %v5437 = vpack.c.b16 %v5161, %v5157
    %v5438 = vpack.c.b16 %v5166, %v5162
    %v5439 = vpack.c.b16 %v5167, %v5163
    %v5440 = vpack.c.b16 %v5168, %v5164
    %v5441 = vpack.c.b16 %v5169, %v5165
    %v5442 = vpack.c.b16 %v5174, %v5170
    %v5443 = vpack.c.b16 %v5175, %v5171
    %v5444 = vpack.c.b16 %v5176, %v5172
    %v5445 = vpack.c.b16 %v5177, %v5173
    %v5446 = vpack.c.b16 %v5182, %v5178
    %v5447 = vpack.c.b16 %v5183, %v5179
    %v5448 = vpack.c.b16 %v5184, %v5180
    %v5449 = vpack.c.b16 %v5185, %v5181
    %v5450 = vpack.c.b16 %v5190, %v5186
    %v5451 = vpack.c.b16 %v5191, %v5187
    %v5452 = vpack.c.b16 %v5192, %v5188
    %v5453 = vpack.c.b16 %v5193, %v5189
    %v5454 = vpack.c.b16 %v5198, %v5194
    %v5455 = vpack.c.b16 %v5199, %v5195
    %v5456 = vpack.c.b16 %v5200, %v5196
    %v5457 = vpack.c.b16 %v5201, %v5197
    %v5458 = vpack.c.b16 %v5206, %v5202
    %v5459 = vpack.c.b16 %v5207, %v5203
    %v5460 = vpack.c.b16 %v5208, %v5204
    %v5461 = vpack.c.b16 %v5209, %v5205
    %v5462 = vpack.c.b16 %v5214, %v5210
    %v5463 = vpack.c.b16 %v5215, %v5211
    %v5464 = vpack.c.b16 %v5216, %v5212
    %v5465 = vpack.c.b16 %v5217, %v5213
    %v5466 = vpack.c.b16 %v5222, %v5218
    %v5467 = vpack.c.b16 %v5223, %v5219
    %v5468 = vpack.c.b16 %v5224, %v5220
    %v5469 = vpack.c.b16 %v5225, %v5221
    %v5470 = vpack.c.b16 %v5230, %v5226
    %v5471 = vpack.c.b16 %v5231, %v5227
    %v5472 = vpack.c.b16 %v5232, %v5228
    %v5473 = vpack.c.b16 %v5233, %v5229
    %v5474 = vpack.c.b16 %v5238, %v5234
    %v5475 = vpack.c.b16 %v5239, %v5235
    %v5476 = vpack.c.b16 %v5240, %v5236
    %v5477 = vpack.c.b16 %v5241, %v5237
    %v5478 = vpack.c.b16 %v5246, %v5242
    %v5479 = vpack.c.b16 %v5247, %v5243
    %v5480 = vpack.c.b16 %v5248, %v5244
    %v5481 = vpack.c.b16 %v5249, %v5245
    %v5482 = vpack.c.b16 %v5254, %v5250
    %v5483 = vpack.c.b16 %v5255, %v5251
    %v5484 = vpack.c.b16 %v5256, %v5252
    %v5485 = vpack.c.b16 %v5257, %v5253
    %v5486 = vpack.c.b16 %v5262, %v5258
    %v5487 = vpack.c.b16 %v5263, %v5259
    %v5488 = vpack.c.b16 %v5264, %v5260
    %v5489 = vpack.c.b16 %v5265, %v5261
    %v5490 = vpack.c.b16 %v5270, %v5266
    %v5491 = vpack.c.b16 %v5271, %v5267
    %v5492 = vpack.c.b16 %v5272, %v5268
    %v5493 = vpack.c.b16 %v5273, %v5269
    %v5494 = vpack.c.b16 %v5278, %v5274
    %v5495 = vpack.c.b16 %v5279, %v5275
    %v5496 = vpack.c.b16 %v5280, %v5276
    %v5497 = vpack.c.b16 %v5281, %v5277
    %v5498 = vpack.c.b16 %v5286, %v5282
    %v5499 = vpack.c.b16 %v5287, %v5283
    %v5500 = vpack.c.b16 %v5288, %v5284
    %v5501 = vpack.c.b16 %v5289, %v5285
    %v5502 = vpack.c.b16 %v5294, %v5290
    %v5503 = vpack.c.b16 %v5295, %v5291
    %v5504 = vpack.c.b16 %v5296, %v5292
    %v5505 = vpack.c.b16 %v5297, %v5293
    %v5506 = vpack.c.b16 %v5302, %v5298
    %v5507 = vpack.c.b16 %v5303, %v5299
    %v5508 = vpack.c.b16 %v5304, %v5300
    %v5509 = vpack.c.b16 %v5305, %v5301
    %v5510 = vpack.c.b16 %v5310, %v5306
    %v5511 = vpack.c.b16 %v5311, %v5307
    %v5512 = vpack.c.b16 %v5312, %v5308
    %v5513 = vpack.c.b16 %v5313, %v5309
    %v5514 = vpack.c.b16 %v5318, %v5314
    %v5515 = vpack.c.b16 %v5319, %v5315
    %v5516 = vpack.c.b16 %v5320, %v5316
    %v5517 = vpack.c.b16 %v5321, %v5317
    %v5518 = vpack.c.b16 %v5326, %v5322
    %v5519 = vpack.c.b16 %v5327, %v5323
    %v5520 = vpack.c.b16 %v5328, %v5324
    %v5521 = vpack.c.b16 %v5329, %v5325
    %v5522 = vpack.c.b16 %v5334, %v5330
    %v5523 = vpack.c.b16 %v5335, %v5331
    %v5524 = vpack.c.b16 %v5336, %v5332
    %v5525 = vpack.c.b16 %v5337, %v5333
    %v5526 = vpack.c.b16 %v5342, %v5338
    %v5527 = vpack.c.b16 %v5343, %v5339
    %v5528 = vpack.c.b16 %v5344, %v5340
    %v5529 = vpack.c.b16 %v5345, %v5341
    %v5530 = vpack.c.b16 %v5350, %v5346
    %v5531 = vpack.c.b16 %v5351, %v5347
    %v5532 = vpack.c.b16 %v5352, %v5348
    %v5533 = vpack.c.b16 %v5353, %v5349
    %v5534 = vpack.c.b16 %v5358, %v5354
    %v5535 = vpack.c.b16 %v5359, %v5355
    %v5536 = vpack.c.b16 %v5360, %v5356
    %v5537 = vpack.c.b16 %v5361, %v5357
    %v5538 = vpack.c.b16 %v5366, %v5362
    %v5539 = vpack.c.b16 %v5367, %v5363
    %v5540 = vpack.c.b16 %v5368, %v5364
    %v5541 = vpack.c.b16 %v5369, %v5365
    %v5542 = vpack.c.b16 %v5374, %v5370
    %v5543 = vpack.c.b16 %v5375, %v5371
    %v5544 = vpack.c.b16 %v5376, %v5372
    %v5545 = vpack.c.b16 %v5377, %v5373
    %v5546 = vpack.c.b16 %v5382, %v5378
    %v5547 = vpack.c.b16 %v5383, %v5379
    %v5548 = vpack.c.b16 %v5384, %v5380
    %v5549 = vpack.c.b16 %v5385, %v5381
    %v5550 = vpack.c.b16 %v5390, %v5386
    %v5551 = vpack.c.b16 %v5391, %v5387
    %v5552 = vpack.c.b16 %v5392, %v5388
    %v5553 = vpack.c.b16 %v5393, %v5389
    %5714 = vmatprep.subr.bf16.mxu0 %v5423
    %5715 = vmatpush1.bf16.msra.mxu0 %v5422
    %5716 = vmatprep.subr.bf16.mxu0 %v5419
    %5717 = vmatpush1.bf16.msra.mxu0 %v5418
    %5718 = vmatprep.subr.bf16.mxu0 %v5415
    %5719 = vmatpush1.bf16.msra.mxu0 %v5414
    %5720 = vmatprep.subr.bf16.mxu0 %v5411
    %5721 = vmatpush1.bf16.msra.mxu0 %v5410
    %5722 = vmatprep.subr.bf16.mxu0 %v5407
    %5723 = vmatpush1.bf16.msra.mxu0 %v5406
    %5724 = vmatprep.subr.bf16.mxu0 %v5403
    %5725 = vmatpush1.bf16.msra.mxu0 %v5402
    %5726 = vmatprep.subr.bf16.mxu0 %v5399
    %5727 = vmatpush1.bf16.msra.mxu0 %v5398
    %5728 = vmatprep.subr.bf16.mxu0 %v5395
    %5729 = vmatpush1.bf16.msra.mxu0 %v5394
    %5730 = vmatprep.subr.bf16.mxu0 %v5455
    %5731 = vmatpush2.bf16.msra.mxu0 %v5454
    %5732 = vmatprep.subr.bf16.mxu0 %v5451
    %5733 = vmatpush2.bf16.msra.mxu0 %v5450
    %5734 = vmatprep.subr.bf16.mxu0 %v5447
    %5735 = vmatpush2.bf16.msra.mxu0 %v5446
    %5736 = vmatprep.subr.bf16.mxu0 %v5443
    %5737 = vmatpush2.bf16.msra.mxu0 %v5442
    %5738 = vmatprep.subr.bf16.mxu0 %v5439
    %5739 = vmatpush2.bf16.msra.mxu0 %v5438
    %5740 = vmatprep.subr.bf16.mxu0 %v5435
    %5741 = vmatpush2.bf16.msra.mxu0 %v5434
    %5742 = vmatprep.subr.bf16.mxu0 %v5431
    %5743 = vmatpush2.bf16.msra.mxu0 %v5430
    %5744 = vmatprep.subr.bf16.mxu0 %v5427
    %5745 = vmatpush2.bf16.msra.mxu0 %v5426
    %5746 = vmatprep.mubr.bf16.mxu0 %v4889
    %5747 = vmatmul.mubr.bf16.gmra.mxu0 %v4888
    %v5748 = vpop.f32.mrf.mxu0
    %v5749 = vadd.f32 %v4897, %v5748
    %v5750 = vpop.f32.mrf.mxu0
    %v5751 = vadd.f32 %v4901, %v5750
    %v5752 = vpop.f32.mrf.mxu0
    %v5753 = vpop.f32.mrf.mxu0
    %5754 = vdwg.mxu0
    %5755 = vmatprep.subr.bf16.mxu0 %v5487
    %5756 = vmatpush1.bf16.msra.mxu0 %v5486
    %5757 = vmatprep.subr.bf16.mxu0 %v5483
    %5758 = vmatpush1.bf16.msra.mxu0 %v5482
    %5759 = vmatprep.subr.bf16.mxu0 %v5479
    %5760 = vmatpush1.bf16.msra.mxu0 %v5478
    %5761 = vmatprep.subr.bf16.mxu0 %v5475
    %5762 = vmatpush1.bf16.msra.mxu0 %v5474
    %5763 = vmatprep.subr.bf16.mxu0 %v5471
    %5764 = vmatpush1.bf16.msra.mxu0 %v5470
    %5765 = vmatprep.subr.bf16.mxu0 %v5467
    %5766 = vmatpush1.bf16.msra.mxu0 %v5466
    %5767 = vmatprep.subr.bf16.mxu0 %v5463
    %5768 = vmatpush1.bf16.msra.mxu0 %v5462
    %5769 = vmatprep.subr.bf16.mxu0 %v5459
    %5770 = vmatpush1.bf16.msra.mxu0 %v5458
    %5771 = vmatprep.subr.bf16.mxu0 %v5519
    %5772 = vmatpush2.bf16.msra.mxu0 %v5518
    %5773 = vmatprep.subr.bf16.mxu0 %v5515
    %5774 = vmatpush2.bf16.msra.mxu0 %v5514
    %5775 = vmatprep.subr.bf16.mxu0 %v5511
    %5776 = vmatpush2.bf16.msra.mxu0 %v5510
    %5777 = vmatprep.subr.bf16.mxu0 %v5507
    %5778 = vmatpush2.bf16.msra.mxu0 %v5506
    %5779 = vmatprep.subr.bf16.mxu0 %v5503
    %5780 = vmatpush2.bf16.msra.mxu0 %v5502
    %5781 = vmatprep.subr.bf16.mxu0 %v5499
    %5782 = vmatpush2.bf16.msra.mxu0 %v5498
    %5783 = vmatprep.subr.bf16.mxu0 %v5495
    %5784 = vmatpush2.bf16.msra.mxu0 %v5494
    %5785 = vmatprep.subr.bf16.mxu0 %v5491
    %5786 = vmatpush2.bf16.msra.mxu0 %v5490
    %5787 = vmatprep.mubr.bf16.mxu0 %v4891
    %5788 = vmatmul.mubr.bf16.gmra.mxu0 %v4890
    %v5789 = vpop.f32.mrf.mxu0
    %v5790 = vadd.f32 %v5749, %v5789
    %v5791 = vpop.f32.mrf.mxu0
    %v5792 = vadd.f32 %v5751, %v5791
    %v5793 = vpop.f32.mrf.mxu0
    %v5794 = vpop.f32.mrf.mxu0
    %5795 = vdwg.mxu0
    %5796 = vmatprep.subr.bf16.mxu0 %v5551
    %5797 = vmatpush1.bf16.msra.mxu0 %v5550
    %5798 = vmatprep.subr.bf16.mxu0 %v5547
    %5799 = vmatpush1.bf16.msra.mxu0 %v5546
    %5800 = vmatprep.subr.bf16.mxu0 %v5543
    %5801 = vmatpush1.bf16.msra.mxu0 %v5542
    %5802 = vmatprep.subr.bf16.mxu0 %v5539
    %5803 = vmatpush1.bf16.msra.mxu0 %v5538
    %5804 = vmatprep.subr.bf16.mxu0 %v5535
    %5805 = vmatpush1.bf16.msra.mxu0 %v5534
    %5806 = vmatprep.subr.bf16.mxu0 %v5531
    %5807 = vmatpush1.bf16.msra.mxu0 %v5530
    %5808 = vmatprep.subr.bf16.mxu0 %v5527
    %5809 = vmatpush1.bf16.msra.mxu0 %v5526
    %5810 = vmatprep.subr.bf16.mxu0 %v5523
    %5811 = vmatpush1.bf16.msra.mxu0 %v5522
    %5812 = vmatprep.subr.bf16.mxu0 0
    %5813 = vmatpush2.bf16.msra.mxu0 0
    %5814 = vmatprep.subr.bf16.mxu0 0
    %5815 = vmatpush2.bf16.msra.mxu0 0
    %5816 = vmatprep.subr.bf16.mxu0 0
    %5817 = vmatpush2.bf16.msra.mxu0 0
    %5818 = vmatprep.subr.bf16.mxu0 0
    %5819 = vmatpush2.bf16.msra.mxu0 0
    %5820 = vmatprep.subr.bf16.mxu0 0
    %5821 = vmatpush2.bf16.msra.mxu0 0
    %5822 = vmatprep.subr.bf16.mxu0 0
    %5823 = vmatpush2.bf16.msra.mxu0 0
    %5824 = vmatprep.subr.bf16.mxu0 0
    %5825 = vmatpush2.bf16.msra.mxu0 0
    %5826 = vmatprep.subr.bf16.mxu0 0
    %5827 = vmatpush2.bf16.msra.mxu0 0
    %5828 = vmatprep.mubr.bf16.mxu0 0
    %5829 = vmatmul.mubr.bf16.gmra.mxu0 %v4892
    %v5830 = vpop.f32.mrf.mxu0
    %v5831 = vadd.f32 %v5790, %v5830
    %v5832 = vpop.f32.mrf.mxu0
    %v5833 = vadd.f32 %v5792, %v5832
    %v5834 = vpop.f32.mrf.mxu0
    %v5835 = vpop.f32.mrf.mxu0
    %5836 = vdwg.mxu0
    %5837 = vmatprep.subr.bf16.mxu0 %v5425
    %5838 = vmatpush1.bf16.msra.mxu0 %v5424
    %5839 = vmatprep.subr.bf16.mxu0 %v5421
    %5840 = vmatpush1.bf16.msra.mxu0 %v5420
    %5841 = vmatprep.subr.bf16.mxu0 %v5417
    %5842 = vmatpush1.bf16.msra.mxu0 %v5416
    %5843 = vmatprep.subr.bf16.mxu0 %v5413
    %5844 = vmatpush1.bf16.msra.mxu0 %v5412
    %5845 = vmatprep.subr.bf16.mxu0 %v5409
    %5846 = vmatpush1.bf16.msra.mxu0 %v5408
    %5847 = vmatprep.subr.bf16.mxu0 %v5405
    %5848 = vmatpush1.bf16.msra.mxu0 %v5404
    %5849 = vmatprep.subr.bf16.mxu0 %v5401
    %5850 = vmatpush1.bf16.msra.mxu0 %v5400
    %5851 = vmatprep.subr.bf16.mxu0 %v5397
    %5852 = vmatpush1.bf16.msra.mxu0 %v5396
    %5853 = vmatprep.subr.bf16.mxu0 %v5457
    %5854 = vmatpush2.bf16.msra.mxu0 %v5456
    %5855 = vmatprep.subr.bf16.mxu0 %v5453
    %5856 = vmatpush2.bf16.msra.mxu0 %v5452
    %5857 = vmatprep.subr.bf16.mxu0 %v5449
    %5858 = vmatpush2.bf16.msra.mxu0 %v5448
    %5859 = vmatprep.subr.bf16.mxu0 %v5445
    %5860 = vmatpush2.bf16.msra.mxu0 %v5444
    %5861 = vmatprep.subr.bf16.mxu0 %v5441
    %5862 = vmatpush2.bf16.msra.mxu0 %v5440
    %5863 = vmatprep.subr.bf16.mxu0 %v5437
    %5864 = vmatpush2.bf16.msra.mxu0 %v5436
    %5865 = vmatprep.subr.bf16.mxu0 %v5433
    %5866 = vmatpush2.bf16.msra.mxu0 %v5432
    %5867 = vmatprep.subr.bf16.mxu0 %v5429
    %5868 = vmatpush2.bf16.msra.mxu0 %v5428
    %5869 = vmatprep.mubr.bf16.mxu0 %v4889
    %5870 = vmatmul.mubr.bf16.gmra.mxu0 %v4888
    %v5871 = vpop.f32.mrf.mxu0
    %v5872 = vadd.f32 %v4905, %v5871
    %v5873 = vpop.f32.mrf.mxu0
    %v5874 = vadd.f32 %v4909, %v5873
    %v5875 = vpop.f32.mrf.mxu0
    %v5876 = vpop.f32.mrf.mxu0
    %5877 = vdwg.mxu0
    %5878 = vmatprep.subr.bf16.mxu0 %v5489
    %5879 = vmatpush1.bf16.msra.mxu0 %v5488
    %5880 = vmatprep.subr.bf16.mxu0 %v5485
    %5881 = vmatpush1.bf16.msra.mxu0 %v5484
    %5882 = vmatprep.subr.bf16.mxu0 %v5481
    %5883 = vmatpush1.bf16.msra.mxu0 %v5480
    %5884 = vmatprep.subr.bf16.mxu0 %v5477
    %5885 = vmatpush1.bf16.msra.mxu0 %v5476
    %5886 = vmatprep.subr.bf16.mxu0 %v5473
    %5887 = vmatpush1.bf16.msra.mxu0 %v5472
    %5888 = vmatprep.subr.bf16.mxu0 %v5469
    %5889 = vmatpush1.bf16.msra.mxu0 %v5468
    %5890 = vmatprep.subr.bf16.mxu0 %v5465
    %5891 = vmatpush1.bf16.msra.mxu0 %v5464
    %5892 = vmatprep.subr.bf16.mxu0 %v5461
    %5893 = vmatpush1.bf16.msra.mxu0 %v5460
    %5894 = vmatprep.subr.bf16.mxu0 %v5521
    %5895 = vmatpush2.bf16.msra.mxu0 %v5520
    %5896 = vmatprep.subr.bf16.mxu0 %v5517
    %5897 = vmatpush2.bf16.msra.mxu0 %v5516
    %5898 = vmatprep.subr.bf16.mxu0 %v5513
    %5899 = vmatpush2.bf16.msra.mxu0 %v5512
    %5900 = vmatprep.subr.bf16.mxu0 %v5509
    %5901 = vmatpush2.bf16.msra.mxu0 %v5508
    %5902 = vmatprep.subr.bf16.mxu0 %v5505
    %5903 = vmatpush2.bf16.msra.mxu0 %v5504
    %5904 = vmatprep.subr.bf16.mxu0 %v5501
    %5905 = vmatpush2.bf16.msra.mxu0 %v5500
    %5906 = vmatprep.subr.bf16.mxu0 %v5497
    %5907 = vmatpush2.bf16.msra.mxu0 %v5496
    %5908 = vmatprep.subr.bf16.mxu0 %v5493
    %5909 = vmatpush2.bf16.msra.mxu0 %v5492
    %5910 = vmatprep.mubr.bf16.mxu0 %v4891
    %5911 = vmatmul.mubr.bf16.gmra.mxu0 %v4890
    %v5912 = vpop.f32.mrf.mxu0
    %v5913 = vadd.f32 %v5872, %v5912
    %v5914 = vpop.f32.mrf.mxu0
    %v5915 = vadd.f32 %v5874, %v5914
    %v5916 = vpop.f32.mrf.mxu0
    %v5917 = vpop.f32.mrf.mxu0
    %5918 = vdwg.mxu0
    %5919 = vmatprep.subr.bf16.mxu0 %v5553
    %5920 = vmatpush1.bf16.msra.mxu0 %v5552
    %5921 = vmatprep.subr.bf16.mxu0 %v5549
    %5922 = vmatpush1.bf16.msra.mxu0 %v5548
    %5923 = vmatprep.subr.bf16.mxu0 %v5545
    %5924 = vmatpush1.bf16.msra.mxu0 %v5544
    %5925 = vmatprep.subr.bf16.mxu0 %v5541
    %5926 = vmatpush1.bf16.msra.mxu0 %v5540
    %5927 = vmatprep.subr.bf16.mxu0 %v5537
    %5928 = vmatpush1.bf16.msra.mxu0 %v5536
    %5929 = vmatprep.subr.bf16.mxu0 %v5533
    %5930 = vmatpush1.bf16.msra.mxu0 %v5532
    %5931 = vmatprep.subr.bf16.mxu0 %v5529
    %5932 = vmatpush1.bf16.msra.mxu0 %v5528
    %5933 = vmatprep.subr.bf16.mxu0 %v5525
    %5934 = vmatpush1.bf16.msra.mxu0 %v5524
    %5935 = vmatprep.subr.bf16.mxu0 0
    %5936 = vmatpush2.bf16.msra.mxu0 0
    %5937 = vmatprep.subr.bf16.mxu0 0
    %5938 = vmatpush2.bf16.msra.mxu0 0
    %5939 = vmatprep.subr.bf16.mxu0 0
    %5940 = vmatpush2.bf16.msra.mxu0 0
    %5941 = vmatprep.subr.bf16.mxu0 0
    %5942 = vmatpush2.bf16.msra.mxu0 0
    %5943 = vmatprep.subr.bf16.mxu0 0
    %5944 = vmatpush2.bf16.msra.mxu0 0
    %5945 = vmatprep.subr.bf16.mxu0 0
    %5946 = vmatpush2.bf16.msra.mxu0 0
    %5947 = vmatprep.subr.bf16.mxu0 0
    %5948 = vmatpush2.bf16.msra.mxu0 0
    %5949 = vmatprep.subr.bf16.mxu0 0
    %5950 = vmatpush2.bf16.msra.mxu0 0
    %5951 = vmatprep.mubr.bf16.mxu0 0
    %5952 = vmatmul.mubr.bf16.gmra.mxu0 %v4892
    %v5953 = vpop.f32.mrf.mxu0
    %v5954 = vadd.f32 %v5913, %v5953
    %v5955 = vpop.f32.mrf.mxu0
    %v5956 = vadd.f32 %v5915, %v5955
    %v5957 = vpop.f32.mrf.mxu0
    %v5958 = vpop.f32.mrf.mxu0
    %5959 = vdwg.mxu0
    %v5960 = vmax.f32 %v5831, 0.0
    %v5961 = vmax.f32 %v5833, 0.0
    %v5962 = vmax.f32 %v5954, 0.0
    %v5963 = vmax.f32 %v5956, 0.0
    %v5964 = vld [vmem:[#allocation12] sm:$0xff]
    %v5965 = vld [vmem:[#allocation12 + $0x8] sm:$0xf]
    %v5966 = vld [vmem:[#allocation12 + $0xc] sm:$0xff]
    %v5967 = vld [vmem:[#allocation12 + $0x14] sm:$0xf]
    %v5968 = vld [vmem:[#allocation12 + $0x18] sm:$0xff]
    %v5969 = vld [vmem:[#allocation12 + $0x20] sm:$0xf]
    %v5970 = vld [vmem:[#allocation12 + $0x24] sm:$0xff]
    %v5971 = vld [vmem:[#allocation12 + $0x2c] sm:$0xf]
    %v5972 = vld [vmem:[#allocation12 + $0x30] sm:$0xff]
    %v5973 = vld [vmem:[#allocation12 + $0x38] sm:$0xf]
    %v5974 = vld [vmem:[#allocation12 + $0x3c] sm:$0xff]
    %v5975 = vld [vmem:[#allocation12 + $0x44] sm:$0xf]
    %v5976 = vld [vmem:[#allocation12 + $0x48] sm:$0xff]
    %v5977 = vld [vmem:[#allocation12 + $0x50] sm:$0xf]
    %v5978 = vld [vmem:[#allocation12 + $0x54] sm:$0xff]
    %v5979 = vld [vmem:[#allocation12 + $0x5c] sm:$0xf]
    %v5980 = vld [vmem:[#allocation12 + $0x60] sm:$0xff]
    %v5981 = vld [vmem:[#allocation12 + $0x68] sm:$0xf]
    %v5982 = vld [vmem:[#allocation12 + $0x6c] sm:$0xff]
    %v5983 = vld [vmem:[#allocation12 + $0x74] sm:$0xf]
    %v5984 = vld [vmem:[#allocation12 + $0x78] sm:$0xff]
    %v5985 = vld [vmem:[#allocation12 + $0x80] sm:$0xf]
    %v5986 = vld [vmem:[#allocation12 + $0x84] sm:$0xff]
    %v5987 = vld [vmem:[#allocation12 + $0x8c] sm:$0xf]
    %v5988 = vld [vmem:[#allocation12 + $0x90] sm:$0xff]
    %v5989 = vld [vmem:[#allocation12 + $0x98] sm:$0xf]
    %v5990 = vld [vmem:[#allocation12 + $0x9c] sm:$0xff]
    %v5991 = vld [vmem:[#allocation12 + $0xa4] sm:$0xf]
    %v5992 = vld [vmem:[#allocation12 + $0xa8] sm:$0xff]
    %v5993 = vld [vmem:[#allocation12 + $0xb0] sm:$0xf]
    %v5994 = vld [vmem:[#allocation12 + $0xb4] sm:$0xff]
    %v5995 = vld [vmem:[#allocation12 + $0xbc] sm:$0xf]
    %v5996 = vld [vmem:[#allocation12 + $0xc0] sm:$0xff]
    %v5997 = vld [vmem:[#allocation12 + $0xc8] sm:$0xf]
    %v5998 = vld [vmem:[#allocation12 + $0xcc] sm:$0xff]
    %v5999 = vld [vmem:[#allocation12 + $0xd4] sm:$0xf]
    %v6000 = vld [vmem:[#allocation12 + $0xd8] sm:$0xff]
    %v6001 = vld [vmem:[#allocation12 + $0xe0] sm:$0xf]
    %v6002 = vld [vmem:[#allocation12 + $0xe4] sm:$0xff]
    %v6003 = vld [vmem:[#allocation12 + $0xec] sm:$0xf]
    %v6004 = vld [vmem:[#allocation12 + $0xf0] sm:$0xff]
    %v6005 = vld [vmem:[#allocation12 + $0xf8] sm:$0xf]
    %v6006 = vld [vmem:[#allocation12 + $0xfc] sm:$0xff]
    %v6007 = vld [vmem:[#allocation12 + $0x104] sm:$0xf]
    %v6008 = vld [vmem:[#allocation12 + $0x108] sm:$0xff]
    %v6009 = vld [vmem:[#allocation12 + $0x110] sm:$0xf]
    %v6010 = vld [vmem:[#allocation12 + $0x114] sm:$0xff]
    %v6011 = vld [vmem:[#allocation12 + $0x11c] sm:$0xf]
    %v6012 = vld [vmem:[#allocation12 + $0x120] sm:$0xff]
    %v6013 = vld [vmem:[#allocation12 + $0x128] sm:$0xf]
    %v6014 = vld [vmem:[#allocation12 + $0x12c] sm:$0xff]
    %v6015 = vld [vmem:[#allocation12 + $0x134] sm:$0xf]
    %v6016 = vld [vmem:[#allocation12 + $0x138] sm:$0xff]
    %v6017 = vld [vmem:[#allocation12 + $0x140] sm:$0xf]
    %v6018 = vld [vmem:[#allocation12 + $0x144] sm:$0xff]
    %v6019 = vld [vmem:[#allocation12 + $0x14c] sm:$0xf]
    %v6020 = vld [vmem:[#allocation12 + $0x150] sm:$0xff]
    %v6021 = vld [vmem:[#allocation12 + $0x158] sm:$0xf]
    %v6022 = vld [vmem:[#allocation12 + $0x15c] sm:$0xff]
    %v6023 = vld [vmem:[#allocation12 + $0x164] sm:$0xf]
    %v6024 = vld [vmem:[#allocation12 + $0x168] sm:$0xff]
    %v6025 = vld [vmem:[#allocation12 + $0x170] sm:$0xf]
    %v6026 = vld [vmem:[#allocation12 + $0x174] sm:$0xff]
    %v6027 = vld [vmem:[#allocation12 + $0x17c] sm:$0xf]
    %v6028 = vld [vmem:[#allocation12 + $0x180] sm:$0xff]
    %v6029 = vld [vmem:[#allocation12 + $0x188] sm:$0xf]
    %v6030 = vld [vmem:[#allocation12 + $0x18c] sm:$0xff]
    %v6031 = vld [vmem:[#allocation12 + $0x194] sm:$0xf]
    %v6032 = vld [vmem:[#allocation12 + $0x198] sm:$0xff]
    %v6033 = vld [vmem:[#allocation12 + $0x1a0] sm:$0xf]
    %v6034 = vld [vmem:[#allocation12 + $0x1a4] sm:$0xff]
    %v6035 = vld [vmem:[#allocation12 + $0x1ac] sm:$0xf]
    %v6036 = vld [vmem:[#allocation12 + $0x1b0] sm:$0xff]
    %v6037 = vld [vmem:[#allocation12 + $0x1b8] sm:$0xf]
    %v6038 = vld [vmem:[#allocation12 + $0x1bc] sm:$0xff]
    %v6039 = vld [vmem:[#allocation12 + $0x1c4] sm:$0xf]
    %v6040 = vld [vmem:[#allocation12 + $0x1c8] sm:$0xff]
    %v6041 = vld [vmem:[#allocation12 + $0x1d0] sm:$0xf]
    %v6042 = vld [vmem:[#allocation12 + $0x1d4] sm:$0xff]
    %v6043 = vld [vmem:[#allocation12 + $0x1dc] sm:$0xf]
    %v6044 = vld [vmem:[#allocation12 + $0x1e0] sm:$0xff]
    %v6045 = vld [vmem:[#allocation12 + $0x1e8] sm:$0xf]
    %v6046 = vld [vmem:[#allocation12 + $0x1ec] sm:$0xff]
    %v6047 = vld [vmem:[#allocation12 + $0x1f4] sm:$0xf]
    %v6048 = vld [vmem:[#allocation12 + $0x1f8] sm:$0xff]
    %v6049 = vld [vmem:[#allocation12 + $0x200] sm:$0xf]
    %v6050 = vld [vmem:[#allocation12 + $0x204] sm:$0xff]
    %v6051 = vld [vmem:[#allocation12 + $0x20c] sm:$0xf]
    %v6052 = vld [vmem:[#allocation12 + $0x210] sm:$0xff]
    %v6053 = vld [vmem:[#allocation12 + $0x218] sm:$0xf]
    %v6054 = vld [vmem:[#allocation12 + $0x21c] sm:$0xff]
    %v6055 = vld [vmem:[#allocation12 + $0x224] sm:$0xf]
    %v6056 = vld [vmem:[#allocation12 + $0x228] sm:$0xff]
    %v6057 = vld [vmem:[#allocation12 + $0x230] sm:$0xf]
    %v6058 = vld [vmem:[#allocation12 + $0x234] sm:$0xff]
    %v6059 = vld [vmem:[#allocation12 + $0x23c] sm:$0xf]
    %v6060 = vld [vmem:[#allocation12 + $0x240] sm:$0xff]
    %v6061 = vld [vmem:[#allocation12 + $0x248] sm:$0xf]
    %v6062 = vld [vmem:[#allocation12 + $0x24c] sm:$0xff]
    %v6063 = vld [vmem:[#allocation12 + $0x254] sm:$0xf]
    %v6064 = vld [vmem:[#allocation12 + $0x258] sm:$0xff]
    %v6065 = vld [vmem:[#allocation12 + $0x260] sm:$0xf]
    %v6066 = vld [vmem:[#allocation12 + $0x264] sm:$0xff]
    %v6067 = vld [vmem:[#allocation12 + $0x26c] sm:$0xf]
    %v6068 = vld [vmem:[#allocation12 + $0x270] sm:$0xff]
    %v6069 = vld [vmem:[#allocation12 + $0x278] sm:$0xf]
    %v6070 = vld [vmem:[#allocation12 + $0x27c] sm:$0xff]
    %v6071 = vld [vmem:[#allocation12 + $0x284] sm:$0xf]
    %v6072 = vld [vmem:[#allocation12 + $0x288] sm:$0xff]
    %v6073 = vld [vmem:[#allocation12 + $0x290] sm:$0xf]
    %v6074 = vld [vmem:[#allocation12 + $0x294] sm:$0xff]
    %v6075 = vld [vmem:[#allocation12 + $0x29c] sm:$0xf]
    %v6076 = vld [vmem:[#allocation12 + $0x2a0] sm:$0xff]
    %v6077 = vld [vmem:[#allocation12 + $0x2a8] sm:$0xf]
    %v6078 = vld [vmem:[#allocation12 + $0x2ac] sm:$0xff]
    %v6079 = vld [vmem:[#allocation12 + $0x2b4] sm:$0xf]
    %v6080 = vld [vmem:[#allocation12 + $0x2b8] sm:$0xff]
    %v6081 = vld [vmem:[#allocation12 + $0x2c0] sm:$0xf]
    %v6082 = vld [vmem:[#allocation12 + $0x2c4] sm:$0xff]
    %v6083 = vld [vmem:[#allocation12 + $0x2cc] sm:$0xf]
    %v6084 = vld [vmem:[#allocation12 + $0x2d0] sm:$0xff]
    %v6085 = vld [vmem:[#allocation12 + $0x2d8] sm:$0xf]
    %v6086 = vld [vmem:[#allocation12 + $0x2dc] sm:$0xff]
    %v6087 = vld [vmem:[#allocation12 + $0x2e4] sm:$0xf]
    %v6088 = vld [vmem:[#allocation12 + $0x2e8] sm:$0xff]
    %v6089 = vld [vmem:[#allocation12 + $0x2f0] sm:$0xf]
    %v6090 = vld [vmem:[#allocation12 + $0x2f4] sm:$0xff]
    %v6091 = vld [vmem:[#allocation12 + $0x2fc] sm:$0xf]
    %v6092 = vld [vmem:[#allocation13] sm:$0x7]
    %v6093 = vpack.c.bf16 %v5960, %v5960
    %v6094 = vpack.c.bf16 %v5961, %v5961
    %v6095 = vpack.c.bf16 %v5962, %v5962
    %v6096 = vpack.c.bf16 %v5963, %v5963
    %v6098 = vlaneseq
    %v6099 = vshrl.u32 %v6098, 7
    %v6100 = vsub.s32 0, %v6099
    %v6101 = vrot.slane %v6092, %v6100
    %v6102 = vlaneseq
    %v6103 = vshrl.u32 %v6102, 7
    %v6104 = vsub.s32 1, %v6103
    %v6105 = vrot.slane %v6092, %v6104
    %v6106 = vlaneseq
    %v6107 = vshrl.u32 %v6106, 7
    %v6108 = vsub.s32 2, %v6107
    %v6109 = vrot.slane %v6092, %v6108
    %v6241 = vunpack.c.l.b16 %v5964
    %v6242 = vunpack.c.h.b16 %v5964
    %v6243 = vunpack.c.l.b16 %v5965
    %v6244 = vunpack.c.l.b16 %v5966
    %v6245 = vunpack.c.h.b16 %v5966
    %v6246 = vunpack.c.l.b16 %v5967
    %v6247 = vunpack.c.l.b16 %v5968
    %v6248 = vunpack.c.h.b16 %v5968
    %v6249 = vunpack.c.l.b16 %v5969
    %v6250 = vunpack.c.l.b16 %v5970
    %v6251 = vunpack.c.h.b16 %v5970
    %v6252 = vunpack.c.l.b16 %v5971
    %v6253 = vunpack.c.l.b16 %v5972
    %v6254 = vunpack.c.h.b16 %v5972
    %v6255 = vunpack.c.l.b16 %v5973
    %v6256 = vunpack.c.l.b16 %v5974
    %v6257 = vunpack.c.h.b16 %v5974
    %v6258 = vunpack.c.l.b16 %v5975
    %v6259 = vunpack.c.l.b16 %v5976
    %v6260 = vunpack.c.h.b16 %v5976
    %v6261 = vunpack.c.l.b16 %v5977
    %v6262 = vunpack.c.l.b16 %v5978
    %v6263 = vunpack.c.h.b16 %v5978
    %v6264 = vunpack.c.l.b16 %v5979
    %v6265 = vunpack.c.l.b16 %v5980
    %v6266 = vunpack.c.h.b16 %v5980
    %v6267 = vunpack.c.l.b16 %v5981
    %v6268 = vunpack.c.l.b16 %v5982
    %v6269 = vunpack.c.h.b16 %v5982
    %v6270 = vunpack.c.l.b16 %v5983
    %v6271 = vunpack.c.l.b16 %v5984
    %v6272 = vunpack.c.h.b16 %v5984
    %v6273 = vunpack.c.l.b16 %v5985
    %v6274 = vunpack.c.l.b16 %v5986
    %v6275 = vunpack.c.h.b16 %v5986
    %v6276 = vunpack.c.l.b16 %v5987
    %v6277 = vunpack.c.l.b16 %v5988
    %v6278 = vunpack.c.h.b16 %v5988
    %v6279 = vunpack.c.l.b16 %v5989
    %v6280 = vunpack.c.l.b16 %v5990
    %v6281 = vunpack.c.h.b16 %v5990
    %v6282 = vunpack.c.l.b16 %v5991
    %v6283 = vunpack.c.l.b16 %v5992
    %v6284 = vunpack.c.h.b16 %v5992
    %v6285 = vunpack.c.l.b16 %v5993
    %v6286 = vunpack.c.l.b16 %v5994
    %v6287 = vunpack.c.h.b16 %v5994
    %v6288 = vunpack.c.l.b16 %v5995
    %v6289 = vunpack.c.l.b16 %v5996
    %v6290 = vunpack.c.h.b16 %v5996
    %v6291 = vunpack.c.l.b16 %v5997
    %v6292 = vunpack.c.l.b16 %v5998
    %v6293 = vunpack.c.h.b16 %v5998
    %v6294 = vunpack.c.l.b16 %v5999
    %v6295 = vunpack.c.l.b16 %v6000
    %v6296 = vunpack.c.h.b16 %v6000
    %v6297 = vunpack.c.l.b16 %v6001
    %v6298 = vunpack.c.l.b16 %v6002
    %v6299 = vunpack.c.h.b16 %v6002
    %v6300 = vunpack.c.l.b16 %v6003
    %v6301 = vunpack.c.l.b16 %v6004
    %v6302 = vunpack.c.h.b16 %v6004
    %v6303 = vunpack.c.l.b16 %v6005
    %v6304 = vunpack.c.l.b16 %v6006
    %v6305 = vunpack.c.h.b16 %v6006
    %v6306 = vunpack.c.l.b16 %v6007
    %v6307 = vunpack.c.l.b16 %v6008
    %v6308 = vunpack.c.h.b16 %v6008
    %v6309 = vunpack.c.l.b16 %v6009
    %v6310 = vunpack.c.l.b16 %v6010
    %v6311 = vunpack.c.h.b16 %v6010
    %v6312 = vunpack.c.l.b16 %v6011
    %v6313 = vunpack.c.l.b16 %v6012
    %v6314 = vunpack.c.h.b16 %v6012
    %v6315 = vunpack.c.l.b16 %v6013
    %v6316 = vunpack.c.l.b16 %v6014
    %v6317 = vunpack.c.h.b16 %v6014
    %v6318 = vunpack.c.l.b16 %v6015
    %v6319 = vunpack.c.l.b16 %v6016
    %v6320 = vunpack.c.h.b16 %v6016
    %v6321 = vunpack.c.l.b16 %v6017
    %v6322 = vunpack.c.l.b16 %v6018
    %v6323 = vunpack.c.h.b16 %v6018
    %v6324 = vunpack.c.l.b16 %v6019
    %v6325 = vunpack.c.l.b16 %v6020
    %v6326 = vunpack.c.h.b16 %v6020
    %v6327 = vunpack.c.l.b16 %v6021
    %v6328 = vunpack.c.l.b16 %v6022
    %v6329 = vunpack.c.h.b16 %v6022
    %v6330 = vunpack.c.l.b16 %v6023
    %v6331 = vunpack.c.l.b16 %v6024
    %v6332 = vunpack.c.h.b16 %v6024
    %v6333 = vunpack.c.l.b16 %v6025
    %v6334 = vunpack.c.l.b16 %v6026
    %v6335 = vunpack.c.h.b16 %v6026
    %v6336 = vunpack.c.l.b16 %v6027
    %v6337 = vunpack.c.l.b16 %v6028
    %v6338 = vunpack.c.h.b16 %v6028
    %v6339 = vunpack.c.l.b16 %v6029
    %v6340 = vunpack.c.l.b16 %v6030
    %v6341 = vunpack.c.h.b16 %v6030
    %v6342 = vunpack.c.l.b16 %v6031
    %v6343 = vunpack.c.l.b16 %v6032
    %v6344 = vunpack.c.h.b16 %v6032
    %v6345 = vunpack.c.l.b16 %v6033
    %v6346 = vunpack.c.l.b16 %v6034
    %v6347 = vunpack.c.h.b16 %v6034
    %v6348 = vunpack.c.l.b16 %v6035
    %v6349 = vunpack.c.l.b16 %v6036
    %v6350 = vunpack.c.h.b16 %v6036
    %v6351 = vunpack.c.l.b16 %v6037
    %v6352 = vunpack.c.l.b16 %v6038
    %v6353 = vunpack.c.h.b16 %v6038
    %v6354 = vunpack.c.l.b16 %v6039
    %v6355 = vunpack.c.l.b16 %v6040
    %v6356 = vunpack.c.h.b16 %v6040
    %v6357 = vunpack.c.l.b16 %v6041
    %v6358 = vunpack.c.l.b16 %v6042
    %v6359 = vunpack.c.h.b16 %v6042
    %v6360 = vunpack.c.l.b16 %v6043
    %v6361 = vunpack.c.l.b16 %v6044
    %v6362 = vunpack.c.h.b16 %v6044
    %v6363 = vunpack.c.l.b16 %v6045
    %v6364 = vunpack.c.l.b16 %v6046
    %v6365 = vunpack.c.h.b16 %v6046
    %v6366 = vunpack.c.l.b16 %v6047
    %v6367 = vunpack.c.l.b16 %v6048
    %v6368 = vunpack.c.h.b16 %v6048
    %v6369 = vunpack.c.l.b16 %v6049
    %v6370 = vunpack.c.l.b16 %v6050
    %v6371 = vunpack.c.h.b16 %v6050
    %v6372 = vunpack.c.l.b16 %v6051
    %v6373 = vunpack.c.l.b16 %v6052
    %v6374 = vunpack.c.h.b16 %v6052
    %v6375 = vunpack.c.l.b16 %v6053
    %v6376 = vunpack.c.l.b16 %v6054
    %v6377 = vunpack.c.h.b16 %v6054
    %v6378 = vunpack.c.l.b16 %v6055
    %v6379 = vunpack.c.l.b16 %v6056
    %v6380 = vunpack.c.h.b16 %v6056
    %v6381 = vunpack.c.l.b16 %v6057
    %v6382 = vunpack.c.l.b16 %v6058
    %v6383 = vunpack.c.h.b16 %v6058
    %v6384 = vunpack.c.l.b16 %v6059
    %v6385 = vunpack.c.l.b16 %v6060
    %v6386 = vunpack.c.h.b16 %v6060
    %v6387 = vunpack.c.l.b16 %v6061
    %v6388 = vunpack.c.l.b16 %v6062
    %v6389 = vunpack.c.h.b16 %v6062
    %v6390 = vunpack.c.l.b16 %v6063
    %v6391 = vunpack.c.l.b16 %v6064
    %v6392 = vunpack.c.h.b16 %v6064
    %v6393 = vunpack.c.l.b16 %v6065
    %v6394 = vunpack.c.l.b16 %v6066
    %v6395 = vunpack.c.h.b16 %v6066
    %v6396 = vunpack.c.l.b16 %v6067
    %v6397 = vunpack.c.l.b16 %v6068
    %v6398 = vunpack.c.h.b16 %v6068
    %v6399 = vunpack.c.l.b16 %v6069
    %v6400 = vunpack.c.l.b16 %v6070
    %v6401 = vunpack.c.h.b16 %v6070
    %v6402 = vunpack.c.l.b16 %v6071
    %v6403 = vunpack.c.l.b16 %v6072
    %v6404 = vunpack.c.h.b16 %v6072
    %v6405 = vunpack.c.l.b16 %v6073
    %v6406 = vunpack.c.l.b16 %v6074
    %v6407 = vunpack.c.h.b16 %v6074
    %v6408 = vunpack.c.l.b16 %v6075
    %v6409 = vunpack.c.l.b16 %v6076
    %v6410 = vunpack.c.h.b16 %v6076
    %v6411 = vunpack.c.l.b16 %v6077
    %v6412 = vunpack.c.l.b16 %v6078
    %v6413 = vunpack.c.h.b16 %v6078
    %v6414 = vunpack.c.l.b16 %v6079
    %v6415 = vunpack.c.l.b16 %v6080
    %v6416 = vunpack.c.h.b16 %v6080
    %v6417 = vunpack.c.l.b16 %v6081
    %v6418 = vunpack.c.l.b16 %v6082
    %v6419 = vunpack.c.h.b16 %v6082
    %v6420 = vunpack.c.l.b16 %v6083
    %v6421 = vunpack.c.l.b16 %v6084
    %v6422 = vunpack.c.h.b16 %v6084
    %v6423 = vunpack.c.l.b16 %v6085
    %v6424 = vunpack.c.l.b16 %v6086
    %v6425 = vunpack.c.h.b16 %v6086
    %v6426 = vunpack.c.l.b16 %v6087
    %v6427 = vunpack.c.l.b16 %v6088
    %v6428 = vunpack.c.h.b16 %v6088
    %v6429 = vunpack.c.l.b16 %v6089
    %v6430 = vunpack.c.l.b16 %v6090
    %v6431 = vunpack.c.h.b16 %v6090
    %v6432 = vunpack.c.l.b16 %v6091
    %v6433 = vpack.c.b16 %v6244, %v6241
    %v6434 = vpack.c.b16 %v6245, %v6242
    %v6435 = vpack.c.b16 %v6246, %v6243
    %v6436 = vpack.c.b16 %v6250, %v6247
    %v6437 = vpack.c.b16 %v6251, %v6248
    %v6438 = vpack.c.b16 %v6252, %v6249
    %v6439 = vpack.c.b16 %v6256, %v6253
    %v6440 = vpack.c.b16 %v6257, %v6254
    %v6441 = vpack.c.b16 %v6258, %v6255
    %v6442 = vpack.c.b16 %v6262, %v6259
    %v6443 = vpack.c.b16 %v6263, %v6260
    %v6444 = vpack.c.b16 %v6264, %v6261
    %v6445 = vpack.c.b16 %v6268, %v6265
    %v6446 = vpack.c.b16 %v6269, %v6266
    %v6447 = vpack.c.b16 %v6270, %v6267
    %v6448 = vpack.c.b16 %v6274, %v6271
    %v6449 = vpack.c.b16 %v6275, %v6272
    %v6450 = vpack.c.b16 %v6276, %v6273
    %v6451 = vpack.c.b16 %v6280, %v6277
    %v6452 = vpack.c.b16 %v6281, %v6278
    %v6453 = vpack.c.b16 %v6282, %v6279
    %v6454 = vpack.c.b16 %v6286, %v6283
    %v6455 = vpack.c.b16 %v6287, %v6284
    %v6456 = vpack.c.b16 %v6288, %v6285
    %v6457 = vpack.c.b16 %v6292, %v6289
    %v6458 = vpack.c.b16 %v6293, %v6290
    %v6459 = vpack.c.b16 %v6294, %v6291
    %v6460 = vpack.c.b16 %v6298, %v6295
    %v6461 = vpack.c.b16 %v6299, %v6296
    %v6462 = vpack.c.b16 %v6300, %v6297
    %v6463 = vpack.c.b16 %v6304, %v6301
    %v6464 = vpack.c.b16 %v6305, %v6302
    %v6465 = vpack.c.b16 %v6306, %v6303
    %v6466 = vpack.c.b16 %v6310, %v6307
    %v6467 = vpack.c.b16 %v6311, %v6308
    %v6468 = vpack.c.b16 %v6312, %v6309
    %v6469 = vpack.c.b16 %v6316, %v6313
    %v6470 = vpack.c.b16 %v6317, %v6314
    %v6471 = vpack.c.b16 %v6318, %v6315
    %v6472 = vpack.c.b16 %v6322, %v6319
    %v6473 = vpack.c.b16 %v6323, %v6320
    %v6474 = vpack.c.b16 %v6324, %v6321
    %v6475 = vpack.c.b16 %v6328, %v6325
    %v6476 = vpack.c.b16 %v6329, %v6326
    %v6477 = vpack.c.b16 %v6330, %v6327
    %v6478 = vpack.c.b16 %v6334, %v6331
    %v6479 = vpack.c.b16 %v6335, %v6332
    %v6480 = vpack.c.b16 %v6336, %v6333
    %v6481 = vpack.c.b16 %v6340, %v6337
    %v6482 = vpack.c.b16 %v6341, %v6338
    %v6483 = vpack.c.b16 %v6342, %v6339
    %v6484 = vpack.c.b16 %v6346, %v6343
    %v6485 = vpack.c.b16 %v6347, %v6344
    %v6486 = vpack.c.b16 %v6348, %v6345
    %v6487 = vpack.c.b16 %v6352, %v6349
    %v6488 = vpack.c.b16 %v6353, %v6350
    %v6489 = vpack.c.b16 %v6354, %v6351
    %v6490 = vpack.c.b16 %v6358, %v6355
    %v6491 = vpack.c.b16 %v6359, %v6356
    %v6492 = vpack.c.b16 %v6360, %v6357
    %v6493 = vpack.c.b16 %v6364, %v6361
    %v6494 = vpack.c.b16 %v6365, %v6362
    %v6495 = vpack.c.b16 %v6366, %v6363
    %v6496 = vpack.c.b16 %v6370, %v6367
    %v6497 = vpack.c.b16 %v6371, %v6368
    %v6498 = vpack.c.b16 %v6372, %v6369
    %v6499 = vpack.c.b16 %v6376, %v6373
    %v6500 = vpack.c.b16 %v6377, %v6374
    %v6501 = vpack.c.b16 %v6378, %v6375
    %v6502 = vpack.c.b16 %v6382, %v6379
    %v6503 = vpack.c.b16 %v6383, %v6380
    %v6504 = vpack.c.b16 %v6384, %v6381
    %v6505 = vpack.c.b16 %v6388, %v6385
    %v6506 = vpack.c.b16 %v6389, %v6386
    %v6507 = vpack.c.b16 %v6390, %v6387
    %v6508 = vpack.c.b16 %v6394, %v6391
    %v6509 = vpack.c.b16 %v6395, %v6392
    %v6510 = vpack.c.b16 %v6396, %v6393
    %v6511 = vpack.c.b16 %v6400, %v6397
    %v6512 = vpack.c.b16 %v6401, %v6398
    %v6513 = vpack.c.b16 %v6402, %v6399
    %v6514 = vpack.c.b16 %v6406, %v6403
    %v6515 = vpack.c.b16 %v6407, %v6404
    %v6516 = vpack.c.b16 %v6408, %v6405
    %v6517 = vpack.c.b16 %v6412, %v6409
    %v6518 = vpack.c.b16 %v6413, %v6410
    %v6519 = vpack.c.b16 %v6414, %v6411
    %v6520 = vpack.c.b16 %v6418, %v6415
    %v6521 = vpack.c.b16 %v6419, %v6416
    %v6522 = vpack.c.b16 %v6420, %v6417
    %v6523 = vpack.c.b16 %v6424, %v6421
    %v6524 = vpack.c.b16 %v6425, %v6422
    %v6525 = vpack.c.b16 %v6426, %v6423
    %v6526 = vpack.c.b16 %v6430, %v6427
    %v6527 = vpack.c.b16 %v6431, %v6428
    %v6528 = vpack.c.b16 %v6432, %v6429
    %6625 = vmatprep.subr.bf16.mxu0 %v6455
    %6626 = vmatpush1.bf16.msra.mxu0 %v6454
    %6627 = vmatprep.subr.bf16.mxu0 %v6452
    %6628 = vmatpush1.bf16.msra.mxu0 %v6451
    %6629 = vmatprep.subr.bf16.mxu0 %v6449
    %6630 = vmatpush1.bf16.msra.mxu0 %v6448
    %6631 = vmatprep.subr.bf16.mxu0 %v6446
    %6632 = vmatpush1.bf16.msra.mxu0 %v6445
    %6633 = vmatprep.subr.bf16.mxu0 %v6443
    %6634 = vmatpush1.bf16.msra.mxu0 %v6442
    %6635 = vmatprep.subr.bf16.mxu0 %v6440
    %6636 = vmatpush1.bf16.msra.mxu0 %v6439
    %6637 = vmatprep.subr.bf16.mxu0 %v6437
    %6638 = vmatpush1.bf16.msra.mxu0 %v6436
    %6639 = vmatprep.subr.bf16.mxu0 %v6434
    %6640 = vmatpush1.bf16.msra.mxu0 %v6433
    %6641 = vmatprep.subr.bf16.mxu0 %v6479
    %6642 = vmatpush2.bf16.msra.mxu0 %v6478
    %6643 = vmatprep.subr.bf16.mxu0 %v6476
    %6644 = vmatpush2.bf16.msra.mxu0 %v6475
    %6645 = vmatprep.subr.bf16.mxu0 %v6473
    %6646 = vmatpush2.bf16.msra.mxu0 %v6472
    %6647 = vmatprep.subr.bf16.mxu0 %v6470
    %6648 = vmatpush2.bf16.msra.mxu0 %v6469
    %6649 = vmatprep.subr.bf16.mxu0 %v6467
    %6650 = vmatpush2.bf16.msra.mxu0 %v6466
    %6651 = vmatprep.subr.bf16.mxu0 %v6464
    %6652 = vmatpush2.bf16.msra.mxu0 %v6463
    %6653 = vmatprep.subr.bf16.mxu0 %v6461
    %6654 = vmatpush2.bf16.msra.mxu0 %v6460
    %6655 = vmatprep.subr.bf16.mxu0 %v6458
    %6656 = vmatpush2.bf16.msra.mxu0 %v6457
    %6657 = vmatprep.mubr.bf16.mxu0 %v6094
    %6658 = vmatmul.mubr.bf16.gmra.mxu0 %v6093
    %v6659 = vpop.f32.mrf.mxu0
    %v6660 = vadd.f32 %v6101, %v6659
    %v6661 = vpop.f32.mrf.mxu0
    %v6662 = vadd.f32 %v6105, %v6661
    %v6663 = vpop.f32.mrf.mxu0
    %v6664 = vpop.f32.mrf.mxu0
    %6665 = vdwg.mxu0
    %6666 = vmatprep.subr.bf16.mxu0 %v6503
    %6667 = vmatpush1.bf16.msra.mxu0 %v6502
    %6668 = vmatprep.subr.bf16.mxu0 %v6500
    %6669 = vmatpush1.bf16.msra.mxu0 %v6499
    %6670 = vmatprep.subr.bf16.mxu0 %v6497
    %6671 = vmatpush1.bf16.msra.mxu0 %v6496
    %6672 = vmatprep.subr.bf16.mxu0 %v6494
    %6673 = vmatpush1.bf16.msra.mxu0 %v6493
    %6674 = vmatprep.subr.bf16.mxu0 %v6491
    %6675 = vmatpush1.bf16.msra.mxu0 %v6490
    %6676 = vmatprep.subr.bf16.mxu0 %v6488
    %6677 = vmatpush1.bf16.msra.mxu0 %v6487
    %6678 = vmatprep.subr.bf16.mxu0 %v6485
    %6679 = vmatpush1.bf16.msra.mxu0 %v6484
    %6680 = vmatprep.subr.bf16.mxu0 %v6482
    %6681 = vmatpush1.bf16.msra.mxu0 %v6481
    %6682 = vmatprep.subr.bf16.mxu0 %v6527
    %6683 = vmatpush2.bf16.msra.mxu0 %v6526
    %6684 = vmatprep.subr.bf16.mxu0 %v6524
    %6685 = vmatpush2.bf16.msra.mxu0 %v6523
    %6686 = vmatprep.subr.bf16.mxu0 %v6521
    %6687 = vmatpush2.bf16.msra.mxu0 %v6520
    %6688 = vmatprep.subr.bf16.mxu0 %v6518
    %6689 = vmatpush2.bf16.msra.mxu0 %v6517
    %6690 = vmatprep.subr.bf16.mxu0 %v6515
    %6691 = vmatpush2.bf16.msra.mxu0 %v6514
    %6692 = vmatprep.subr.bf16.mxu0 %v6512
    %6693 = vmatpush2.bf16.msra.mxu0 %v6511
    %6694 = vmatprep.subr.bf16.mxu0 %v6509
    %6695 = vmatpush2.bf16.msra.mxu0 %v6508
    %6696 = vmatprep.subr.bf16.mxu0 %v6506
    %6697 = vmatpush2.bf16.msra.mxu0 %v6505
    %6698 = vmatprep.mubr.bf16.mxu0 %v6096
    %6699 = vmatmul.mubr.bf16.gmra.mxu0 %v6095
    %v6700 = vpop.f32.mrf.mxu0
    %v6701 = vadd.f32 %v6660, %v6700
    %v6702 = vpop.f32.mrf.mxu0
    %v6703 = vadd.f32 %v6662, %v6702
    %v6704 = vpop.f32.mrf.mxu0
    %v6705 = vpop.f32.mrf.mxu0
    %6706 = vdwg.mxu0
    %6707 = vmatprep.subr.bf16.mxu0 0
    %6708 = vmatpush1.bf16.msra.mxu0 %v6456
    %6709 = vmatprep.subr.bf16.mxu0 0
    %6710 = vmatpush1.bf16.msra.mxu0 %v6453
    %6711 = vmatprep.subr.bf16.mxu0 0
    %6712 = vmatpush1.bf16.msra.mxu0 %v6450
    %6713 = vmatprep.subr.bf16.mxu0 0
    %6714 = vmatpush1.bf16.msra.mxu0 %v6447
    %6715 = vmatprep.subr.bf16.mxu0 0
    %6716 = vmatpush1.bf16.msra.mxu0 %v6444
    %6717 = vmatprep.subr.bf16.mxu0 0
    %6718 = vmatpush1.bf16.msra.mxu0 %v6441
    %6719 = vmatprep.subr.bf16.mxu0 0
    %6720 = vmatpush1.bf16.msra.mxu0 %v6438
    %6721 = vmatprep.subr.bf16.mxu0 0
    %6722 = vmatpush1.bf16.msra.mxu0 %v6435
    %6723 = vmatprep.subr.bf16.mxu0 0
    %6724 = vmatpush2.bf16.msra.mxu0 %v6480
    %6725 = vmatprep.subr.bf16.mxu0 0
    %6726 = vmatpush2.bf16.msra.mxu0 %v6477
    %6727 = vmatprep.subr.bf16.mxu0 0
    %6728 = vmatpush2.bf16.msra.mxu0 %v6474
    %6729 = vmatprep.subr.bf16.mxu0 0
    %6730 = vmatpush2.bf16.msra.mxu0 %v6471
    %6731 = vmatprep.subr.bf16.mxu0 0
    %6732 = vmatpush2.bf16.msra.mxu0 %v6468
    %6733 = vmatprep.subr.bf16.mxu0 0
    %6734 = vmatpush2.bf16.msra.mxu0 %v6465
    %6735 = vmatprep.subr.bf16.mxu0 0
    %6736 = vmatpush2.bf16.msra.mxu0 %v6462
    %6737 = vmatprep.subr.bf16.mxu0 0
    %6738 = vmatpush2.bf16.msra.mxu0 %v6459
    %6739 = vmatprep.mubr.bf16.mxu0 %v6094
    %6740 = vmatmul.mubr.bf16.gmra.mxu0 %v6093
    %v6741 = vpop.f32.mrf.mxu0
    %v6742 = vadd.f32 %v6109, %v6741
    %v6743 = vpop.f32.mrf.mxu0
    %v6744 = vpop.f32.mrf.mxu0
    %v6745 = vpop.f32.mrf.mxu0
    %6746 = vdwg.mxu0
    %6747 = vmatprep.subr.bf16.mxu0 0
    %6748 = vmatpush1.bf16.msra.mxu0 %v6504
    %6749 = vmatprep.subr.bf16.mxu0 0
    %6750 = vmatpush1.bf16.msra.mxu0 %v6501
    %6751 = vmatprep.subr.bf16.mxu0 0
    %6752 = vmatpush1.bf16.msra.mxu0 %v6498
    %6753 = vmatprep.subr.bf16.mxu0 0
    %6754 = vmatpush1.bf16.msra.mxu0 %v6495
    %6755 = vmatprep.subr.bf16.mxu0 0
    %6756 = vmatpush1.bf16.msra.mxu0 %v6492
    %6757 = vmatprep.subr.bf16.mxu0 0
    %6758 = vmatpush1.bf16.msra.mxu0 %v6489
    %6759 = vmatprep.subr.bf16.mxu0 0
    %6760 = vmatpush1.bf16.msra.mxu0 %v6486
    %6761 = vmatprep.subr.bf16.mxu0 0
    %6762 = vmatpush1.bf16.msra.mxu0 %v6483
    %6763 = vmatprep.subr.bf16.mxu0 0
    %6764 = vmatpush2.bf16.msra.mxu0 %v6528
    %6765 = vmatprep.subr.bf16.mxu0 0
    %6766 = vmatpush2.bf16.msra.mxu0 %v6525
    %6767 = vmatprep.subr.bf16.mxu0 0
    %6768 = vmatpush2.bf16.msra.mxu0 %v6522
    %6769 = vmatprep.subr.bf16.mxu0 0
    %6770 = vmatpush2.bf16.msra.mxu0 %v6519
    %6771 = vmatprep.subr.bf16.mxu0 0
    %6772 = vmatpush2.bf16.msra.mxu0 %v6516
    %6773 = vmatprep.subr.bf16.mxu0 0
    %6774 = vmatpush2.bf16.msra.mxu0 %v6513
    %6775 = vmatprep.subr.bf16.mxu0 0
    %6776 = vmatpush2.bf16.msra.mxu0 %v6510
    %6777 = vmatprep.subr.bf16.mxu0 0
    %6778 = vmatpush2.bf16.msra.mxu0 %v6507
    %6779 = vmatprep.mubr.bf16.mxu0 %v6096
    %6780 = vmatmul.mubr.bf16.gmra.mxu0 %v6095
    %v6781 = vpop.f32.mrf.mxu0
    %v6782 = vadd.f32 %v6742, %v6781
    %v6783 = vpop.f32.mrf.mxu0
    %v6784 = vpop.f32.mrf.mxu0
    %v6785 = vpop.f32.mrf.mxu0
    %6786 = vdwg.mxu0
    %v6787 = vmax.f32 %v6701, 0.0
    %v6788 = vmax.f32 %v6703, 0.0
    %v6789 = vmax.f32 %v6782, 0.0
    %v6790 = vld [vmem:[#allocation15] sm:$0xff]
    %v6791 = vld [vmem:[#allocation15 + $0x8] sm:$0xff]
    %v6792 = vld [vmem:[#allocation15 + $0x10] sm:$0xff]
    %v6793 = vld [vmem:[#allocation15 + $0x18] sm:$0xff]
    %v6794 = vld [vmem:[#allocation15 + $0x20] sm:$0xff]
    %v6795 = vld [vmem:[#allocation15 + $0x28] sm:$0xff]
    %v6796 = vld [vmem:[#allocation15 + $0x30] sm:$0xff]
    %v6797 = vld [vmem:[#allocation15 + $0x38] sm:$0xff]
    %v6798 = vld [vmem:[#allocation15 + $0x40] sm:$0xff]
    %v6799 = vld [vmem:[#allocation15 + $0x48] sm:$0xff]
    %v6800 = vld [vmem:[#allocation15 + $0x50] sm:$0xff]
    %v6801 = vld [vmem:[#allocation15 + $0x58] sm:$0xff]
    %v6802 = vld [vmem:[#allocation15 + $0x60] sm:$0xff]
    %v6803 = vld [vmem:[#allocation15 + $0x68] sm:$0xff]
    %v6804 = vld [vmem:[#allocation15 + $0x70] sm:$0xff]
    %v6805 = vld [vmem:[#allocation15 + $0x78] sm:$0xff]
    %v6806 = vld [vmem:[#allocation15 + $0x80] sm:$0xff]
    %v6807 = vld [vmem:[#allocation15 + $0x88] sm:$0xff]
    %v6808 = vld [vmem:[#allocation15 + $0x90] sm:$0xff]
    %v6809 = vld [vmem:[#allocation15 + $0x98] sm:$0xff]
    %v6810 = vld [vmem:[#allocation15 + $0xa0] sm:$0xff]
    %v6811 = vld [vmem:[#allocation15 + $0xa8] sm:$0xff]
    %v6812 = vld [vmem:[#allocation15 + $0xb0] sm:$0xff]
    %v6813 = vld [vmem:[#allocation15 + $0xb8] sm:$0xff]
    %v6814 = vld [vmem:[#allocation15 + $0xc0] sm:$0xff]
    %v6815 = vld [vmem:[#allocation15 + $0xc8] sm:$0xff]
    %v6816 = vld [vmem:[#allocation15 + $0xd0] sm:$0xff]
    %v6817 = vld [vmem:[#allocation15 + $0xd8] sm:$0xff]
    %v6818 = vld [vmem:[#allocation15 + $0xe0] sm:$0xff]
    %v6819 = vld [vmem:[#allocation15 + $0xe8] sm:$0xff]
    %v6820 = vld [vmem:[#allocation15 + $0xf0] sm:$0xff]
    %v6821 = vld [vmem:[#allocation15 + $0xf8] sm:$0xff]
    %v6822 = vld [vmem:[#allocation15 + $0x100] sm:$0xff]
    %v6823 = vld [vmem:[#allocation15 + $0x108] sm:$0xff]
    %v6824 = vld [vmem:[#allocation15 + $0x110] sm:$0xff]
    %v6825 = vld [vmem:[#allocation15 + $0x118] sm:$0xff]
    %v6826 = vld [vmem:[#allocation15 + $0x120] sm:$0xff]
    %v6827 = vld [vmem:[#allocation15 + $0x128] sm:$0xff]
    %v6828 = vld [vmem:[#allocation15 + $0x130] sm:$0xff]
    %v6829 = vld [vmem:[#allocation15 + $0x138] sm:$0xff]
    %v6830 = vld [vmem:[#allocation15 + $0x140] sm:$0xff]
    %v6831 = vld [vmem:[#allocation15 + $0x148] sm:$0xff]
    %v6832 = vld [vmem:[#allocation15 + $0x150] sm:$0xff]
    %v6833 = vld [vmem:[#allocation15 + $0x158] sm:$0xff]
    %v6834 = vld [vmem:[#allocation15 + $0x160] sm:$0xff]
    %v6835 = vld [vmem:[#allocation15 + $0x168] sm:$0xff]
    %v6836 = vld [vmem:[#allocation15 + $0x170] sm:$0xff]
    %v6837 = vld [vmem:[#allocation15 + $0x178] sm:$0xff]
    %v6838 = vld [vmem:[#allocation16] sm:$0x3]
    %v6839 = vpack.c.bf16 %v6787, %v6787
    %v6840 = vpack.c.bf16 %v6788, %v6788
    %v6841 = vpack.c.bf16 %v6789, %v6789
    %v6843 = vlaneseq
    %v6844 = vshrl.u32 %v6843, 7
    %v6845 = vsub.s32 0, %v6844
    %v6846 = vrot.slane %v6838, %v6845
    %v6847 = vlaneseq
    %v6848 = vshrl.u32 %v6847, 7
    %v6849 = vsub.s32 1, %v6848
    %v6850 = vrot.slane %v6838, %v6849
    %v6901 = vunpack.c.l.b16 %v6790
    %v6902 = vunpack.c.h.b16 %v6790
    %v6903 = vunpack.c.l.b16 %v6791
    %v6904 = vunpack.c.h.b16 %v6791
    %v6905 = vunpack.c.l.b16 %v6792
    %v6906 = vunpack.c.h.b16 %v6792
    %v6907 = vunpack.c.l.b16 %v6793
    %v6908 = vunpack.c.h.b16 %v6793
    %v6909 = vunpack.c.l.b16 %v6794
    %v6910 = vunpack.c.h.b16 %v6794
    %v6911 = vunpack.c.l.b16 %v6795
    %v6912 = vunpack.c.h.b16 %v6795
    %v6913 = vunpack.c.l.b16 %v6796
    %v6914 = vunpack.c.h.b16 %v6796
    %v6915 = vunpack.c.l.b16 %v6797
    %v6916 = vunpack.c.h.b16 %v6797
    %v6917 = vunpack.c.l.b16 %v6798
    %v6918 = vunpack.c.h.b16 %v6798
    %v6919 = vunpack.c.l.b16 %v6799
    %v6920 = vunpack.c.h.b16 %v6799
    %v6921 = vunpack.c.l.b16 %v6800
    %v6922 = vunpack.c.h.b16 %v6800
    %v6923 = vunpack.c.l.b16 %v6801
    %v6924 = vunpack.c.h.b16 %v6801
    %v6925 = vunpack.c.l.b16 %v6802
    %v6926 = vunpack.c.h.b16 %v6802
    %v6927 = vunpack.c.l.b16 %v6803
    %v6928 = vunpack.c.h.b16 %v6803
    %v6929 = vunpack.c.l.b16 %v6804
    %v6930 = vunpack.c.h.b16 %v6804
    %v6931 = vunpack.c.l.b16 %v6805
    %v6932 = vunpack.c.h.b16 %v6805
    %v6933 = vunpack.c.l.b16 %v6806
    %v6934 = vunpack.c.h.b16 %v6806
    %v6935 = vunpack.c.l.b16 %v6807
    %v6936 = vunpack.c.h.b16 %v6807
    %v6937 = vunpack.c.l.b16 %v6808
    %v6938 = vunpack.c.h.b16 %v6808
    %v6939 = vunpack.c.l.b16 %v6809
    %v6940 = vunpack.c.h.b16 %v6809
    %v6941 = vunpack.c.l.b16 %v6810
    %v6942 = vunpack.c.h.b16 %v6810
    %v6943 = vunpack.c.l.b16 %v6811
    %v6944 = vunpack.c.h.b16 %v6811
    %v6945 = vunpack.c.l.b16 %v6812
    %v6946 = vunpack.c.h.b16 %v6812
    %v6947 = vunpack.c.l.b16 %v6813
    %v6948 = vunpack.c.h.b16 %v6813
    %v6949 = vunpack.c.l.b16 %v6814
    %v6950 = vunpack.c.h.b16 %v6814
    %v6951 = vunpack.c.l.b16 %v6815
    %v6952 = vunpack.c.h.b16 %v6815
    %v6953 = vunpack.c.l.b16 %v6816
    %v6954 = vunpack.c.h.b16 %v6816
    %v6955 = vunpack.c.l.b16 %v6817
    %v6956 = vunpack.c.h.b16 %v6817
    %v6957 = vunpack.c.l.b16 %v6818
    %v6958 = vunpack.c.h.b16 %v6818
    %v6959 = vunpack.c.l.b16 %v6819
    %v6960 = vunpack.c.h.b16 %v6819
    %v6961 = vunpack.c.l.b16 %v6820
    %v6962 = vunpack.c.h.b16 %v6820
    %v6963 = vunpack.c.l.b16 %v6821
    %v6964 = vunpack.c.h.b16 %v6821
    %v6965 = vunpack.c.l.b16 %v6822
    %v6966 = vunpack.c.h.b16 %v6822
    %v6967 = vunpack.c.l.b16 %v6823
    %v6968 = vunpack.c.h.b16 %v6823
    %v6969 = vunpack.c.l.b16 %v6824
    %v6970 = vunpack.c.h.b16 %v6824
    %v6971 = vunpack.c.l.b16 %v6825
    %v6972 = vunpack.c.h.b16 %v6825
    %v6973 = vunpack.c.l.b16 %v6826
    %v6974 = vunpack.c.h.b16 %v6826
    %v6975 = vunpack.c.l.b16 %v6827
    %v6976 = vunpack.c.h.b16 %v6827
    %v6977 = vunpack.c.l.b16 %v6828
    %v6978 = vunpack.c.h.b16 %v6828
    %v6979 = vunpack.c.l.b16 %v6829
    %v6980 = vunpack.c.h.b16 %v6829
    %v6981 = vunpack.c.l.b16 %v6830
    %v6982 = vunpack.c.h.b16 %v6830
    %v6983 = vunpack.c.l.b16 %v6831
    %v6984 = vunpack.c.h.b16 %v6831
    %v6985 = vunpack.c.l.b16 %v6832
    %v6986 = vunpack.c.h.b16 %v6832
    %v6987 = vunpack.c.l.b16 %v6833
    %v6988 = vunpack.c.h.b16 %v6833
    %v6989 = vunpack.c.l.b16 %v6834
    %v6990 = vunpack.c.h.b16 %v6834
    %v6991 = vunpack.c.l.b16 %v6835
    %v6992 = vunpack.c.h.b16 %v6835
    %v6993 = vunpack.c.l.b16 %v6836
    %v6994 = vunpack.c.h.b16 %v6836
    %v6995 = vunpack.c.l.b16 %v6837
    %v6996 = vunpack.c.h.b16 %v6837
    %v6997 = vpack.c.b16 %v6903, %v6901
    %v6998 = vpack.c.b16 %v6904, %v6902
    %v6999 = vpack.c.b16 %v6907, %v6905
    %v7000 = vpack.c.b16 %v6908, %v6906
    %v7001 = vpack.c.b16 %v6911, %v6909
    %v7002 = vpack.c.b16 %v6912, %v6910
    %v7003 = vpack.c.b16 %v6915, %v6913
    %v7004 = vpack.c.b16 %v6916, %v6914
    %v7005 = vpack.c.b16 %v6919, %v6917
    %v7006 = vpack.c.b16 %v6920, %v6918
    %v7007 = vpack.c.b16 %v6923, %v6921
    %v7008 = vpack.c.b16 %v6924, %v6922
    %v7009 = vpack.c.b16 %v6927, %v6925
    %v7010 = vpack.c.b16 %v6928, %v6926
    %v7011 = vpack.c.b16 %v6931, %v6929
    %v7012 = vpack.c.b16 %v6932, %v6930
    %v7013 = vpack.c.b16 %v6935, %v6933
    %v7014 = vpack.c.b16 %v6936, %v6934
    %v7015 = vpack.c.b16 %v6939, %v6937
    %v7016 = vpack.c.b16 %v6940, %v6938
    %v7017 = vpack.c.b16 %v6943, %v6941
    %v7018 = vpack.c.b16 %v6944, %v6942
    %v7019 = vpack.c.b16 %v6947, %v6945
    %v7020 = vpack.c.b16 %v6948, %v6946
    %v7021 = vpack.c.b16 %v6951, %v6949
    %v7022 = vpack.c.b16 %v6952, %v6950
    %v7023 = vpack.c.b16 %v6955, %v6953
    %v7024 = vpack.c.b16 %v6956, %v6954
    %v7025 = vpack.c.b16 %v6959, %v6957
    %v7026 = vpack.c.b16 %v6960, %v6958
    %v7027 = vpack.c.b16 %v6963, %v6961
    %v7028 = vpack.c.b16 %v6964, %v6962
    %v7029 = vpack.c.b16 %v6967, %v6965
    %v7030 = vpack.c.b16 %v6968, %v6966
    %v7031 = vpack.c.b16 %v6971, %v6969
    %v7032 = vpack.c.b16 %v6972, %v6970
    %v7033 = vpack.c.b16 %v6975, %v6973
    %v7034 = vpack.c.b16 %v6976, %v6974
    %v7035 = vpack.c.b16 %v6979, %v6977
    %v7036 = vpack.c.b16 %v6980, %v6978
    %v7037 = vpack.c.b16 %v6983, %v6981
    %v7038 = vpack.c.b16 %v6984, %v6982
    %v7039 = vpack.c.b16 %v6987, %v6985
    %v7040 = vpack.c.b16 %v6988, %v6986
    %v7041 = vpack.c.b16 %v6991, %v6989
    %v7042 = vpack.c.b16 %v6992, %v6990
    %v7043 = vpack.c.b16 %v6995, %v6993
    %v7044 = vpack.c.b16 %v6996, %v6994
    %7093 = vmatprep.subr.bf16.mxu0 %v7012
    %7094 = vmatpush1.bf16.msra.mxu0 %v7011
    %7095 = vmatprep.subr.bf16.mxu0 %v7010
    %7096 = vmatpush1.bf16.msra.mxu0 %v7009
    %7097 = vmatprep.subr.bf16.mxu0 %v7008
    %7098 = vmatpush1.bf16.msra.mxu0 %v7007
    %7099 = vmatprep.subr.bf16.mxu0 %v7006
    %7100 = vmatpush1.bf16.msra.mxu0 %v7005
    %7101 = vmatprep.subr.bf16.mxu0 %v7004
    %7102 = vmatpush1.bf16.msra.mxu0 %v7003
    %7103 = vmatprep.subr.bf16.mxu0 %v7002
    %7104 = vmatpush1.bf16.msra.mxu0 %v7001
    %7105 = vmatprep.subr.bf16.mxu0 %v7000
    %7106 = vmatpush1.bf16.msra.mxu0 %v6999
    %7107 = vmatprep.subr.bf16.mxu0 %v6998
    %7108 = vmatpush1.bf16.msra.mxu0 %v6997
    %7109 = vmatprep.subr.bf16.mxu0 %v7028
    %7110 = vmatpush2.bf16.msra.mxu0 %v7027
    %7111 = vmatprep.subr.bf16.mxu0 %v7026
    %7112 = vmatpush2.bf16.msra.mxu0 %v7025
    %7113 = vmatprep.subr.bf16.mxu0 %v7024
    %7114 = vmatpush2.bf16.msra.mxu0 %v7023
    %7115 = vmatprep.subr.bf16.mxu0 %v7022
    %7116 = vmatpush2.bf16.msra.mxu0 %v7021
    %7117 = vmatprep.subr.bf16.mxu0 %v7020
    %7118 = vmatpush2.bf16.msra.mxu0 %v7019
    %7119 = vmatprep.subr.bf16.mxu0 %v7018
    %7120 = vmatpush2.bf16.msra.mxu0 %v7017
    %7121 = vmatprep.subr.bf16.mxu0 %v7016
    %7122 = vmatpush2.bf16.msra.mxu0 %v7015
    %7123 = vmatprep.subr.bf16.mxu0 %v7014
    %7124 = vmatpush2.bf16.msra.mxu0 %v7013
    %7125 = vmatprep.mubr.bf16.mxu0 %v6840
    %7126 = vmatmul.mubr.bf16.gmra.mxu0 %v6839
    %v7127 = vpop.f32.mrf.mxu0
    %v7128 = vadd.f32 %v6846, %v7127
    %v7129 = vpop.f32.mrf.mxu0
    %v7130 = vadd.f32 %v6850, %v7129
    %v7131 = vpop.f32.mrf.mxu0
    %v7132 = vpop.f32.mrf.mxu0
    %7133 = vdwg.mxu0
    %7134 = vmatprep.subr.bf16.mxu0 %v7044
    %7135 = vmatpush1.bf16.msra.mxu0 %v7043
    %7136 = vmatprep.subr.bf16.mxu0 %v7042
    %7137 = vmatpush1.bf16.msra.mxu0 %v7041
    %7138 = vmatprep.subr.bf16.mxu0 %v7040
    %7139 = vmatpush1.bf16.msra.mxu0 %v7039
    %7140 = vmatprep.subr.bf16.mxu0 %v7038
    %7141 = vmatpush1.bf16.msra.mxu0 %v7037
    %7142 = vmatprep.subr.bf16.mxu0 %v7036
    %7143 = vmatpush1.bf16.msra.mxu0 %v7035
    %7144 = vmatprep.subr.bf16.mxu0 %v7034
    %7145 = vmatpush1.bf16.msra.mxu0 %v7033
    %7146 = vmatprep.subr.bf16.mxu0 %v7032
    %7147 = vmatpush1.bf16.msra.mxu0 %v7031
    %7148 = vmatprep.subr.bf16.mxu0 %v7030
    %7149 = vmatpush1.bf16.msra.mxu0 %v7029
    %7150 = vmatprep.subr.bf16.mxu0 0
    %7151 = vmatpush2.bf16.msra.mxu0 0
    %7152 = vmatprep.subr.bf16.mxu0 0
    %7153 = vmatpush2.bf16.msra.mxu0 0
    %7154 = vmatprep.subr.bf16.mxu0 0
    %7155 = vmatpush2.bf16.msra.mxu0 0
    %7156 = vmatprep.subr.bf16.mxu0 0
    %7157 = vmatpush2.bf16.msra.mxu0 0
    %7158 = vmatprep.subr.bf16.mxu0 0
    %7159 = vmatpush2.bf16.msra.mxu0 0
    %7160 = vmatprep.subr.bf16.mxu0 0
    %7161 = vmatpush2.bf16.msra.mxu0 0
    %7162 = vmatprep.subr.bf16.mxu0 0
    %7163 = vmatpush2.bf16.msra.mxu0 0
    %7164 = vmatprep.subr.bf16.mxu0 0
    %7165 = vmatpush2.bf16.msra.mxu0 0
    %7166 = vmatprep.mubr.bf16.mxu0 0
    %7167 = vmatmul.mubr.bf16.gmra.mxu0 %v6841
    %v7168 = vpop.f32.mrf.mxu0
    %v7169 = vadd.f32 %v7128, %v7168
    %v7170 = vpop.f32.mrf.mxu0
    %v7171 = vadd.f32 %v7130, %v7170
    %v7172 = vpop.f32.mrf.mxu0
    %v7173 = vpop.f32.mrf.mxu0
    %7174 = vdwg.mxu0
    %v7175 = vmax.f32 %v7169, 0.0
    %v7176 = vmax.f32 %v7171, 0.0
    %v7177 = vld [vmem:[#allocation18] sm:$0xf]
    %v7178 = vld [vmem:[#allocation18 + $0x4] sm:$0xf]
    %v7179 = vld [vmem:[#allocation18 + $0x8] sm:$0xf]
    %v7180 = vld [vmem:[#allocation18 + $0xc] sm:$0xf]
    %v7181 = vld [vmem:[#allocation18 + $0x10] sm:$0xf]
    %v7182 = vld [vmem:[#allocation18 + $0x14] sm:$0xf]
    %v7183 = vld [vmem:[#allocation18 + $0x18] sm:$0xf]
    %v7184 = vld [vmem:[#allocation18 + $0x1c] sm:$0xf]
    %v7185 = vld [vmem:[#allocation18 + $0x20] sm:$0xf]
    %v7186 = vld [vmem:[#allocation18 + $0x24] sm:$0xf]
    %v7187 = vld [vmem:[#allocation18 + $0x28] sm:$0xf]
    %v7188 = vld [vmem:[#allocation18 + $0x2c] sm:$0xf]
    %v7189 = vld [vmem:[#allocation18 + $0x30] sm:$0xf]
    %v7190 = vld [vmem:[#allocation18 + $0x34] sm:$0xf]
    %v7191 = vld [vmem:[#allocation18 + $0x38] sm:$0xf]
    %v7192 = vld [vmem:[#allocation18 + $0x3c] sm:$0xf]
    %v7193 = vld [vmem:[#allocation18 + $0x40] sm:$0xf]
    %v7194 = vld [vmem:[#allocation18 + $0x44] sm:$0xf]
    %v7195 = vld [vmem:[#allocation18 + $0x48] sm:$0xf]
    %v7196 = vld [vmem:[#allocation18 + $0x4c] sm:$0xf]
    %v7197 = vld [vmem:[#allocation18 + $0x50] sm:$0xf]
    %v7198 = vld [vmem:[#allocation18 + $0x54] sm:$0xf]
    %v7199 = vld [vmem:[#allocation18 + $0x58] sm:$0xf]
    %v7200 = vld [vmem:[#allocation18 + $0x5c] sm:$0xf]
    %v7201 = vld [vmem:[#allocation18 + $0x60] sm:$0xf]
    %v7202 = vld [vmem:[#allocation18 + $0x64] sm:$0xf]
    %v7203 = vld [vmem:[#allocation18 + $0x68] sm:$0xf]
    %v7204 = vld [vmem:[#allocation18 + $0x6c] sm:$0xf]
    %v7205 = vld [vmem:[#allocation18 + $0x70] sm:$0xf]
    %v7206 = vld [vmem:[#allocation18 + $0x74] sm:$0xf]
    %v7207 = vld [vmem:[#allocation18 + $0x78] sm:$0xf]
    %v7208 = vld [vmem:[#allocation18 + $0x7c] sm:$0xf]
    %v7209 = vld [vmem:[#allocation19] sm:$0x1]
    %v7210 = vpack.c.bf16 %v7175, %v7175
    %v7211 = vpack.c.bf16 %v7176, %v7176
    %v7213 = vlaneseq
    %v7214 = vshrl.u32 %v7213, 7
    %v7215 = vsub.s32 0, %v7214
    %v7216 = vrot.slane %v7209, %v7215
    %v7250 = vunpack.c.l.b16 %v7177
    %v7251 = vunpack.c.l.b16 %v7178
    %v7252 = vunpack.c.l.b16 %v7179
    %v7253 = vunpack.c.l.b16 %v7180
    %v7254 = vunpack.c.l.b16 %v7181
    %v7255 = vunpack.c.l.b16 %v7182
    %v7256 = vunpack.c.l.b16 %v7183
    %v7257 = vunpack.c.l.b16 %v7184
    %v7258 = vunpack.c.l.b16 %v7185
    %v7259 = vunpack.c.l.b16 %v7186
    %v7260 = vunpack.c.l.b16 %v7187
    %v7261 = vunpack.c.l.b16 %v7188
    %v7262 = vunpack.c.l.b16 %v7189
    %v7263 = vunpack.c.l.b16 %v7190
    %v7264 = vunpack.c.l.b16 %v7191
    %v7265 = vunpack.c.l.b16 %v7192
    %v7266 = vunpack.c.l.b16 %v7193
    %v7267 = vunpack.c.l.b16 %v7194
    %v7268 = vunpack.c.l.b16 %v7195
    %v7269 = vunpack.c.l.b16 %v7196
    %v7270 = vunpack.c.l.b16 %v7197
    %v7271 = vunpack.c.l.b16 %v7198
    %v7272 = vunpack.c.l.b16 %v7199
    %v7273 = vunpack.c.l.b16 %v7200
    %v7274 = vunpack.c.l.b16 %v7201
    %v7275 = vunpack.c.l.b16 %v7202
    %v7276 = vunpack.c.l.b16 %v7203
    %v7277 = vunpack.c.l.b16 %v7204
    %v7278 = vunpack.c.l.b16 %v7205
    %v7279 = vunpack.c.l.b16 %v7206
    %v7280 = vunpack.c.l.b16 %v7207
    %v7281 = vunpack.c.l.b16 %v7208
    %v7282 = vpack.c.b16 %v7251, %v7250
    %v7283 = vpack.c.b16 %v7253, %v7252
    %v7284 = vpack.c.b16 %v7255, %v7254
    %v7285 = vpack.c.b16 %v7257, %v7256
    %v7286 = vpack.c.b16 %v7259, %v7258
    %v7287 = vpack.c.b16 %v7261, %v7260
    %v7288 = vpack.c.b16 %v7263, %v7262
    %v7289 = vpack.c.b16 %v7265, %v7264
    %v7290 = vpack.c.b16 %v7267, %v7266
    %v7291 = vpack.c.b16 %v7269, %v7268
    %v7292 = vpack.c.b16 %v7271, %v7270
    %v7293 = vpack.c.b16 %v7273, %v7272
    %v7294 = vpack.c.b16 %v7275, %v7274
    %v7295 = vpack.c.b16 %v7277, %v7276
    %v7296 = vpack.c.b16 %v7279, %v7278
    %v7297 = vpack.c.b16 %v7281, %v7280
    %7314 = vmatprep.subr.bf16.mxu0 0
    %7315 = vmatpush1.bf16.msra.mxu0 %v7289
    %7316 = vmatprep.subr.bf16.mxu0 0
    %7317 = vmatpush1.bf16.msra.mxu0 %v7288
    %7318 = vmatprep.subr.bf16.mxu0 0
    %7319 = vmatpush1.bf16.msra.mxu0 %v7287
    %7320 = vmatprep.subr.bf16.mxu0 0
    %7321 = vmatpush1.bf16.msra.mxu0 %v7286
    %7322 = vmatprep.subr.bf16.mxu0 0
    %7323 = vmatpush1.bf16.msra.mxu0 %v7285
    %7324 = vmatprep.subr.bf16.mxu0 0
    %7325 = vmatpush1.bf16.msra.mxu0 %v7284
    %7326 = vmatprep.subr.bf16.mxu0 0
    %7327 = vmatpush1.bf16.msra.mxu0 %v7283
    %7328 = vmatprep.subr.bf16.mxu0 0
    %7329 = vmatpush1.bf16.msra.mxu0 %v7282
    %7330 = vmatprep.subr.bf16.mxu0 0
    %7331 = vmatpush2.bf16.msra.mxu0 %v7297
    %7332 = vmatprep.subr.bf16.mxu0 0
    %7333 = vmatpush2.bf16.msra.mxu0 %v7296
    %7334 = vmatprep.subr.bf16.mxu0 0
    %7335 = vmatpush2.bf16.msra.mxu0 %v7295
    %7336 = vmatprep.subr.bf16.mxu0 0
    %7337 = vmatpush2.bf16.msra.mxu0 %v7294
    %7338 = vmatprep.subr.bf16.mxu0 0
    %7339 = vmatpush2.bf16.msra.mxu0 %v7293
    %7340 = vmatprep.subr.bf16.mxu0 0
    %7341 = vmatpush2.bf16.msra.mxu0 %v7292
    %7342 = vmatprep.subr.bf16.mxu0 0
    %7343 = vmatpush2.bf16.msra.mxu0 %v7291
    %7344 = vmatprep.subr.bf16.mxu0 0
    %7345 = vmatpush2.bf16.msra.mxu0 %v7290
    %7346 = vmatprep.mubr.bf16.mxu0 %v7211
    %7347 = vmatmul.mubr.bf16.gmra.mxu0 %v7210
    %v7348 = vpop.f32.mrf.mxu0
    %v7349 = vadd.f32 %v7216, %v7348
    %v7350 = vpop.f32.mrf.mxu0
    %v7351 = vpop.f32.mrf.mxu0
    %v7352 = vpop.f32.mrf.mxu0
    %7353 = vdwg.mxu0
    %v7354 = vmax.f32 %v7349, 0.0
    %v7355 = vld [vmem:[#allocation21] sm:$0xf]
    %v7356 = vld [vmem:[#allocation21 + $0x4] sm:$0xf]
    %v7357 = vld [vmem:[#allocation21 + $0x8] sm:$0xf]
    %v7358 = vld [vmem:[#allocation21 + $0xc] sm:$0xf]
    %v7359 = vld [vmem:[#allocation21 + $0x10] sm:$0xf]
    %v7360 = vld [vmem:[#allocation21 + $0x14] sm:$0xf]
    %v7361 = vld [vmem:[#allocation21 + $0x18] sm:$0xf]
    %v7362 = vld [vmem:[#allocation21 + $0x1c] sm:$0xf]
    %v7363 = vld [vmem:[#allocation21 + $0x20] sm:$0xf]
    %v7364 = vld [vmem:[#allocation21 + $0x24] sm:$0xf]
    %v7365 = vld [vmem:[#allocation21 + $0x28] sm:$0xf]
    %v7366 = vld [vmem:[#allocation21 + $0x2c] sm:$0xf]
    %v7367 = vld [vmem:[#allocation21 + $0x30] sm:$0xf]
    %v7368 = vld [vmem:[#allocation21 + $0x34] sm:$0xf]
    %v7369 = vld [vmem:[#allocation21 + $0x38] sm:$0xf]
    %v7370 = vld [vmem:[#allocation21 + $0x3c] sm:$0xf]
    %v7371 = vld [vmem:[#allocation22] sm:$0x1]
    %v7372 = vpack.c.bf16 %v7354, %v7354
    %v7374 = vlaneseq
    %v7375 = vshrl.u32 %v7374, 7
    %v7376 = vsub.s32 0, %v7375
    %v7377 = vrot.slane %v7371, %v7376
    %v7395 = vunpack.c.l.b16 %v7355
    %v7396 = vunpack.c.l.b16 %v7356
    %v7397 = vunpack.c.l.b16 %v7357
    %v7398 = vunpack.c.l.b16 %v7358
    %v7399 = vunpack.c.l.b16 %v7359
    %v7400 = vunpack.c.l.b16 %v7360
    %v7401 = vunpack.c.l.b16 %v7361
    %v7402 = vunpack.c.l.b16 %v7362
    %v7403 = vunpack.c.l.b16 %v7363
    %v7404 = vunpack.c.l.b16 %v7364
    %v7405 = vunpack.c.l.b16 %v7365
    %v7406 = vunpack.c.l.b16 %v7366
    %v7407 = vunpack.c.l.b16 %v7367
    %v7408 = vunpack.c.l.b16 %v7368
    %v7409 = vunpack.c.l.b16 %v7369
    %v7410 = vunpack.c.l.b16 %v7370
    %v7411 = vpack.c.b16 %v7396, %v7395
    %v7412 = vpack.c.b16 %v7398, %v7397
    %v7413 = vpack.c.b16 %v7400, %v7399
    %v7414 = vpack.c.b16 %v7402, %v7401
    %v7415 = vpack.c.b16 %v7404, %v7403
    %v7416 = vpack.c.b16 %v7406, %v7405
    %v7417 = vpack.c.b16 %v7408, %v7407
    %v7418 = vpack.c.b16 %v7410, %v7409
    %7427 = vmatprep.subr.bf16.mxu0 0
    %7428 = vmatpush1.bf16.msra.mxu0 %v7418
    %7429 = vmatprep.subr.bf16.mxu0 0
    %7430 = vmatpush1.bf16.msra.mxu0 %v7417
    %7431 = vmatprep.subr.bf16.mxu0 0
    %7432 = vmatpush1.bf16.msra.mxu0 %v7416
    %7433 = vmatprep.subr.bf16.mxu0 0
    %7434 = vmatpush1.bf16.msra.mxu0 %v7415
    %7435 = vmatprep.subr.bf16.mxu0 0
    %7436 = vmatpush1.bf16.msra.mxu0 %v7414
    %7437 = vmatprep.subr.bf16.mxu0 0
    %7438 = vmatpush1.bf16.msra.mxu0 %v7413
    %7439 = vmatprep.subr.bf16.mxu0 0
    %7440 = vmatpush1.bf16.msra.mxu0 %v7412
    %7441 = vmatprep.subr.bf16.mxu0 0
    %7442 = vmatpush1.bf16.msra.mxu0 %v7411
    %7443 = vmatprep.subr.bf16.mxu0 0
    %7444 = vmatpush2.bf16.msra.mxu0 0
    %7445 = vmatprep.subr.bf16.mxu0 0
    %7446 = vmatpush2.bf16.msra.mxu0 0
    %7447 = vmatprep.subr.bf16.mxu0 0
    %7448 = vmatpush2.bf16.msra.mxu0 0
    %7449 = vmatprep.subr.bf16.mxu0 0
    %7450 = vmatpush2.bf16.msra.mxu0 0
    %7451 = vmatprep.subr.bf16.mxu0 0
    %7452 = vmatpush2.bf16.msra.mxu0 0
    %7453 = vmatprep.subr.bf16.mxu0 0
    %7454 = vmatpush2.bf16.msra.mxu0 0
    %7455 = vmatprep.subr.bf16.mxu0 0
    %7456 = vmatpush2.bf16.msra.mxu0 0
    %7457 = vmatprep.subr.bf16.mxu0 0
    %7458 = vmatpush2.bf16.msra.mxu0 0
    %7459 = vmatprep.mubr.bf16.mxu0 0
    %7460 = vmatmul.mubr.bf16.gmra.mxu0 %v7372
    %v7461 = vpop.f32.mrf.mxu0
    %v7462 = vadd.f32 %v7377, %v7461
    %v7463 = vpop.f32.mrf.mxu0
    %v7464 = vpop.f32.mrf.mxu0
    %v7465 = vpop.f32.mrf.mxu0
    %7466 = vdwg.mxu0
    %7467 = vst [vmem:[%s15] sm:$0xff] %v7462
    // Predicated region
    $region118: #{mlp_forward.1} parent=1 // pred_check
      _
    $region119: #{mlp_forward.1} parent=1 // pred_check_branch
      %7469 = sbr.rel (0) target = $region121
    $region120: #{mlp_forward.1} parent=1 // pred_region
      _
    $region121: #{mlp_forward.1} parent=1 // pred_fallthru
      _
    // Predicated region
    $region122: #{mlp_forward.1} parent=1 // pred_check
      _
    $region123: #{mlp_forward.1} parent=1 // pred_check_branch
      %7471 = sbr.rel (0) target = $region125
    $region124: #{mlp_forward.1} parent=1 // pred_region
      _
    $region125: #{mlp_forward.1} parent=1 // pred_fallthru
      _
    %7472 = vsyncpa [#allocation3], 1
    %7473 = vsyncpa [#allocation5], 1
    %7474 = vsyncpa [#allocation8], 1
    %7475 = vsyncpa [#allocation11], 1
    %7476 = vsyncpa [#allocation14], 1
    %7477 = vsyncpa [#allocation17], 1
    %7478 = vsyncpa [#allocation20], 1
    %7479 = vsyncpa [#allocation23], 1

</llo_original>
